<compile_context>
chip_gen: v7x
topology: tpu7x:2x2x1
jax: 0.10.0
libtpu: 0.0.40
codegen_flags: <defaults>
</compile_context>

<pallas_src>
import jax
import jax.numpy as jnp
from jax.experimental import pallas as pl
from jax.experimental.pallas import tpu as pltpu

# ----------------------------- model config ---------------------------------
BATCH = 1            # flag_head `.item()` / cross_entropy(ravel) in the reference imply batch == 1
SEQ = 8
HIDDEN = 64
NUM_HEADS = 4
NUM_KV_HEADS = 2
HEAD_DIM = HIDDEN // NUM_HEADS
INTERMEDIATE = 128
VOCAB = 128
NUM_LAYERS = 2
RMS_EPS = 1e-6
ROPE_BASE = 10000.0
DTYPE = jnp.bfloat16  # module builds latent_query / flag_head in bf16


# ----------------------------- fused kernel ----------------------------------
def _fused_forward_kernel(h0_ref, wqkv_ref, wo_ref, wgu_ref, wdown_ref,
                          ln1_ref, ln2_ref, norm_ref, cos_ref, sin_ref,
                          lm_head_ref, flag_w_ref, label_oh_ref, aux_ref,
                          kc_ref, vc_ref, hlast_ref, logits_ref, scalars_ref):
    f32 = jnp.float32
    h = h0_ref[...].astype(f32)                 # (S, D) residual stream, f32-resident
    S = h.shape[0]
    cos = cos_ref[...]                          # (S, Dh) f32
    sin = sin_ref[...]
    rep = NUM_HEADS // NUM_KV_HEADS
    scale = 1.0 / (float(HEAD_DIM) ** 0.5)
    half = HEAD_DIM // 2
    q_end = NUM_HEADS * HEAD_DIM
    kv_w = NUM_KV_HEADS * HEAD_DIM

    qi = jax.lax.broadcasted_iota(jnp.int32, (S, S), 0)
    ki = jax.lax.broadcasted_iota(jnp.int32, (S, S), 1)
    causal = ki <= qi

    def rmsnorm(x, w):                          # x f32 (S, D), w (1, D)
        var = jnp.mean(x * x, axis=-1, keepdims=True)
        return x * jax.lax.rsqrt(var + RMS_EPS) * w.astype(f32)

    def rope(x):                                # (S, Dh) f32, rotate-half RoPE
        rot = jnp.concatenate([-x[:, half:], x[:, :half]], axis=-1)
        return x * cos + rot * sin

    for l in range(NUM_LAYERS):
        # ---- attention: RMSNorm -> fused QKV -> RoPE -> causal softmax -> o_proj ----
        hn = rmsnorm(h, ln1_ref[l]).astype(DTYPE)
        qkv = jnp.dot(hn, wqkv_ref[l], preferred_element_type=f32)     # (S, 128) f32
        q = qkv[:, :q_end]
        k = qkv[:, q_end:q_end + kv_w]
        v = qkv[:, q_end + kv_w:]

        kc_ref[l] = k.astype(DTYPE)             # pre-RoPE cache (matches reference)
        vc_ref[l] = v.astype(DTYPE)

        k_rope = [rope(k[:, g * HEAD_DIM:(g + 1) * HEAD_DIM]).astype(DTYPE)
                  for g in range(NUM_KV_HEADS)]
        v_head = [v[:, g * HEAD_DIM:(g + 1) * HEAD_DIM].astype(DTYPE)
                  for g in range(NUM_KV_HEADS)]

        heads = []
        for hh in range(NUM_HEADS):
            g = hh // rep                       # GQA: share KV head in-register
            qh = rope(q[:, hh * HEAD_DIM:(hh + 1) * HEAD_DIM]).astype(DTYPE)
            s = jnp.einsum("qd,kd->qk", qh, k_rope[g],
                           preferred_element_type=f32) * scale
            s = jnp.where(causal, s, -jnp.inf)
            m = jnp.max(s, axis=-1, keepdims=True)
            p = jnp.exp(s - m)
            lsum = jnp.sum(p, axis=-1, keepdims=True)
            o = jnp.dot(p.astype(DTYPE), v_head[g], preferred_element_type=f32)
            heads.append(o * pl.reciprocal(lsum, approx=True))
        attn = jnp.concatenate(heads, axis=-1).astype(DTYPE)           # (S, H*Dh)

        h = h + jnp.dot(attn, wo_ref[l], preferred_element_type=f32)   # o_proj + residual

        # ---- MLP: RMSNorm -> fused gate|up -> SwiGLU -> down + residual ----
        hn2 = rmsnorm(h, ln2_ref[l]).astype(DTYPE)
        gu = jnp.dot(hn2, wgu_ref[l], preferred_element_type=f32)      # (S, 2I)
        gpart = gu[:, :INTERMEDIATE]
        upart = gu[:, INTERMEDIATE:]
        act = (gpart * jax.nn.sigmoid(gpart) * upart).astype(DTYPE)
        h = h + jnp.dot(act, wdown_ref[l], preferred_element_type=f32)

    # ---- final norm, last token, lm_head + flag_head + nll/flag + CE loss ----
    hf = rmsnorm(h, norm_ref[...])
    h_last = hf[S - 1:S, :].astype(DTYPE)                              # (1, D)
    hlast_ref[...] = h_last

    logits = jnp.dot(h_last, lm_head_ref[...], preferred_element_type=f32)  # (1, V)
    logits_ref[...] = logits

    aux = aux_ref[...]                                                 # (1, 8) f32
    u = aux[:, 0:1]
    flag_b = aux[:, 1:2]
    z = jnp.sum(h_last.astype(f32) * flag_w_ref[...].astype(f32),
                axis=-1, keepdims=True) + flag_b                       # (1, 1) flag logit
    nll = jnp.maximum(-z, 0.0) + jnp.log(1.0 + jnp.exp(-jnp.abs(z)))   # -logsigmoid(z)
    prob = jax.nn.sigmoid(z)
    flag = prob > u
    nll_out = jnp.where(flag, nll, z + nll)

    mx = jnp.max(logits, axis=-1, keepdims=True)
    lse = mx + jnp.log(jnp.sum(jnp.exp(logits - mx), axis=-1, keepdims=True))
    loss = jnp.sum((lse - logits) * label_oh_ref[...], axis=-1, keepdims=True)

    scalars_ref[...] = jnp.concatenate(
        [nll_out, flag.astype(f32), loss, z, prob, nll,
         jnp.zeros((1, 2), f32)], axis=-1)


def _full_spec(shape):
    n = len(shape)
    return pl.BlockSpec(shape, lambda i, n=n: (0,) * n)


# ----------------------------- device forward --------------------------------
def rope_cos_sin(seq_len, dim, base=ROPE_BASE):
    inv_freq = 1.0 / (base ** (jnp.arange(0, dim, 2, dtype=jnp.float32) / dim))
    t = jnp.arange(seq_len, dtype=jnp.float32)
    freqs = jnp.outer(t, inv_freq)
    emb = jnp.concatenate([freqs, freqs], axis=-1)
    return jnp.cos(emb), jnp.sin(emb)


@jax.jit
def _forward_device(params, h0, label_idx, u):
    S = h0.shape[0]
    cos, sin = rope_cos_sin(S, HEAD_DIM)                    # no kv_cache -> positions 0..S-1
    label_oh = jax.nn.one_hot(label_idx, VOCAB, dtype=jnp.float32).reshape(1, VOCAB)
    aux = jnp.concatenate(
        [u.reshape(1, 1).astype(jnp.float32),
         params["flag_b"].reshape(1, 1).astype(jnp.float32),
         jnp.zeros((1, 6), jnp.float32)], axis=1)

    inputs = (h0, params["wqkv"], params["wo"], params["wgu"], params["wdown"],
              params["ln1"], params["ln2"], params["norm"],
              cos, sin, params["lm_head"], params["flag_w"], label_oh, aux)

    out_shape = (
        jax.ShapeDtypeStruct((NUM_LAYERS, S, NUM_KV_HEADS * HEAD_DIM), DTYPE),  # K cache
        jax.ShapeDtypeStruct((NUM_LAYERS, S, NUM_KV_HEADS * HEAD_DIM), DTYPE),  # V cache
        jax.ShapeDtypeStruct((1, HIDDEN), DTYPE),                                # last hidden
        jax.ShapeDtypeStruct((1, VOCAB), jnp.float32),                           # logits
        jax.ShapeDtypeStruct((1, 8), jnp.float32),                               # packed scalars
    )
    kc, vc, hlast, logits, scalars = pl.pallas_call(
        _fused_forward_kernel,
        grid=(1,),
        in_specs=[_full_spec(a.shape) for a in inputs],
        out_specs=tuple(_full_spec(s.shape) for s in out_shape),
        out_shape=out_shape,
        compiler_params=pltpu.CompilerParams(dimension_semantics=("arbitrary",)),
    )(*inputs)

    kv_cache = []
    for l in range(NUM_LAYERS):     # present cache in reference layout (B, KVH, S, Dh)
        k_l = kc[l].reshape(S, NUM_KV_HEADS, HEAD_DIM).transpose(1, 0, 2)[None]
        v_l = vc[l].reshape(S, NUM_KV_HEADS, HEAD_DIM).transpose(1, 0, 2)[None]
        kv_cache.append((k_l, v_l))

    return dict(
        kv_cache=kv_cache,
        hidden_states=hlast.reshape(1, 1, HIDDEN),
        logits=logits.reshape(1, 1, VOCAB),
        nll=scalars[0:1, 0],
        flag=scalars[0, 1] > 0.5,
        loss=scalars[0, 2],
    )


# ----------------------------- params & wrapper -------------------------------
def build_params(key):
    def nrm(k, shape, scale=0.02):
        return (scale * jax.random.normal(k, shape, jnp.float32)).astype(DTYPE)

    keys = jax.random.split(key, 8 + NUM_LAYERS)
    params = {
        "embed": nrm(keys[0], (VOCAB, HIDDEN)),
        "norm": jnp.ones((1, HIDDEN), DTYPE),
        "lm_head": nrm(keys[1], (HIDDEN, VOCAB)),
    }
    # latent_query: xavier_uniform on (1, 1, HIDDEN)
    b_lq = (6.0 / (1 + HIDDEN)) ** 0.5
    params["latent_query"] = jax.random.uniform(
        keys[2], (1, 1, HIDDEN), jnp.float32, -b_lq, b_lq).astype(DTYPE)
    # flag_head: Linear(HIDDEN -> 1), xavier_uniform weight, bias = -1.0
    b_fh = (6.0 / (HIDDEN + 1)) ** 0.5
    params["flag_w"] = jax.random.uniform(
        keys[3], (1, HIDDEN), jnp.float32, -b_fh, b_fh).astype(DTYPE)
    params["flag_b"] = jnp.full((1,), -1.0, DTYPE)

    wqkv, wo, wgu, wdown = [], [], [], []
    for li in range(NUM_LAYERS):
        lk = jax.random.split(keys[8 + li], 7)
        wq = nrm(lk[0], (HIDDEN, NUM_HEADS * HEAD_DIM))
        wk = nrm(lk[1], (HIDDEN, NUM_KV_HEADS * HEAD_DIM))
        wv = nrm(lk[2], (HIDDEN, NUM_KV_HEADS * HEAD_DIM))
        wqkv.append(jnp.concatenate([wq, wk, wv], axis=1))        # (D, 128) lane-dense
        wo.append(nrm(lk[3], (NUM_HEADS * HEAD_DIM, HIDDEN)))
        wg = nrm(lk[4], (HIDDEN, INTERMEDIATE))
        wu = nrm(lk[5], (HIDDEN, INTERMEDIATE))
        wgu.append(jnp.concatenate([wg, wu], axis=1))              # (D, 256)
        wdown.append(nrm(lk[6], (INTERMEDIATE, HIDDEN)))
    params["wqkv"] = jnp.stack(wqkv)
    params["wo"] = jnp.stack(wo)
    params["wgu"] = jnp.stack(wgu)
    params["wdown"] = jnp.stack(wdown)
    params["ln1"] = jnp.ones((NUM_LAYERS, 1, HIDDEN), DTYPE)
    params["ln2"] = jnp.ones((NUM_LAYERS, 1, HIDDEN), DTYPE)
    return params


def model_for_training_forward(params, input_ids=None, label=None, flag_key=None):
    """Mirrors ModelForTraining.forward (kv_cache=None path, batch == 1)."""
    if flag_key is None:
        flag_key = jax.random.PRNGKey(0)
    u = jax.random.uniform(flag_key, (), jnp.float32)      # rand(1) of the reference
    if input_ids is None:
        h0 = params["latent_query"].reshape(1, HIDDEN)     # latent_query path (S=1)
    else:
        assert input_ids.shape[0] == BATCH == 1
        h0 = jnp.take(params["embed"], input_ids.reshape(-1), axis=0)   # (S, D)
    label_idx = jnp.int32(label) if label is not None else jnp.int32(-1)
    out = _forward_device(params, h0, label_idx, u)
    if label is None:
        out = dict(out, loss=None)
    return out


# ----------------------------- main -------------------------------------------
if __name__ == "__main__":
    root = jax.random.PRNGKey(0)
    pkey, dkey, fkey = jax.random.split(root, 3)

    params = build_params(pkey)
    input_ids = jax.random.randint(dkey, (BATCH, SEQ), 0, VOCAB)
    label = 3

    out = model_for_training_forward(params, input_ids=input_ids, label=label, flag_key=fkey)
    jax.block_until_ready((out["loss"], out["nll"], out["logits"],
                           out["hidden_states"], out["kv_cache"]))
    _flag = bool(out["flag"])   # host read only after the whole forward (mirrors `.item()`)

    # also exercise the latent_query (input_ids=None) path
    out2 = model_for_training_forward(params, input_ids=None, label=None, flag_key=fkey)
    jax.block_until_ready((out2["nll"], out2["logits"], out2["kv_cache"]))

    print("KERNEL_OK")
</pallas_src>

<mosaic_0001>
module attributes {stable_mosaic.version = 11 : i64} {
  func.func @_fused_forward_kernel(%arg0: i32, %arg1: memref<8x64xbf16, #tpu.memory_space<vmem>>, %arg2: memref<2x64x128xbf16, #tpu.memory_space<vmem>>, %arg3: memref<2x64x64xbf16, #tpu.memory_space<vmem>>, %arg4: memref<2x64x256xbf16, #tpu.memory_space<vmem>>, %arg5: memref<2x128x64xbf16, #tpu.memory_space<vmem>>, %arg6: memref<2x1x64xbf16, #tpu.memory_space<vmem>>, %arg7: memref<2x1x64xbf16, #tpu.memory_space<vmem>>, %arg8: memref<1x64xbf16, #tpu.memory_space<vmem>>, %arg9: memref<8x16xf32, #tpu.memory_space<vmem>>, %arg10: memref<8x16xf32, #tpu.memory_space<vmem>>, %arg11: memref<64x128xbf16, #tpu.memory_space<vmem>>, %arg12: memref<1x64xbf16, #tpu.memory_space<vmem>>, %arg13: memref<1x128xf32, #tpu.memory_space<vmem>>, %arg14: memref<1x8xf32, #tpu.memory_space<vmem>>, %arg15: memref<2x8x32xbf16, #tpu.memory_space<vmem>>, %arg16: memref<2x8x32xbf16, #tpu.memory_space<vmem>>, %arg17: memref<1x64xbf16, #tpu.memory_space<vmem>>, %arg18: memref<1x128xf32, #tpu.memory_space<vmem>>, %arg19: memref<1x8xf32, #tpu.memory_space<vmem>>) attributes {dimension_semantics = [#tpu.dimension_semantics<arbitrary>], iteration_bounds = array<i64: 1>, scalar_prefetch = 0 : i64, scratch_operands = 0 : i64, tpu.core_type = #tpu.core_type<tc>, window_params = [{pipeline_mode = #tpu.pipeline_mode<synchronous>, transform_indices = @transform_0, window_bounds = array<i64: 8, 64>}, {pipeline_mode = #tpu.pipeline_mode<synchronous>, transform_indices = @transform_1, window_bounds = array<i64: 2, 64, 128>}, {pipeline_mode = #tpu.pipeline_mode<synchronous>, transform_indices = @transform_2, window_bounds = array<i64: 2, 64, 64>}, {pipeline_mode = #tpu.pipeline_mode<synchronous>, transform_indices = @transform_3, window_bounds = array<i64: 2, 64, 256>}, {pipeline_mode = #tpu.pipeline_mode<synchronous>, transform_indices = @transform_4, window_bounds = array<i64: 2, 128, 64>}, {pipeline_mode = #tpu.pipeline_mode<synchronous>, transform_indices = @transform_5, window_bounds = array<i64: 2, 1, 64>}, {pipeline_mode = #tpu.pipeline_mode<synchronous>, transform_indices = @transform_6, window_bounds = array<i64: 2, 1, 64>}, {pipeline_mode = #tpu.pipeline_mode<synchronous>, transform_indices = @transform_7, window_bounds = array<i64: 1, 64>}, {pipeline_mode = #tpu.pipeline_mode<synchronous>, transform_indices = @transform_8, window_bounds = array<i64: 8, 16>}, {pipeline_mode = #tpu.pipeline_mode<synchronous>, transform_indices = @transform_9, window_bounds = array<i64: 8, 16>}, {pipeline_mode = #tpu.pipeline_mode<synchronous>, transform_indices = @transform_10, window_bounds = array<i64: 64, 128>}, {pipeline_mode = #tpu.pipeline_mode<synchronous>, transform_indices = @transform_11, window_bounds = array<i64: 1, 64>}, {pipeline_mode = #tpu.pipeline_mode<synchronous>, transform_indices = @transform_12, window_bounds = array<i64: 1, 128>}, {pipeline_mode = #tpu.pipeline_mode<synchronous>, transform_indices = @transform_13, window_bounds = array<i64: 1, 8>}, {pipeline_mode = #tpu.pipeline_mode<synchronous>, transform_indices = @transform_14, window_bounds = array<i64: 2, 8, 32>}, {pipeline_mode = #tpu.pipeline_mode<synchronous>, transform_indices = @transform_15, window_bounds = array<i64: 2, 8, 32>}, {pipeline_mode = #tpu.pipeline_mode<synchronous>, transform_indices = @transform_16, window_bounds = array<i64: 1, 64>}, {pipeline_mode = #tpu.pipeline_mode<synchronous>, transform_indices = @transform_17, window_bounds = array<i64: 1, 128>}, {pipeline_mode = #tpu.pipeline_mode<synchronous>, transform_indices = @transform_18, window_bounds = array<i64: 1, 8>}]} {
    %c0 = arith.constant 0 : index
    %c0_0 = arith.constant 0 : index
    %0 = vector.load %arg1[%c0, %c0_0] : memref<8x64xbf16, #tpu.memory_space<vmem>>, vector<8x64xbf16>
    %1 = arith.extf %0 : vector<8x64xbf16> to vector<8x64xf32>
    %c0_1 = arith.constant 0 : index
    %c0_2 = arith.constant 0 : index
    %2 = vector.load %arg9[%c0_1, %c0_2] : memref<8x16xf32, #tpu.memory_space<vmem>>, vector<8x16xf32>
    %c0_3 = arith.constant 0 : index
    %c0_4 = arith.constant 0 : index
    %3 = vector.load %arg10[%c0_3, %c0_4] : memref<8x16xf32, #tpu.memory_space<vmem>>, vector<8x16xf32>
    %4 = tpu.iota {dimensions = array<i32: 0>} : vector<8x8xi32>
    %5 = tpu.iota {dimensions = array<i32: 1>} : vector<8x8xi32>
    %6 = arith.cmpi sle, %5, %4 : vector<8x8xi32>
    %c0_5 = arith.constant 0 : index
    %c0_6 = arith.constant 0 : index
    %c0_7 = arith.constant 0 : index
    %7 = vector.load %arg6[%c0_5, %c0_6, %c0_7] : memref<2x1x64xbf16, #tpu.memory_space<vmem>>, vector<1x1x64xbf16>
    %8 = vector.shape_cast %7 : vector<1x1x64xbf16> to vector<1x64xbf16>
    %9 = arith.mulf %1, %1 : vector<8x64xf32>
    %cst = arith.constant dense<0.000000e+00> : vector<8xf32>
    %10 = vector.multi_reduction <add>, %9, %cst [1] : vector<8x64xf32> to vector<8xf32>
    %11 = vector.shape_cast %10 : vector<8xf32> to vector<8x1xf32>
    %cst_8 = arith.constant 6.400000e+01 : f32
    %12 = vector.broadcast %cst_8 : f32 to vector<8x1xf32>
    %13 = arith.divf %11, %12 : vector<8x1xf32>
    %cst_9 = arith.constant 9.99999997E-7 : f32
    %14 = vector.broadcast %cst_9 : f32 to vector<8x1xf32>
    %15 = arith.addf %13, %14 : vector<8x1xf32>
    %16 = math.rsqrt %15 : vector<8x1xf32>
    %17 = vector.broadcast %16 : vector<8x1xf32> to vector<8x64xf32>
    %18 = arith.mulf %1, %17 : vector<8x64xf32>
    %19 = arith.extf %8 : vector<1x64xbf16> to vector<1x64xf32>
    %20 = vector.broadcast %19 : vector<1x64xf32> to vector<8x64xf32>
    %21 = arith.mulf %18, %20 : vector<8x64xf32>
    %22 = arith.truncf %21 : vector<8x64xf32> to vector<8x64xbf16>
    %c0_10 = arith.constant 0 : index
    %c0_11 = arith.constant 0 : index
    %c0_12 = arith.constant 0 : index
    %23 = vector.load %arg2[%c0_10, %c0_11, %c0_12] : memref<2x64x128xbf16, #tpu.memory_space<vmem>>, vector<1x64x128xbf16>
    %24 = vector.shape_cast %23 : vector<1x64x128xbf16> to vector<64x128xbf16>
    %cst_13 = arith.constant dense<0.000000e+00> : vector<8x128xf32>
    %25 = tpu.matmul %22, %24, %cst_13 {dimension_numbers = #tpu.dot_dimension_numbers<[1], [0], [0], [1], [0, 0, 1, 1], [], []>} : vector<8x64xbf16>, vector<64x128xbf16>, vector<8x128xf32> -> vector<8x128xf32>
    %26 = vector.extract_strided_slice %25 {offsets = [0, 0], sizes = [8, 64], strides = [1, 1]} : vector<8x128xf32> to vector<8x64xf32>
    %27 = vector.extract_strided_slice %25 {offsets = [0, 64], sizes = [8, 32], strides = [1, 1]} : vector<8x128xf32> to vector<8x32xf32>
    %28 = vector.extract_strided_slice %25 {offsets = [0, 96], sizes = [8, 32], strides = [1, 1]} : vector<8x128xf32> to vector<8x32xf32>
    %29 = arith.truncf %27 : vector<8x32xf32> to vector<8x32xbf16>
    %c0_14 = arith.constant 0 : index
    %c0_15 = arith.constant 0 : index
    %c0_16 = arith.constant 0 : index
    %30 = vector.load %arg15[%c0_14, %c0_15, %c0_16] : memref<2x8x32xbf16, #tpu.memory_space<vmem>>, vector<1x8x32xbf16>
    %31 = vector.shape_cast %30 : vector<1x8x32xbf16> to vector<8x32xbf16>
    %32 = vector.shape_cast %29 : vector<8x32xbf16> to vector<1x8x32xbf16>
    tpu.vector_store %arg15[%c0_14, %c0_15, %c0_16], %32 {strides = array<i32>} : memref<2x8x32xbf16, #tpu.memory_space<vmem>>, vector<1x8x32xbf16>,
    %33 = arith.truncf %28 : vector<8x32xf32> to vector<8x32xbf16>
    %c0_17 = arith.constant 0 : index
    %c0_18 = arith.constant 0 : index
    %c0_19 = arith.constant 0 : index
    %34 = vector.load %arg16[%c0_17, %c0_18, %c0_19] : memref<2x8x32xbf16, #tpu.memory_space<vmem>>, vector<1x8x32xbf16>
    %35 = vector.shape_cast %34 : vector<1x8x32xbf16> to vector<8x32xbf16>
    %36 = vector.shape_cast %33 : vector<8x32xbf16> to vector<1x8x32xbf16>
    tpu.vector_store %arg16[%c0_17, %c0_18, %c0_19], %36 {strides = array<i32>} : memref<2x8x32xbf16, #tpu.memory_space<vmem>>, vector<1x8x32xbf16>,
    %37 = vector.extract_strided_slice %27 {offsets = [0, 0], sizes = [8, 16], strides = [1, 1]} : vector<8x32xf32> to vector<8x16xf32>
    %38 = vector.extract_strided_slice %37 {offsets = [0, 8], sizes = [8, 8], strides = [1, 1]} : vector<8x16xf32> to vector<8x8xf32>
    %cst_20 = arith.constant 0.000000e+00 : f32
    %39 = vector.broadcast %cst_20 : f32 to vector<8x8xf32>
    %40 = arith.subf %39, %38 : vector<8x8xf32>
    %41 = vector.extract_strided_slice %37 {offsets = [0, 0], sizes = [8, 8], strides = [1, 1]} : vector<8x16xf32> to vector<8x8xf32>
    %42 = tpu.concatenate %40, %41 in 1 : vector<8x8xf32>, vector<8x8xf32> -> vector<8x16xf32>
    %43 = arith.mulf %37, %2 : vector<8x16xf32>
    %44 = arith.mulf %42, %3 : vector<8x16xf32>
    %45 = arith.addf %43, %44 : vector<8x16xf32>
    %46 = arith.truncf %45 : vector<8x16xf32> to vector<8x16xbf16>
    %47 = vector.extract_strided_slice %27 {offsets = [0, 16], sizes = [8, 16], strides = [1, 1]} : vector<8x32xf32> to vector<8x16xf32>
    %48 = vector.extract_strided_slice %47 {offsets = [0, 8], sizes = [8, 8], strides = [1, 1]} : vector<8x16xf32> to vector<8x8xf32>
    %cst_21 = arith.constant 0.000000e+00 : f32
    %49 = vector.broadcast %cst_21 : f32 to vector<8x8xf32>
    %50 = arith.subf %49, %48 : vector<8x8xf32>
    %51 = vector.extract_strided_slice %47 {offsets = [0, 0], sizes = [8, 8], strides = [1, 1]} : vector<8x16xf32> to vector<8x8xf32>
    %52 = tpu.concatenate %50, %51 in 1 : vector<8x8xf32>, vector<8x8xf32> -> vector<8x16xf32>
    %53 = arith.mulf %47, %2 : vector<8x16xf32>
    %54 = arith.mulf %52, %3 : vector<8x16xf32>
    %55 = arith.addf %53, %54 : vector<8x16xf32>
    %56 = arith.truncf %55 : vector<8x16xf32> to vector<8x16xbf16>
    %57 = vector.extract_strided_slice %28 {offsets = [0, 0], sizes = [8, 16], strides = [1, 1]} : vector<8x32xf32> to vector<8x16xf32>
    %58 = arith.truncf %57 : vector<8x16xf32> to vector<8x16xbf16>
    %59 = vector.extract_strided_slice %28 {offsets = [0, 16], sizes = [8, 16], strides = [1, 1]} : vector<8x32xf32> to vector<8x16xf32>
    %60 = arith.truncf %59 : vector<8x16xf32> to vector<8x16xbf16>
    %61 = vector.extract_strided_slice %26 {offsets = [0, 0], sizes = [8, 16], strides = [1, 1]} : vector<8x64xf32> to vector<8x16xf32>
    %62 = vector.extract_strided_slice %61 {offsets = [0, 8], sizes = [8, 8], strides = [1, 1]} : vector<8x16xf32> to vector<8x8xf32>
    %cst_22 = arith.constant 0.000000e+00 : f32
    %63 = vector.broadcast %cst_22 : f32 to vector<8x8xf32>
    %64 = arith.subf %63, %62 : vector<8x8xf32>
    %65 = vector.extract_strided_slice %61 {offsets = [0, 0], sizes = [8, 8], strides = [1, 1]} : vector<8x16xf32> to vector<8x8xf32>
    %66 = tpu.concatenate %64, %65 in 1 : vector<8x8xf32>, vector<8x8xf32> -> vector<8x16xf32>
    %67 = arith.mulf %61, %2 : vector<8x16xf32>
    %68 = arith.mulf %66, %3 : vector<8x16xf32>
    %69 = arith.addf %67, %68 : vector<8x16xf32>
    %70 = arith.truncf %69 : vector<8x16xf32> to vector<8x16xbf16>
    "tpu.trace_start"() <{level = 10 : i32, message = "qd,kd->qk"}> : () -> ()
    %cst_23 = arith.constant dense<0.000000e+00> : vector<8x8xf32>
    %71 = tpu.matmul %70, %46, %cst_23 {dimension_numbers = #tpu.dot_dimension_numbers<[1], [1], [0], [0], [0, 0, 1, 0], [], []>} : vector<8x16xbf16>, vector<8x16xbf16>, vector<8x8xf32> -> vector<8x8xf32>
    "tpu.trace_stop"() : () -> ()
    %cst_24 = arith.constant 2.500000e-01 : f32
    %72 = vector.broadcast %cst_24 : f32 to vector<8x8xf32>
    %73 = arith.mulf %71, %72 : vector<8x8xf32>
    %cst_25 = arith.constant 0xFF800000 : f32
    %74 = vector.broadcast %cst_25 : f32 to vector<8x8xf32>
    %75 = arith.select %6, %73, %74 : vector<8x8xi1>, vector<8x8xf32>
    %cst_26 = arith.constant dense<0xFF800000> : vector<8xf32>
    %76 = vector.multi_reduction <maximumf>, %75, %cst_26 [1] : vector<8x8xf32> to vector<8xf32>
    %77 = vector.shape_cast %76 : vector<8xf32> to vector<8x1xf32>
    %78 = vector.broadcast %77 : vector<8x1xf32> to vector<8x8xf32>
    %79 = arith.subf %75, %78 : vector<8x8xf32>
    %80 = math.exp %79 : vector<8x8xf32>
    %cst_27 = arith.constant dense<0.000000e+00> : vector<8xf32>
    %81 = vector.multi_reduction <add>, %80, %cst_27 [1] : vector<8x8xf32> to vector<8xf32>
    %82 = vector.shape_cast %81 : vector<8xf32> to vector<8x1xf32>
    %83 = arith.truncf %80 : vector<8x8xf32> to vector<8x8xbf16>
    %cst_28 = arith.constant dense<0.000000e+00> : vector<8x16xf32>
    %84 = tpu.matmul %83, %58, %cst_28 {dimension_numbers = #tpu.dot_dimension_numbers<[1], [0], [0], [1], [0, 0, 1, 1], [], []>} : vector<8x8xbf16>, vector<8x16xbf16>, vector<8x16xf32> -> vector<8x16xf32>
    %85 = tpu.reciprocal %82 {approx = true} : vector<8x1xf32> -> vector<8x1xf32>
    %86 = vector.broadcast %85 : vector<8x1xf32> to vector<8x16xf32>
    %87 = arith.mulf %84, %86 : vector<8x16xf32>
    %88 = vector.extract_strided_slice %26 {offsets = [0, 16], sizes = [8, 16], strides = [1, 1]} : vector<8x64xf32> to vector<8x16xf32>
    %89 = vector.extract_strided_slice %88 {offsets = [0, 8], sizes = [8, 8], strides = [1, 1]} : vector<8x16xf32> to vector<8x8xf32>
    %cst_29 = arith.constant 0.000000e+00 : f32
    %90 = vector.broadcast %cst_29 : f32 to vector<8x8xf32>
    %91 = arith.subf %90, %89 : vector<8x8xf32>
    %92 = vector.extract_strided_slice %88 {offsets = [0, 0], sizes = [8, 8], strides = [1, 1]} : vector<8x16xf32> to vector<8x8xf32>
    %93 = tpu.concatenate %91, %92 in 1 : vector<8x8xf32>, vector<8x8xf32> -> vector<8x16xf32>
    %94 = arith.mulf %88, %2 : vector<8x16xf32>
    %95 = arith.mulf %93, %3 : vector<8x16xf32>
    %96 = arith.addf %94, %95 : vector<8x16xf32>
    %97 = arith.truncf %96 : vector<8x16xf32> to vector<8x16xbf16>
    "tpu.trace_start"() <{level = 10 : i32, message = "qd,kd->qk"}> : () -> ()
    %cst_30 = arith.constant dense<0.000000e+00> : vector<8x8xf32>
    %98 = tpu.matmul %97, %46, %cst_30 {dimension_numbers = #tpu.dot_dimension_numbers<[1], [1], [0], [0], [0, 0, 1, 0], [], []>} : vector<8x16xbf16>, vector<8x16xbf16>, vector<8x8xf32> -> vector<8x8xf32>
    "tpu.trace_stop"() : () -> ()
    %cst_31 = arith.constant 2.500000e-01 : f32
    %99 = vector.broadcast %cst_31 : f32 to vector<8x8xf32>
    %100 = arith.mulf %98, %99 : vector<8x8xf32>
    %cst_32 = arith.constant 0xFF800000 : f32
    %101 = vector.broadcast %cst_32 : f32 to vector<8x8xf32>
    %102 = arith.select %6, %100, %101 : vector<8x8xi1>, vector<8x8xf32>
    %cst_33 = arith.constant dense<0xFF800000> : vector<8xf32>
    %103 = vector.multi_reduction <maximumf>, %102, %cst_33 [1] : vector<8x8xf32> to vector<8xf32>
    %104 = vector.shape_cast %103 : vector<8xf32> to vector<8x1xf32>
    %105 = vector.broadcast %104 : vector<8x1xf32> to vector<8x8xf32>
    %106 = arith.subf %102, %105 : vector<8x8xf32>
    %107 = math.exp %106 : vector<8x8xf32>
    %cst_34 = arith.constant dense<0.000000e+00> : vector<8xf32>
    %108 = vector.multi_reduction <add>, %107, %cst_34 [1] : vector<8x8xf32> to vector<8xf32>
    %109 = vector.shape_cast %108 : vector<8xf32> to vector<8x1xf32>
    %110 = arith.truncf %107 : vector<8x8xf32> to vector<8x8xbf16>
    %cst_35 = arith.constant dense<0.000000e+00> : vector<8x16xf32>
    %111 = tpu.matmul %110, %58, %cst_35 {dimension_numbers = #tpu.dot_dimension_numbers<[1], [0], [0], [1], [0, 0, 1, 1], [], []>} : vector<8x8xbf16>, vector<8x16xbf16>, vector<8x16xf32> -> vector<8x16xf32>
    %112 = tpu.reciprocal %109 {approx = true} : vector<8x1xf32> -> vector<8x1xf32>
    %113 = vector.broadcast %112 : vector<8x1xf32> to vector<8x16xf32>
    %114 = arith.mulf %111, %113 : vector<8x16xf32>
    %115 = vector.extract_strided_slice %26 {offsets = [0, 32], sizes = [8, 16], strides = [1, 1]} : vector<8x64xf32> to vector<8x16xf32>
    %116 = vector.extract_strided_slice %115 {offsets = [0, 8], sizes = [8, 8], strides = [1, 1]} : vector<8x16xf32> to vector<8x8xf32>
    %cst_36 = arith.constant 0.000000e+00 : f32
    %117 = vector.broadcast %cst_36 : f32 to vector<8x8xf32>
    %118 = arith.subf %117, %116 : vector<8x8xf32>
    %119 = vector.extract_strided_slice %115 {offsets = [0, 0], sizes = [8, 8], strides = [1, 1]} : vector<8x16xf32> to vector<8x8xf32>
    %120 = tpu.concatenate %118, %119 in 1 : vector<8x8xf32>, vector<8x8xf32> -> vector<8x16xf32>
    %121 = arith.mulf %115, %2 : vector<8x16xf32>
    %122 = arith.mulf %120, %3 : vector<8x16xf32>
    %123 = arith.addf %121, %122 : vector<8x16xf32>
    %124 = arith.truncf %123 : vector<8x16xf32> to vector<8x16xbf16>
    "tpu.trace_start"() <{level = 10 : i32, message = "qd,kd->qk"}> : () -> ()
    %cst_37 = arith.constant dense<0.000000e+00> : vector<8x8xf32>
    %125 = tpu.matmul %124, %56, %cst_37 {dimension_numbers = #tpu.dot_dimension_numbers<[1], [1], [0], [0], [0, 0, 1, 0], [], []>} : vector<8x16xbf16>, vector<8x16xbf16>, vector<8x8xf32> -> vector<8x8xf32>
    "tpu.trace_stop"() : () -> ()
    %cst_38 = arith.constant 2.500000e-01 : f32
    %126 = vector.broadcast %cst_38 : f32 to vector<8x8xf32>
    %127 = arith.mulf %125, %126 : vector<8x8xf32>
    %cst_39 = arith.constant 0xFF800000 : f32
    %128 = vector.broadcast %cst_39 : f32 to vector<8x8xf32>
    %129 = arith.select %6, %127, %128 : vector<8x8xi1>, vector<8x8xf32>
    %cst_40 = arith.constant dense<0xFF800000> : vector<8xf32>
    %130 = vector.multi_reduction <maximumf>, %129, %cst_40 [1] : vector<8x8xf32> to vector<8xf32>
    %131 = vector.shape_cast %130 : vector<8xf32> to vector<8x1xf32>
    %132 = vector.broadcast %131 : vector<8x1xf32> to vector<8x8xf32>
    %133 = arith.subf %129, %132 : vector<8x8xf32>
    %134 = math.exp %133 : vector<8x8xf32>
    %cst_41 = arith.constant dense<0.000000e+00> : vector<8xf32>
    %135 = vector.multi_reduction <add>, %134, %cst_41 [1] : vector<8x8xf32> to vector<8xf32>
    %136 = vector.shape_cast %135 : vector<8xf32> to vector<8x1xf32>
    %137 = arith.truncf %134 : vector<8x8xf32> to vector<8x8xbf16>
    %cst_42 = arith.constant dense<0.000000e+00> : vector<8x16xf32>
    %138 = tpu.matmul %137, %60, %cst_42 {dimension_numbers = #tpu.dot_dimension_numbers<[1], [0], [0], [1], [0, 0, 1, 1], [], []>} : vector<8x8xbf16>, vector<8x16xbf16>, vector<8x16xf32> -> vector<8x16xf32>
    %139 = tpu.reciprocal %136 {approx = true} : vector<8x1xf32> -> vector<8x1xf32>
    %140 = vector.broadcast %139 : vector<8x1xf32> to vector<8x16xf32>
    %141 = arith.mulf %138, %140 : vector<8x16xf32>
    %142 = vector.extract_strided_slice %26 {offsets = [0, 48], sizes = [8, 16], strides = [1, 1]} : vector<8x64xf32> to vector<8x16xf32>
    %143 = vector.extract_strided_slice %142 {offsets = [0, 8], sizes = [8, 8], strides = [1, 1]} : vector<8x16xf32> to vector<8x8xf32>
    %cst_43 = arith.constant 0.000000e+00 : f32
    %144 = vector.broadcast %cst_43 : f32 to vector<8x8xf32>
    %145 = arith.subf %144, %143 : vector<8x8xf32>
    %146 = vector.extract_strided_slice %142 {offsets = [0, 0], sizes = [8, 8], strides = [1, 1]} : vector<8x16xf32> to vector<8x8xf32>
    %147 = tpu.concatenate %145, %146 in 1 : vector<8x8xf32>, vector<8x8xf32> -> vector<8x16xf32>
    %148 = arith.mulf %142, %2 : vector<8x16xf32>
    %149 = arith.mulf %147, %3 : vector<8x16xf32>
    %150 = arith.addf %148, %149 : vector<8x16xf32>
    %151 = arith.truncf %150 : vector<8x16xf32> to vector<8x16xbf16>
    "tpu.trace_start"() <{level = 10 : i32, message = "qd,kd->qk"}> : () -> ()
    %cst_44 = arith.constant dense<0.000000e+00> : vector<8x8xf32>
    %152 = tpu.matmul %151, %56, %cst_44 {dimension_numbers = #tpu.dot_dimension_numbers<[1], [1], [0], [0], [0, 0, 1, 0], [], []>} : vector<8x16xbf16>, vector<8x16xbf16>, vector<8x8xf32> -> vector<8x8xf32>
    "tpu.trace_stop"() : () -> ()
    %cst_45 = arith.constant 2.500000e-01 : f32
    %153 = vector.broadcast %cst_45 : f32 to vector<8x8xf32>
    %154 = arith.mulf %152, %153 : vector<8x8xf32>
    %cst_46 = arith.constant 0xFF800000 : f32
    %155 = vector.broadcast %cst_46 : f32 to vector<8x8xf32>
    %156 = arith.select %6, %154, %155 : vector<8x8xi1>, vector<8x8xf32>
    %cst_47 = arith.constant dense<0xFF800000> : vector<8xf32>
    %157 = vector.multi_reduction <maximumf>, %156, %cst_47 [1] : vector<8x8xf32> to vector<8xf32>
    %158 = vector.shape_cast %157 : vector<8xf32> to vector<8x1xf32>
    %159 = vector.broadcast %158 : vector<8x1xf32> to vector<8x8xf32>
    %160 = arith.subf %156, %159 : vector<8x8xf32>
    %161 = math.exp %160 : vector<8x8xf32>
    %cst_48 = arith.constant dense<0.000000e+00> : vector<8xf32>
    %162 = vector.multi_reduction <add>, %161, %cst_48 [1] : vector<8x8xf32> to vector<8xf32>
    %163 = vector.shape_cast %162 : vector<8xf32> to vector<8x1xf32>
    %164 = arith.truncf %161 : vector<8x8xf32> to vector<8x8xbf16>
    %cst_49 = arith.constant dense<0.000000e+00> : vector<8x16xf32>
    %165 = tpu.matmul %164, %60, %cst_49 {dimension_numbers = #tpu.dot_dimension_numbers<[1], [0], [0], [1], [0, 0, 1, 1], [], []>} : vector<8x8xbf16>, vector<8x16xbf16>, vector<8x16xf32> -> vector<8x16xf32>
    %166 = tpu.reciprocal %163 {approx = true} : vector<8x1xf32> -> vector<8x1xf32>
    %167 = vector.broadcast %166 : vector<8x1xf32> to vector<8x16xf32>
    %168 = arith.mulf %165, %167 : vector<8x16xf32>
    %169 = tpu.concatenate %87, %114, %141, %168 in 1 : vector<8x16xf32>, vector<8x16xf32>, vector<8x16xf32>, vector<8x16xf32> -> vector<8x64xf32>
    %170 = arith.truncf %169 : vector<8x64xf32> to vector<8x64xbf16>
    %c0_50 = arith.constant 0 : index
    %c0_51 = arith.constant 0 : index
    %c0_52 = arith.constant 0 : index
    %171 = vector.load %arg3[%c0_50, %c0_51, %c0_52] : memref<2x64x64xbf16, #tpu.memory_space<vmem>>, vector<1x64x64xbf16>
    %172 = vector.shape_cast %171 : vector<1x64x64xbf16> to vector<64x64xbf16>
    %cst_53 = arith.constant dense<0.000000e+00> : vector<8x64xf32>
    %173 = tpu.matmul %170, %172, %cst_53 {dimension_numbers = #tpu.dot_dimension_numbers<[1], [0], [0], [1], [0, 0, 1, 1], [], []>} : vector<8x64xbf16>, vector<64x64xbf16>, vector<8x64xf32> -> vector<8x64xf32>
    %174 = arith.addf %1, %173 : vector<8x64xf32>
    %c0_54 = arith.constant 0 : index
    %c0_55 = arith.constant 0 : index
    %c0_56 = arith.constant 0 : index
    %175 = vector.load %arg7[%c0_54, %c0_55, %c0_56] : memref<2x1x64xbf16, #tpu.memory_space<vmem>>, vector<1x1x64xbf16>
    %176 = vector.shape_cast %175 : vector<1x1x64xbf16> to vector<1x64xbf16>
    %177 = arith.mulf %174, %174 : vector<8x64xf32>
    %cst_57 = arith.constant dense<0.000000e+00> : vector<8xf32>
    %178 = vector.multi_reduction <add>, %177, %cst_57 [1] : vector<8x64xf32> to vector<8xf32>
    %179 = vector.shape_cast %178 : vector<8xf32> to vector<8x1xf32>
    %cst_58 = arith.constant 6.400000e+01 : f32
    %180 = vector.broadcast %cst_58 : f32 to vector<8x1xf32>
    %181 = arith.divf %179, %180 : vector<8x1xf32>
    %cst_59 = arith.constant 9.99999997E-7 : f32
    %182 = vector.broadcast %cst_59 : f32 to vector<8x1xf32>
    %183 = arith.addf %181, %182 : vector<8x1xf32>
    %184 = math.rsqrt %183 : vector<8x1xf32>
    %185 = vector.broadcast %184 : vector<8x1xf32> to vector<8x64xf32>
    %186 = arith.mulf %174, %185 : vector<8x64xf32>
    %187 = arith.extf %176 : vector<1x64xbf16> to vector<1x64xf32>
    %188 = vector.broadcast %187 : vector<1x64xf32> to vector<8x64xf32>
    %189 = arith.mulf %186, %188 : vector<8x64xf32>
    %190 = arith.truncf %189 : vector<8x64xf32> to vector<8x64xbf16>
    %c0_60 = arith.constant 0 : index
    %c0_61 = arith.constant 0 : index
    %c0_62 = arith.constant 0 : index
    %191 = vector.load %arg4[%c0_60, %c0_61, %c0_62] : memref<2x64x256xbf16, #tpu.memory_space<vmem>>, vector<1x64x256xbf16>
    %192 = vector.shape_cast %191 : vector<1x64x256xbf16> to vector<64x256xbf16>
    %cst_63 = arith.constant dense<0.000000e+00> : vector<8x256xf32>
    %193 = tpu.matmul %190, %192, %cst_63 {dimension_numbers = #tpu.dot_dimension_numbers<[1], [0], [0], [1], [0, 0, 1, 1], [], []>} : vector<8x64xbf16>, vector<64x256xbf16>, vector<8x256xf32> -> vector<8x256xf32>
    %194 = vector.extract_strided_slice %193 {offsets = [0, 0], sizes = [8, 128], strides = [1, 1]} : vector<8x256xf32> to vector<8x128xf32>
    %195 = vector.extract_strided_slice %193 {offsets = [0, 128], sizes = [8, 128], strides = [1, 1]} : vector<8x256xf32> to vector<8x128xf32>
    %196 = arith.negf %194 : vector<8x128xf32>
    %197 = math.exp %196 : vector<8x128xf32>
    %cst_64 = arith.constant 1.000000e+00 : f32
    %198 = vector.broadcast %cst_64 : f32 to vector<8x128xf32>
    %199 = arith.addf %198, %197 : vector<8x128xf32>
    %200 = arith.divf %198, %199 : vector<8x128xf32>
    %201 = arith.mulf %194, %200 : vector<8x128xf32>
    %202 = arith.mulf %201, %195 : vector<8x128xf32>
    %203 = arith.truncf %202 : vector<8x128xf32> to vector<8x128xbf16>
    %c0_65 = arith.constant 0 : index
    %c0_66 = arith.constant 0 : index
    %c0_67 = arith.constant 0 : index
    %204 = vector.load %arg5[%c0_65, %c0_66, %c0_67] : memref<2x128x64xbf16, #tpu.memory_space<vmem>>, vector<1x128x64xbf16>
    %205 = vector.shape_cast %204 : vector<1x128x64xbf16> to vector<128x64xbf16>
    %cst_68 = arith.constant dense<0.000000e+00> : vector<8x64xf32>
    %206 = tpu.matmul %203, %205, %cst_68 {dimension_numbers = #tpu.dot_dimension_numbers<[1], [0], [0], [1], [0, 0, 1, 1], [], []>} : vector<8x128xbf16>, vector<128x64xbf16>, vector<8x64xf32> -> vector<8x64xf32>
    %207 = arith.addf %174, %206 : vector<8x64xf32>
    %c1 = arith.constant 1 : index
    %c0_69 = arith.constant 0 : index
    %c0_70 = arith.constant 0 : index
    %208 = vector.load %arg6[%c1, %c0_69, %c0_70] : memref<2x1x64xbf16, #tpu.memory_space<vmem>>, vector<1x1x64xbf16>
    %209 = vector.shape_cast %208 : vector<1x1x64xbf16> to vector<1x64xbf16>
    %210 = arith.mulf %207, %207 : vector<8x64xf32>
    %cst_71 = arith.constant dense<0.000000e+00> : vector<8xf32>
    %211 = vector.multi_reduction <add>, %210, %cst_71 [1] : vector<8x64xf32> to vector<8xf32>
    %212 = vector.shape_cast %211 : vector<8xf32> to vector<8x1xf32>
    %cst_72 = arith.constant 6.400000e+01 : f32
    %213 = vector.broadcast %cst_72 : f32 to vector<8x1xf32>
    %214 = arith.divf %212, %213 : vector<8x1xf32>
    %cst_73 = arith.constant 9.99999997E-7 : f32
    %215 = vector.broadcast %cst_73 : f32 to vector<8x1xf32>
    %216 = arith.addf %214, %215 : vector<8x1xf32>
    %217 = math.rsqrt %216 : vector<8x1xf32>
    %218 = vector.broadcast %217 : vector<8x1xf32> to vector<8x64xf32>
    %219 = arith.mulf %207, %218 : vector<8x64xf32>
    %220 = arith.extf %209 : vector<1x64xbf16> to vector<1x64xf32>
    %221 = vector.broadcast %220 : vector<1x64xf32> to vector<8x64xf32>
    %222 = arith.mulf %219, %221 : vector<8x64xf32>
    %223 = arith.truncf %222 : vector<8x64xf32> to vector<8x64xbf16>
    %c1_74 = arith.constant 1 : index
    %c0_75 = arith.constant 0 : index
    %c0_76 = arith.constant 0 : index
    %224 = vector.load %arg2[%c1_74, %c0_75, %c0_76] : memref<2x64x128xbf16, #tpu.memory_space<vmem>>, vector<1x64x128xbf16>
    %225 = vector.shape_cast %224 : vector<1x64x128xbf16> to vector<64x128xbf16>
    %cst_77 = arith.constant dense<0.000000e+00> : vector<8x128xf32>
    %226 = tpu.matmul %223, %225, %cst_77 {dimension_numbers = #tpu.dot_dimension_numbers<[1], [0], [0], [1], [0, 0, 1, 1], [], []>} : vector<8x64xbf16>, vector<64x128xbf16>, vector<8x128xf32> -> vector<8x128xf32>
    %227 = vector.extract_strided_slice %226 {offsets = [0, 0], sizes = [8, 64], strides = [1, 1]} : vector<8x128xf32> to vector<8x64xf32>
    %228 = vector.extract_strided_slice %226 {offsets = [0, 64], sizes = [8, 32], strides = [1, 1]} : vector<8x128xf32> to vector<8x32xf32>
    %229 = vector.extract_strided_slice %226 {offsets = [0, 96], sizes = [8, 32], strides = [1, 1]} : vector<8x128xf32> to vector<8x32xf32>
    %230 = arith.truncf %228 : vector<8x32xf32> to vector<8x32xbf16>
    %c1_78 = arith.constant 1 : index
    %c0_79 = arith.constant 0 : index
    %c0_80 = arith.constant 0 : index
    %231 = vector.load %arg15[%c1_78, %c0_79, %c0_80] : memref<2x8x32xbf16, #tpu.memory_space<vmem>>, vector<1x8x32xbf16>
    %232 = vector.shape_cast %231 : vector<1x8x32xbf16> to vector<8x32xbf16>
    %233 = vector.shape_cast %230 : vector<8x32xbf16> to vector<1x8x32xbf16>
    tpu.vector_store %arg15[%c1_78, %c0_79, %c0_80], %233 {strides = array<i32>} : memref<2x8x32xbf16, #tpu.memory_space<vmem>>, vector<1x8x32xbf16>,
    %234 = arith.truncf %229 : vector<8x32xf32> to vector<8x32xbf16>
    %c1_81 = arith.constant 1 : index
    %c0_82 = arith.constant 0 : index
    %c0_83 = arith.constant 0 : index
    %235 = vector.load %arg16[%c1_81, %c0_82, %c0_83] : memref<2x8x32xbf16, #tpu.memory_space<vmem>>, vector<1x8x32xbf16>
    %236 = vector.shape_cast %235 : vector<1x8x32xbf16> to vector<8x32xbf16>
    %237 = vector.shape_cast %234 : vector<8x32xbf16> to vector<1x8x32xbf16>
    tpu.vector_store %arg16[%c1_81, %c0_82, %c0_83], %237 {strides = array<i32>} : memref<2x8x32xbf16, #tpu.memory_space<vmem>>, vector<1x8x32xbf16>,
    %238 = vector.extract_strided_slice %228 {offsets = [0, 0], sizes = [8, 16], strides = [1, 1]} : vector<8x32xf32> to vector<8x16xf32>
    %239 = vector.extract_strided_slice %238 {offsets = [0, 8], sizes = [8, 8], strides = [1, 1]} : vector<8x16xf32> to vector<8x8xf32>
    %cst_84 = arith.constant 0.000000e+00 : f32
    %240 = vector.broadcast %cst_84 : f32 to vector<8x8xf32>
    %241 = arith.subf %240, %239 : vector<8x8xf32>
    %242 = vector.extract_strided_slice %238 {offsets = [0, 0], sizes = [8, 8], strides = [1, 1]} : vector<8x16xf32> to vector<8x8xf32>
    %243 = tpu.concatenate %241, %242 in 1 : vector<8x8xf32>, vector<8x8xf32> -> vector<8x16xf32>
    %244 = arith.mulf %238, %2 : vector<8x16xf32>
    %245 = arith.mulf %243, %3 : vector<8x16xf32>
    %246 = arith.addf %244, %245 : vector<8x16xf32>
    %247 = arith.truncf %246 : vector<8x16xf32> to vector<8x16xbf16>
    %248 = vector.extract_strided_slice %228 {offsets = [0, 16], sizes = [8, 16], strides = [1, 1]} : vector<8x32xf32> to vector<8x16xf32>
    %249 = vector.extract_strided_slice %248 {offsets = [0, 8], sizes = [8, 8], strides = [1, 1]} : vector<8x16xf32> to vector<8x8xf32>
    %cst_85 = arith.constant 0.000000e+00 : f32
    %250 = vector.broadcast %cst_85 : f32 to vector<8x8xf32>
    %251 = arith.subf %250, %249 : vector<8x8xf32>
    %252 = vector.extract_strided_slice %248 {offsets = [0, 0], sizes = [8, 8], strides = [1, 1]} : vector<8x16xf32> to vector<8x8xf32>
    %253 = tpu.concatenate %251, %252 in 1 : vector<8x8xf32>, vector<8x8xf32> -> vector<8x16xf32>
    %254 = arith.mulf %248, %2 : vector<8x16xf32>
    %255 = arith.mulf %253, %3 : vector<8x16xf32>
    %256 = arith.addf %254, %255 : vector<8x16xf32>
    %257 = arith.truncf %256 : vector<8x16xf32> to vector<8x16xbf16>
    %258 = vector.extract_strided_slice %229 {offsets = [0, 0], sizes = [8, 16], strides = [1, 1]} : vector<8x32xf32> to vector<8x16xf32>
    %259 = arith.truncf %258 : vector<8x16xf32> to vector<8x16xbf16>
    %260 = vector.extract_strided_slice %229 {offsets = [0, 16], sizes = [8, 16], strides = [1, 1]} : vector<8x32xf32> to vector<8x16xf32>
    %261 = arith.truncf %260 : vector<8x16xf32> to vector<8x16xbf16>
    %262 = vector.extract_strided_slice %227 {offsets = [0, 0], sizes = [8, 16], strides = [1, 1]} : vector<8x64xf32> to vector<8x16xf32>
    %263 = vector.extract_strided_slice %262 {offsets = [0, 8], sizes = [8, 8], strides = [1, 1]} : vector<8x16xf32> to vector<8x8xf32>
    %cst_86 = arith.constant 0.000000e+00 : f32
    %264 = vector.broadcast %cst_86 : f32 to vector<8x8xf32>
    %265 = arith.subf %264, %263 : vector<8x8xf32>
    %266 = vector.extract_strided_slice %262 {offsets = [0, 0], sizes = [8, 8], strides = [1, 1]} : vector<8x16xf32> to vector<8x8xf32>
    %267 = tpu.concatenate %265, %266 in 1 : vector<8x8xf32>, vector<8x8xf32> -> vector<8x16xf32>
    %268 = arith.mulf %262, %2 : vector<8x16xf32>
    %269 = arith.mulf %267, %3 : vector<8x16xf32>
    %270 = arith.addf %268, %269 : vector<8x16xf32>
    %271 = arith.truncf %270 : vector<8x16xf32> to vector<8x16xbf16>
    "tpu.trace_start"() <{level = 10 : i32, message = "qd,kd->qk"}> : () -> ()
    %cst_87 = arith.constant dense<0.000000e+00> : vector<8x8xf32>
    %272 = tpu.matmul %271, %247, %cst_87 {dimension_numbers = #tpu.dot_dimension_numbers<[1], [1], [0], [0], [0, 0, 1, 0], [], []>} : vector<8x16xbf16>, vector<8x16xbf16>, vector<8x8xf32> -> vector<8x8xf32>
    "tpu.trace_stop"() : () -> ()
    %cst_88 = arith.constant 2.500000e-01 : f32
    %273 = vector.broadcast %cst_88 : f32 to vector<8x8xf32>
    %274 = arith.mulf %272, %273 : vector<8x8xf32>
    %cst_89 = arith.constant 0xFF800000 : f32
    %275 = vector.broadcast %cst_89 : f32 to vector<8x8xf32>
    %276 = arith.select %6, %274, %275 : vector<8x8xi1>, vector<8x8xf32>
    %cst_90 = arith.constant dense<0xFF800000> : vector<8xf32>
    %277 = vector.multi_reduction <maximumf>, %276, %cst_90 [1] : vector<8x8xf32> to vector<8xf32>
    %278 = vector.shape_cast %277 : vector<8xf32> to vector<8x1xf32>
    %279 = vector.broadcast %278 : vector<8x1xf32> to vector<8x8xf32>
    %280 = arith.subf %276, %279 : vector<8x8xf32>
    %281 = math.exp %280 : vector<8x8xf32>
    %cst_91 = arith.constant dense<0.000000e+00> : vector<8xf32>
    %282 = vector.multi_reduction <add>, %281, %cst_91 [1] : vector<8x8xf32> to vector<8xf32>
    %283 = vector.shape_cast %282 : vector<8xf32> to vector<8x1xf32>
    %284 = arith.truncf %281 : vector<8x8xf32> to vector<8x8xbf16>
    %cst_92 = arith.constant dense<0.000000e+00> : vector<8x16xf32>
    %285 = tpu.matmul %284, %259, %cst_92 {dimension_numbers = #tpu.dot_dimension_numbers<[1], [0], [0], [1], [0, 0, 1, 1], [], []>} : vector<8x8xbf16>, vector<8x16xbf16>, vector<8x16xf32> -> vector<8x16xf32>
    %286 = tpu.reciprocal %283 {approx = true} : vector<8x1xf32> -> vector<8x1xf32>
    %287 = vector.broadcast %286 : vector<8x1xf32> to vector<8x16xf32>
    %288 = arith.mulf %285, %287 : vector<8x16xf32>
    %289 = vector.extract_strided_slice %227 {offsets = [0, 16], sizes = [8, 16], strides = [1, 1]} : vector<8x64xf32> to vector<8x16xf32>
    %290 = vector.extract_strided_slice %289 {offsets = [0, 8], sizes = [8, 8], strides = [1, 1]} : vector<8x16xf32> to vector<8x8xf32>
    %cst_93 = arith.constant 0.000000e+00 : f32
    %291 = vector.broadcast %cst_93 : f32 to vector<8x8xf32>
    %292 = arith.subf %291, %290 : vector<8x8xf32>
    %293 = vector.extract_strided_slice %289 {offsets = [0, 0], sizes = [8, 8], strides = [1, 1]} : vector<8x16xf32> to vector<8x8xf32>
    %294 = tpu.concatenate %292, %293 in 1 : vector<8x8xf32>, vector<8x8xf32> -> vector<8x16xf32>
    %295 = arith.mulf %289, %2 : vector<8x16xf32>
    %296 = arith.mulf %294, %3 : vector<8x16xf32>
    %297 = arith.addf %295, %296 : vector<8x16xf32>
    %298 = arith.truncf %297 : vector<8x16xf32> to vector<8x16xbf16>
    "tpu.trace_start"() <{level = 10 : i32, message = "qd,kd->qk"}> : () -> ()
    %cst_94 = arith.constant dense<0.000000e+00> : vector<8x8xf32>
    %299 = tpu.matmul %298, %247, %cst_94 {dimension_numbers = #tpu.dot_dimension_numbers<[1], [1], [0], [0], [0, 0, 1, 0], [], []>} : vector<8x16xbf16>, vector<8x16xbf16>, vector<8x8xf32> -> vector<8x8xf32>
    "tpu.trace_stop"() : () -> ()
    %cst_95 = arith.constant 2.500000e-01 : f32
    %300 = vector.broadcast %cst_95 : f32 to vector<8x8xf32>
    %301 = arith.mulf %299, %300 : vector<8x8xf32>
    %cst_96 = arith.constant 0xFF800000 : f32
    %302 = vector.broadcast %cst_96 : f32 to vector<8x8xf32>
    %303 = arith.select %6, %301, %302 : vector<8x8xi1>, vector<8x8xf32>
    %cst_97 = arith.constant dense<0xFF800000> : vector<8xf32>
    %304 = vector.multi_reduction <maximumf>, %303, %cst_97 [1] : vector<8x8xf32> to vector<8xf32>
    %305 = vector.shape_cast %304 : vector<8xf32> to vector<8x1xf32>
    %306 = vector.broadcast %305 : vector<8x1xf32> to vector<8x8xf32>
    %307 = arith.subf %303, %306 : vector<8x8xf32>
    %308 = math.exp %307 : vector<8x8xf32>
    %cst_98 = arith.constant dense<0.000000e+00> : vector<8xf32>
    %309 = vector.multi_reduction <add>, %308, %cst_98 [1] : vector<8x8xf32> to vector<8xf32>
    %310 = vector.shape_cast %309 : vector<8xf32> to vector<8x1xf32>
    %311 = arith.truncf %308 : vector<8x8xf32> to vector<8x8xbf16>
    %cst_99 = arith.constant dense<0.000000e+00> : vector<8x16xf32>
    %312 = tpu.matmul %311, %259, %cst_99 {dimension_numbers = #tpu.dot_dimension_numbers<[1], [0], [0], [1], [0, 0, 1, 1], [], []>} : vector<8x8xbf16>, vector<8x16xbf16>, vector<8x16xf32> -> vector<8x16xf32>
    %313 = tpu.reciprocal %310 {approx = true} : vector<8x1xf32> -> vector<8x1xf32>
    %314 = vector.broadcast %313 : vector<8x1xf32> to vector<8x16xf32>
    %315 = arith.mulf %312, %314 : vector<8x16xf32>
    %316 = vector.extract_strided_slice %227 {offsets = [0, 32], sizes = [8, 16], strides = [1, 1]} : vector<8x64xf32> to vector<8x16xf32>
    %317 = vector.extract_strided_slice %316 {offsets = [0, 8], sizes = [8, 8], strides = [1, 1]} : vector<8x16xf32> to vector<8x8xf32>
    %cst_100 = arith.constant 0.000000e+00 : f32
    %318 = vector.broadcast %cst_100 : f32 to vector<8x8xf32>
    %319 = arith.subf %318, %317 : vector<8x8xf32>
    %320 = vector.extract_strided_slice %316 {offsets = [0, 0], sizes = [8, 8], strides = [1, 1]} : vector<8x16xf32> to vector<8x8xf32>
    %321 = tpu.concatenate %319, %320 in 1 : vector<8x8xf32>, vector<8x8xf32> -> vector<8x16xf32>
    %322 = arith.mulf %316, %2 : vector<8x16xf32>
    %323 = arith.mulf %321, %3 : vector<8x16xf32>
    %324 = arith.addf %322, %323 : vector<8x16xf32>
    %325 = arith.truncf %324 : vector<8x16xf32> to vector<8x16xbf16>
    "tpu.trace_start"() <{level = 10 : i32, message = "qd,kd->qk"}> : () -> ()
    %cst_101 = arith.constant dense<0.000000e+00> : vector<8x8xf32>
    %326 = tpu.matmul %325, %257, %cst_101 {dimension_numbers = #tpu.dot_dimension_numbers<[1], [1], [0], [0], [0, 0, 1, 0], [], []>} : vector<8x16xbf16>, vector<8x16xbf16>, vector<8x8xf32> -> vector<8x8xf32>
    "tpu.trace_stop"() : () -> ()
    %cst_102 = arith.constant 2.500000e-01 : f32
    %327 = vector.broadcast %cst_102 : f32 to vector<8x8xf32>
    %328 = arith.mulf %326, %327 : vector<8x8xf32>
    %cst_103 = arith.constant 0xFF800000 : f32
    %329 = vector.broadcast %cst_103 : f32 to vector<8x8xf32>
    %330 = arith.select %6, %328, %329 : vector<8x8xi1>, vector<8x8xf32>
    %cst_104 = arith.constant dense<0xFF800000> : vector<8xf32>
    %331 = vector.multi_reduction <maximumf>, %330, %cst_104 [1] : vector<8x8xf32> to vector<8xf32>
    %332 = vector.shape_cast %331 : vector<8xf32> to vector<8x1xf32>
    %333 = vector.broadcast %332 : vector<8x1xf32> to vector<8x8xf32>
    %334 = arith.subf %330, %333 : vector<8x8xf32>
    %335 = math.exp %334 : vector<8x8xf32>
    %cst_105 = arith.constant dense<0.000000e+00> : vector<8xf32>
    %336 = vector.multi_reduction <add>, %335, %cst_105 [1] : vector<8x8xf32> to vector<8xf32>
    %337 = vector.shape_cast %336 : vector<8xf32> to vector<8x1xf32>
    %338 = arith.truncf %335 : vector<8x8xf32> to vector<8x8xbf16>
    %cst_106 = arith.constant dense<0.000000e+00> : vector<8x16xf32>
    %339 = tpu.matmul %338, %261, %cst_106 {dimension_numbers = #tpu.dot_dimension_numbers<[1], [0], [0], [1], [0, 0, 1, 1], [], []>} : vector<8x8xbf16>, vector<8x16xbf16>, vector<8x16xf32> -> vector<8x16xf32>
    %340 = tpu.reciprocal %337 {approx = true} : vector<8x1xf32> -> vector<8x1xf32>
    %341 = vector.broadcast %340 : vector<8x1xf32> to vector<8x16xf32>
    %342 = arith.mulf %339, %341 : vector<8x16xf32>
    %343 = vector.extract_strided_slice %227 {offsets = [0, 48], sizes = [8, 16], strides = [1, 1]} : vector<8x64xf32> to vector<8x16xf32>
    %344 = vector.extract_strided_slice %343 {offsets = [0, 8], sizes = [8, 8], strides = [1, 1]} : vector<8x16xf32> to vector<8x8xf32>
    %cst_107 = arith.constant 0.000000e+00 : f32
    %345 = vector.broadcast %cst_107 : f32 to vector<8x8xf32>
    %346 = arith.subf %345, %344 : vector<8x8xf32>
    %347 = vector.extract_strided_slice %343 {offsets = [0, 0], sizes = [8, 8], strides = [1, 1]} : vector<8x16xf32> to vector<8x8xf32>
    %348 = tpu.concatenate %346, %347 in 1 : vector<8x8xf32>, vector<8x8xf32> -> vector<8x16xf32>
    %349 = arith.mulf %343, %2 : vector<8x16xf32>
    %350 = arith.mulf %348, %3 : vector<8x16xf32>
    %351 = arith.addf %349, %350 : vector<8x16xf32>
    %352 = arith.truncf %351 : vector<8x16xf32> to vector<8x16xbf16>
    "tpu.trace_start"() <{level = 10 : i32, message = "qd,kd->qk"}> : () -> ()
    %cst_108 = arith.constant dense<0.000000e+00> : vector<8x8xf32>
    %353 = tpu.matmul %352, %257, %cst_108 {dimension_numbers = #tpu.dot_dimension_numbers<[1], [1], [0], [0], [0, 0, 1, 0], [], []>} : vector<8x16xbf16>, vector<8x16xbf16>, vector<8x8xf32> -> vector<8x8xf32>
    "tpu.trace_stop"() : () -> ()
    %cst_109 = arith.constant 2.500000e-01 : f32
    %354 = vector.broadcast %cst_109 : f32 to vector<8x8xf32>
    %355 = arith.mulf %353, %354 : vector<8x8xf32>
    %cst_110 = arith.constant 0xFF800000 : f32
    %356 = vector.broadcast %cst_110 : f32 to vector<8x8xf32>
    %357 = arith.select %6, %355, %356 : vector<8x8xi1>, vector<8x8xf32>
    %cst_111 = arith.constant dense<0xFF800000> : vector<8xf32>
    %358 = vector.multi_reduction <maximumf>, %357, %cst_111 [1] : vector<8x8xf32> to vector<8xf32>
    %359 = vector.shape_cast %358 : vector<8xf32> to vector<8x1xf32>
    %360 = vector.broadcast %359 : vector<8x1xf32> to vector<8x8xf32>
    %361 = arith.subf %357, %360 : vector<8x8xf32>
    %362 = math.exp %361 : vector<8x8xf32>
    %cst_112 = arith.constant dense<0.000000e+00> : vector<8xf32>
    %363 = vector.multi_reduction <add>, %362, %cst_112 [1] : vector<8x8xf32> to vector<8xf32>
    %364 = vector.shape_cast %363 : vector<8xf32> to vector<8x1xf32>
    %365 = arith.truncf %362 : vector<8x8xf32> to vector<8x8xbf16>
    %cst_113 = arith.constant dense<0.000000e+00> : vector<8x16xf32>
    %366 = tpu.matmul %365, %261, %cst_113 {dimension_numbers = #tpu.dot_dimension_numbers<[1], [0], [0], [1], [0, 0, 1, 1], [], []>} : vector<8x8xbf16>, vector<8x16xbf16>, vector<8x16xf32> -> vector<8x16xf32>
    %367 = tpu.reciprocal %364 {approx = true} : vector<8x1xf32> -> vector<8x1xf32>
    %368 = vector.broadcast %367 : vector<8x1xf32> to vector<8x16xf32>
    %369 = arith.mulf %366, %368 : vector<8x16xf32>
    %370 = tpu.concatenate %288, %315, %342, %369 in 1 : vector<8x16xf32>, vector<8x16xf32>, vector<8x16xf32>, vector<8x16xf32> -> vector<8x64xf32>
    %371 = arith.truncf %370 : vector<8x64xf32> to vector<8x64xbf16>
    %c1_114 = arith.constant 1 : index
    %c0_115 = arith.constant 0 : index
    %c0_116 = arith.constant 0 : index
    %372 = vector.load %arg3[%c1_114, %c0_115, %c0_116] : memref<2x64x64xbf16, #tpu.memory_space<vmem>>, vector<1x64x64xbf16>
    %373 = vector.shape_cast %372 : vector<1x64x64xbf16> to vector<64x64xbf16>
    %cst_117 = arith.constant dense<0.000000e+00> : vector<8x64xf32>
    %374 = tpu.matmul %371, %373, %cst_117 {dimension_numbers = #tpu.dot_dimension_numbers<[1], [0], [0], [1], [0, 0, 1, 1], [], []>} : vector<8x64xbf16>, vector<64x64xbf16>, vector<8x64xf32> -> vector<8x64xf32>
    %375 = arith.addf %207, %374 : vector<8x64xf32>
    %c1_118 = arith.constant 1 : index
    %c0_119 = arith.constant 0 : index
    %c0_120 = arith.constant 0 : index
    %376 = vector.load %arg7[%c1_118, %c0_119, %c0_120] : memref<2x1x64xbf16, #tpu.memory_space<vmem>>, vector<1x1x64xbf16>
    %377 = vector.shape_cast %376 : vector<1x1x64xbf16> to vector<1x64xbf16>
    %378 = arith.mulf %375, %375 : vector<8x64xf32>
    %cst_121 = arith.constant dense<0.000000e+00> : vector<8xf32>
    %379 = vector.multi_reduction <add>, %378, %cst_121 [1] : vector<8x64xf32> to vector<8xf32>
    %380 = vector.shape_cast %379 : vector<8xf32> to vector<8x1xf32>
    %cst_122 = arith.constant 6.400000e+01 : f32
    %381 = vector.broadcast %cst_122 : f32 to vector<8x1xf32>
    %382 = arith.divf %380, %381 : vector<8x1xf32>
    %cst_123 = arith.constant 9.99999997E-7 : f32
    %383 = vector.broadcast %cst_123 : f32 to vector<8x1xf32>
    %384 = arith.addf %382, %383 : vector<8x1xf32>
    %385 = math.rsqrt %384 : vector<8x1xf32>
    %386 = vector.broadcast %385 : vector<8x1xf32> to vector<8x64xf32>
    %387 = arith.mulf %375, %386 : vector<8x64xf32>
    %388 = arith.extf %377 : vector<1x64xbf16> to vector<1x64xf32>
    %389 = vector.broadcast %388 : vector<1x64xf32> to vector<8x64xf32>
    %390 = arith.mulf %387, %389 : vector<8x64xf32>
    %391 = arith.truncf %390 : vector<8x64xf32> to vector<8x64xbf16>
    %c1_124 = arith.constant 1 : index
    %c0_125 = arith.constant 0 : index
    %c0_126 = arith.constant 0 : index
    %392 = vector.load %arg4[%c1_124, %c0_125, %c0_126] : memref<2x64x256xbf16, #tpu.memory_space<vmem>>, vector<1x64x256xbf16>
    %393 = vector.shape_cast %392 : vector<1x64x256xbf16> to vector<64x256xbf16>
    %cst_127 = arith.constant dense<0.000000e+00> : vector<8x256xf32>
    %394 = tpu.matmul %391, %393, %cst_127 {dimension_numbers = #tpu.dot_dimension_numbers<[1], [0], [0], [1], [0, 0, 1, 1], [], []>} : vector<8x64xbf16>, vector<64x256xbf16>, vector<8x256xf32> -> vector<8x256xf32>
    %395 = vector.extract_strided_slice %394 {offsets = [0, 0], sizes = [8, 128], strides = [1, 1]} : vector<8x256xf32> to vector<8x128xf32>
    %396 = vector.extract_strided_slice %394 {offsets = [0, 128], sizes = [8, 128], strides = [1, 1]} : vector<8x256xf32> to vector<8x128xf32>
    %397 = arith.negf %395 : vector<8x128xf32>
    %398 = math.exp %397 : vector<8x128xf32>
    %cst_128 = arith.constant 1.000000e+00 : f32
    %399 = vector.broadcast %cst_128 : f32 to vector<8x128xf32>
    %400 = arith.addf %399, %398 : vector<8x128xf32>
    %401 = arith.divf %399, %400 : vector<8x128xf32>
    %402 = arith.mulf %395, %401 : vector<8x128xf32>
    %403 = arith.mulf %402, %396 : vector<8x128xf32>
    %404 = arith.truncf %403 : vector<8x128xf32> to vector<8x128xbf16>
    %c1_129 = arith.constant 1 : index
    %c0_130 = arith.constant 0 : index
    %c0_131 = arith.constant 0 : index
    %405 = vector.load %arg5[%c1_129, %c0_130, %c0_131] : memref<2x128x64xbf16, #tpu.memory_space<vmem>>, vector<1x128x64xbf16>
    %406 = vector.shape_cast %405 : vector<1x128x64xbf16> to vector<128x64xbf16>
    %cst_132 = arith.constant dense<0.000000e+00> : vector<8x64xf32>
    %407 = tpu.matmul %404, %406, %cst_132 {dimension_numbers = #tpu.dot_dimension_numbers<[1], [0], [0], [1], [0, 0, 1, 1], [], []>} : vector<8x128xbf16>, vector<128x64xbf16>, vector<8x64xf32> -> vector<8x64xf32>
    %408 = arith.addf %375, %407 : vector<8x64xf32>
    %c0_133 = arith.constant 0 : index
    %c0_134 = arith.constant 0 : index
    %409 = vector.load %arg8[%c0_133, %c0_134] : memref<1x64xbf16, #tpu.memory_space<vmem>>, vector<1x64xbf16>
    %410 = arith.mulf %408, %408 : vector<8x64xf32>
    %cst_135 = arith.constant dense<0.000000e+00> : vector<8xf32>
    %411 = vector.multi_reduction <add>, %410, %cst_135 [1] : vector<8x64xf32> to vector<8xf32>
    %412 = vector.shape_cast %411 : vector<8xf32> to vector<8x1xf32>
    %cst_136 = arith.constant 6.400000e+01 : f32
    %413 = vector.broadcast %cst_136 : f32 to vector<8x1xf32>
    %414 = arith.divf %412, %413 : vector<8x1xf32>
    %cst_137 = arith.constant 9.99999997E-7 : f32
    %415 = vector.broadcast %cst_137 : f32 to vector<8x1xf32>
    %416 = arith.addf %414, %415 : vector<8x1xf32>
    %417 = math.rsqrt %416 : vector<8x1xf32>
    %418 = vector.broadcast %417 : vector<8x1xf32> to vector<8x64xf32>
    %419 = arith.mulf %408, %418 : vector<8x64xf32>
    %420 = arith.extf %409 : vector<1x64xbf16> to vector<1x64xf32>
    %421 = vector.broadcast %420 : vector<1x64xf32> to vector<8x64xf32>
    %422 = arith.mulf %419, %421 : vector<8x64xf32>
    %423 = vector.extract_strided_slice %422 {offsets = [7, 0], sizes = [1, 64], strides = [1, 1]} : vector<8x64xf32> to vector<1x64xf32>
    %424 = arith.truncf %423 : vector<1x64xf32> to vector<1x64xbf16>
    %c0_138 = arith.constant 0 : index
    %c0_139 = arith.constant 0 : index
    %425 = vector.load %arg17[%c0_138, %c0_139] : memref<1x64xbf16, #tpu.memory_space<vmem>>, vector<1x64xbf16>
    tpu.vector_store %arg17[%c0_138, %c0_139], %424 {strides = array<i32>} : memref<1x64xbf16, #tpu.memory_space<vmem>>, vector<1x64xbf16>,
    %c0_140 = arith.constant 0 : index
    %c0_141 = arith.constant 0 : index
    %426 = vector.load %arg11[%c0_140, %c0_141] : memref<64x128xbf16, #tpu.memory_space<vmem>>, vector<64x128xbf16>
    %cst_142 = arith.constant dense<0.000000e+00> : vector<1x128xf32>
    %427 = tpu.matmul %424, %426, %cst_142 {dimension_numbers = #tpu.dot_dimension_numbers<[1], [0], [0], [1], [0, 0, 1, 1], [], []>} : vector<1x64xbf16>, vector<64x128xbf16>, vector<1x128xf32> -> vector<1x128xf32>
    %c0_143 = arith.constant 0 : index
    %c0_144 = arith.constant 0 : index
    %428 = vector.load %arg18[%c0_143, %c0_144] : memref<1x128xf32, #tpu.memory_space<vmem>>, vector<1x128xf32>
    tpu.vector_store %arg18[%c0_143, %c0_144], %427 {strides = array<i32>} : memref<1x128xf32, #tpu.memory_space<vmem>>, vector<1x128xf32>,
    %c0_145 = arith.constant 0 : index
    %c0_146 = arith.constant 0 : index
    %429 = vector.load %arg14[%c0_145, %c0_146] : memref<1x8xf32, #tpu.memory_space<vmem>>, vector<1x8xf32>
    %430 = vector.extract_strided_slice %429 {offsets = [0, 0], sizes = [1, 1], strides = [1, 1]} : vector<1x8xf32> to vector<1x1xf32>
    %431 = vector.extract_strided_slice %429 {offsets = [0, 1], sizes = [1, 1], strides = [1, 1]} : vector<1x8xf32> to vector<1x1xf32>
    %432 = arith.extf %424 : vector<1x64xbf16> to vector<1x64xf32>
    %c0_147 = arith.constant 0 : index
    %c0_148 = arith.constant 0 : index
    %433 = vector.load %arg12[%c0_147, %c0_148] : memref<1x64xbf16, #tpu.memory_space<vmem>>, vector<1x64xbf16>
    %434 = arith.extf %433 : vector<1x64xbf16> to vector<1x64xf32>
    %435 = arith.mulf %432, %434 : vector<1x64xf32>
    %cst_149 = arith.constant dense<0.000000e+00> : vector<1xf32>
    %436 = vector.multi_reduction <add>, %435, %cst_149 [1] : vector<1x64xf32> to vector<1xf32>
    %437 = vector.shape_cast %436 : vector<1xf32> to vector<1x1xf32>
    %438 = arith.addf %437, %431 : vector<1x1xf32>
    %cst_150 = arith.constant 0.000000e+00 : f32
    %439 = vector.broadcast %cst_150 : f32 to vector<1x1xf32>
    %440 = arith.subf %439, %438 : vector<1x1xf32>
    %cst_151 = arith.constant 0.000000e+00 : f32
    %441 = vector.broadcast %cst_151 : f32 to vector<1x1xf32>
    %442 = arith.maximumf %440, %441 : vector<1x1xf32>
    %443 = math.absf %438 : vector<1x1xf32>
    %cst_152 = arith.constant 0.000000e+00 : f32
    %444 = vector.broadcast %cst_152 : f32 to vector<1x1xf32>
    %445 = arith.subf %444, %443 : vector<1x1xf32>
    %446 = math.exp %445 : vector<1x1xf32>
    %cst_153 = arith.constant 1.000000e+00 : f32
    %447 = vector.broadcast %cst_153 : f32 to vector<1x1xf32>
    %448 = arith.addf %447, %446 : vector<1x1xf32>
    %449 = math.log %448 : vector<1x1xf32>
    %450 = arith.addf %442, %449 : vector<1x1xf32>
    %451 = arith.negf %438 : vector<1x1xf32>
    %452 = math.exp %451 : vector<1x1xf32>
    %cst_154 = arith.constant 1.000000e+00 : f32
    %453 = vector.broadcast %cst_154 : f32 to vector<1x1xf32>
    %454 = arith.addf %453, %452 : vector<1x1xf32>
    %455 = arith.divf %453, %454 : vector<1x1xf32>
    %456 = arith.cmpf ogt, %455, %430 : vector<1x1xf32>
    %457 = arith.addf %438, %450 : vector<1x1xf32>
    %458 = arith.select %456, %450, %457 : vector<1x1xi1>, vector<1x1xf32>
    %cst_155 = arith.constant dense<0xFF800000> : vector<1xf32>
    %459 = vector.multi_reduction <maximumf>, %427, %cst_155 [1] : vector<1x128xf32> to vector<1xf32>
    %460 = vector.shape_cast %459 : vector<1xf32> to vector<1x1xf32>
    %461 = vector.broadcast %460 : vector<1x1xf32> to vector<1x128xf32>
    %462 = arith.subf %427, %461 : vector<1x128xf32>
    %463 = math.exp %462 : vector<1x128xf32>
    %cst_156 = arith.constant dense<0.000000e+00> : vector<1xf32>
    %464 = vector.multi_reduction <add>, %463, %cst_156 [1] : vector<1x128xf32> to vector<1xf32>
    %465 = vector.shape_cast %464 : vector<1xf32> to vector<1x1xf32>
    %466 = math.log %465 : vector<1x1xf32>
    %467 = arith.addf %460, %466 : vector<1x1xf32>
    %468 = vector.broadcast %467 : vector<1x1xf32> to vector<1x128xf32>
    %469 = arith.subf %468, %427 : vector<1x128xf32>
    %c0_157 = arith.constant 0 : index
    %c0_158 = arith.constant 0 : index
    %470 = vector.load %arg13[%c0_157, %c0_158] : memref<1x128xf32, #tpu.memory_space<vmem>>, vector<1x128xf32>
    %471 = arith.mulf %469, %470 : vector<1x128xf32>
    %cst_159 = arith.constant dense<0.000000e+00> : vector<1xf32>
    %472 = vector.multi_reduction <add>, %471, %cst_159 [1] : vector<1x128xf32> to vector<1xf32>
    %473 = vector.shape_cast %472 : vector<1xf32> to vector<1x1xf32>
    %474 = arith.extui %456 : vector<1x1xi1> to vector<1x1xi32>
    %475 = arith.sitofp %474 : vector<1x1xi32> to vector<1x1xf32>
    %cst_160 = arith.constant 0.000000e+00 : f32
    %476 = vector.broadcast %cst_160 : f32 to vector<1x2xf32>
    %477 = tpu.concatenate %458, %475, %473, %438, %455, %450, %476 in 1 : vector<1x1xf32>, vector<1x1xf32>, vector<1x1xf32>, vector<1x1xf32>, vector<1x1xf32>, vector<1x1xf32>, vector<1x2xf32> -> vector<1x8xf32>
    %c0_161 = arith.constant 0 : index
    %c0_162 = arith.constant 0 : index
    %478 = vector.load %arg19[%c0_161, %c0_162] : memref<1x8xf32, #tpu.memory_space<vmem>>, vector<1x8xf32>
    tpu.vector_store %arg19[%c0_161, %c0_162], %477 {strides = array<i32>} : memref<1x8xf32, #tpu.memory_space<vmem>>, vector<1x8xf32>,
    return
  }
  func.func @transform_0(%arg0: i32) -> (i32, i32) {
    %c0_i32 = arith.constant 0 : i32
    %c0_i32_0 = arith.constant 0 : i32
    %c0_i32_1 = arith.constant 0 : i32
    return %c0_i32, %c0_i32_0 : i32, i32
  }
  func.func @transform_1(%arg0: i32) -> (i32, i32, i32) {
    %c0_i32 = arith.constant 0 : i32
    %c0_i32_0 = arith.constant 0 : i32
    %c0_i32_1 = arith.constant 0 : i32
    %c0_i32_2 = arith.constant 0 : i32
    return %c0_i32, %c0_i32_0, %c0_i32_1 : i32, i32, i32
  }
  func.func @transform_2(%arg0: i32) -> (i32, i32, i32) {
    %c0_i32 = arith.constant 0 : i32
    %c0_i32_0 = arith.constant 0 : i32
    %c0_i32_1 = arith.constant 0 : i32
    %c0_i32_2 = arith.constant 0 : i32
    return %c0_i32, %c0_i32_0, %c0_i32_1 : i32, i32, i32
  }
  func.func @transform_3(%arg0: i32) -> (i32, i32, i32) {
    %c0_i32 = arith.constant 0 : i32
    %c0_i32_0 = arith.constant 0 : i32
    %c0_i32_1 = arith.constant 0 : i32
    %c0_i32_2 = arith.constant 0 : i32
    return %c0_i32, %c0_i32_0, %c0_i32_1 : i32, i32, i32
  }
  func.func @transform_4(%arg0: i32) -> (i32, i32, i32) {
    %c0_i32 = arith.constant 0 : i32
    %c0_i32_0 = arith.constant 0 : i32
    %c0_i32_1 = arith.constant 0 : i32
    %c0_i32_2 = arith.constant 0 : i32
    return %c0_i32, %c0_i32_0, %c0_i32_1 : i32, i32, i32
  }
  func.func @transform_5(%arg0: i32) -> (i32, i32, i32) {
    %c0_i32 = arith.constant 0 : i32
    %c0_i32_0 = arith.constant 0 : i32
    %c0_i32_1 = arith.constant 0 : i32
    %c0_i32_2 = arith.constant 0 : i32
    return %c0_i32, %c0_i32_0, %c0_i32_1 : i32, i32, i32
  }
  func.func @transform_6(%arg0: i32) -> (i32, i32, i32) {
    %c0_i32 = arith.constant 0 : i32
    %c0_i32_0 = arith.constant 0 : i32
    %c0_i32_1 = arith.constant 0 : i32
    %c0_i32_2 = arith.constant 0 : i32
    return %c0_i32, %c0_i32_0, %c0_i32_1 : i32, i32, i32
  }
  func.func @transform_7(%arg0: i32) -> (i32, i32) {
    %c0_i32 = arith.constant 0 : i32
    %c0_i32_0 = arith.constant 0 : i32
    %c0_i32_1 = arith.constant 0 : i32
    return %c0_i32, %c0_i32_0 : i32, i32
  }
  func.func @transform_8(%arg0: i32) -> (i32, i32) {
    %c0_i32 = arith.constant 0 : i32
    %c0_i32_0 = arith.constant 0 : i32
    %c0_i32_1 = arith.constant 0 : i32
    return %c0_i32, %c0_i32_0 : i32, i32
  }
  func.func @transform_9(%arg0: i32) -> (i32, i32) {
    %c0_i32 = arith.constant 0 : i32
    %c0_i32_0 = arith.constant 0 : i32
    %c0_i32_1 = arith.constant 0 : i32
    return %c0_i32, %c0_i32_0 : i32, i32
  }
  func.func @transform_10(%arg0: i32) -> (i32, i32) {
    %c0_i32 = arith.constant 0 : i32
    %c0_i32_0 = arith.constant 0 : i32
    %c0_i32_1 = arith.constant 0 : i32
    return %c0_i32, %c0_i32_0 : i32, i32
  }
  func.func @transform_11(%arg0: i32) -> (i32, i32) {
    %c0_i32 = arith.constant 0 : i32
    %c0_i32_0 = arith.constant 0 : i32
    %c0_i32_1 = arith.constant 0 : i32
    return %c0_i32, %c0_i32_0 : i32, i32
  }
  func.func @transform_12(%arg0: i32) -> (i32, i32) {
    %c0_i32 = arith.constant 0 : i32
    %c0_i32_0 = arith.constant 0 : i32
    %c0_i32_1 = arith.constant 0 : i32
    return %c0_i32, %c0_i32_0 : i32, i32
  }
  func.func @transform_13(%arg0: i32) -> (i32, i32) {
    %c0_i32 = arith.constant 0 : i32
    %c0_i32_0 = arith.constant 0 : i32
    %c0_i32_1 = arith.constant 0 : i32
    return %c0_i32, %c0_i32_0 : i32, i32
  }
  func.func @transform_14(%arg0: i32) -> (i32, i32, i32) {
    %c0_i32 = arith.constant 0 : i32
    %c0_i32_0 = arith.constant 0 : i32
    %c0_i32_1 = arith.constant 0 : i32
    %c0_i32_2 = arith.constant 0 : i32
    return %c0_i32, %c0_i32_0, %c0_i32_1 : i32, i32, i32
  }
  func.func @transform_15(%arg0: i32) -> (i32, i32, i32) {
    %c0_i32 = arith.constant 0 : i32
    %c0_i32_0 = arith.constant 0 : i32
    %c0_i32_1 = arith.constant 0 : i32
    %c0_i32_2 = arith.constant 0 : i32
    return %c0_i32, %c0_i32_0, %c0_i32_1 : i32, i32, i32
  }
  func.func @transform_16(%arg0: i32) -> (i32, i32) {
    %c0_i32 = arith.constant 0 : i32
    %c0_i32_0 = arith.constant 0 : i32
    %c0_i32_1 = arith.constant 0 : i32
    return %c0_i32, %c0_i32_0 : i32, i32
  }
  func.func @transform_17(%arg0: i32) -> (i32, i32) {
    %c0_i32 = arith.constant 0 : i32
    %c0_i32_0 = arith.constant 0 : i32
    %c0_i32_1 = arith.constant 0 : i32
    return %c0_i32, %c0_i32_0 : i32, i32
  }
  func.func @transform_18(%arg0: i32) -> (i32, i32) {
    %c0_i32 = arith.constant 0 : i32
    %c0_i32_0 = arith.constant 0 : i32
    %c0_i32_1 = arith.constant 0 : i32
    return %c0_i32, %c0_i32_0 : i32, i32
  }
}

</mosaic_0001>

<llo_original>
// kernel: squeeze.10
$region0: #{squeeze.10}
  %s0 = inlined_call_operand.vmem [shape: bf16[1,8,32], index: 0, kind: input, shape index: {}]
  %s1 = inlined_call_operand.vmem [shape: bf16[8,2,16], index: 1, kind: output, shape index: {}]
  $region1: #{squeeze.10} parent=0
    #allocation0 [shape = 'u8[32768]{0}', space=vmem, size = 0x8000, scoped, tag = 'scoped mem for output reshape']
    #allocation1 [shape = 'u8[4096]{0}', space=vmem, size = 0x1000, scoped, tag = 'scoped mem for input reshape']
    %s3 = smul.u32 4, 2
    %s4 = sshllo.u32 0, %s3
    %s5 = sshrl.u32 %s4, 1
    %s6 = sor.u32 %s4, %s5
    %s7 = sand.u32 %s6, 85
    %s8 = sshrl.u32 %s7, 1
    %s9 = sor.u32 %s7, %s8
    %s10 = sand.u32 51, %s9
    %s11 = sshrl.u32 %s10, 2
    %s12 = sor.u32 %s10, %s11
    %s13 = sand.u32 15, %s12
    %v14 = vld [vmem:[%s0] sm:%s13]
    %v15 = vunpack.c.l.bf16 %v14
    %v16 = vunpack.c.h.bf16 %v14
    %17 = vst [vmem:[#allocation1] sm:%s4] %v15
    %v18 = vld [vmem:[#allocation1] sm:$0xff]
    %vm19 = vcmask 130048
    %20 = vst.msk [vmem:[#allocation0] ss:$8 sm:$0xf] %vm19, %v18
    %21 = vst.msk [vmem:[#allocation0] ss:$8 sm:$0xf0] %vm19, %v18
    %v22 = vld [vmem:[#allocation1] sm:$0xff]
    %23 = vrot.lane.b32.xlu0 %v22, 112
    %v24 = vpop.permute.xlu0 %23
    %vm25 = vcmask 130048
    %s26 = scalar_lea.vmem [#allocation0], 1
    %27 = vst.msk [vmem:[%s26] ss:$8 sm:$0xf] %vm25, %v24
    %s28 = scalar_lea.vmem [#allocation0], 1
    %29 = vst.msk [vmem:[%s28] ss:$8 sm:$0xf0] %vm25, %v24
    %s31 = smul.u32 1, 2
    %s32 = sshllo.u32 0, %s31
    %s33 = sshrl.u32 %s31, 1
    %v34 = vld [vmem:[#allocation0] sm:%s32]
    %v35 = vpack.c.bf16 0.0, %v34
    %s36 = sshllo.u32 0, %s33
    %37 = vst [vmem:[%s1] sm:%s36] %v35
    %s38 = scalar_lea.vmem [#allocation0], 8
    %v39 = vld [vmem:[%s38] sm:%s32]
    %v40 = vpack.c.bf16 0.0, %v39
    %s41 = sshllo.u32 0, %s33
    %s42 = scalar_lea.vmem %s1, 1
    %43 = vst [vmem:[%s42] sm:%s41] %v40
    %s44 = scalar_lea.vmem [#allocation0], 16
    %v45 = vld [vmem:[%s44] sm:%s32]
    %v46 = vpack.c.bf16 0.0, %v45
    %s47 = sshllo.u32 0, %s33
    %s48 = smul.addr 1, 2
    %s49 = scalar_lea.vmem %s1, %s48
    %50 = vst [vmem:[%s49] sm:%s47] %v46
    %s51 = scalar_lea.vmem [#allocation0], 24
    %v52 = vld [vmem:[%s51] sm:%s32]
    %v53 = vpack.c.bf16 0.0, %v52
    %s54 = sshllo.u32 0, %s33
    %s55 = smul.addr 1, 3
    %s56 = scalar_lea.vmem %s1, %s55
    %57 = vst [vmem:[%s56] sm:%s54] %v53
    %s58 = scalar_lea.vmem [#allocation0], 32
    %v59 = vld [vmem:[%s58] sm:%s32]
    %v60 = vpack.c.bf16 0.0, %v59
    %s61 = sshllo.u32 0, %s33
    %s62 = smul.addr 1, 4
    %s63 = scalar_lea.vmem %s1, %s62
    %64 = vst [vmem:[%s63] sm:%s61] %v60
    %s65 = scalar_lea.vmem [#allocation0], 40
    %v66 = vld [vmem:[%s65] sm:%s32]
    %v67 = vpack.c.bf16 0.0, %v66
    %s68 = sshllo.u32 0, %s33
    %s69 = smul.addr 1, 5
    %s70 = scalar_lea.vmem %s1, %s69
    %71 = vst [vmem:[%s70] sm:%s68] %v67
    %s72 = scalar_lea.vmem [#allocation0], 48
    %v73 = vld [vmem:[%s72] sm:%s32]
    %v74 = vpack.c.bf16 0.0, %v73
    %s75 = sshllo.u32 0, %s33
    %s76 = smul.addr 1, 6
    %s77 = scalar_lea.vmem %s1, %s76
    %78 = vst [vmem:[%s77] sm:%s75] %v74
    %s79 = scalar_lea.vmem [#allocation0], 56
    %v80 = vld [vmem:[%s79] sm:%s32]
    %v81 = vpack.c.bf16 0.0, %v80
    %s82 = sshllo.u32 0, %s33
    %s83 = smul.addr 1, 7
    %s84 = scalar_lea.vmem %s1, %s83
    %85 = vst [vmem:[%s84] sm:%s82] %v81

// kernel: _forward_device.1
$region0: #{_forward_device.1}
  #allocation0 [shape = 'u32[]', space=smem, size = 0x4, offset = 0x4, fixed_abs, tag = 'smem constant byte address 0x4 - core index']
  #allocation1 [shape = 'u32[144,128]{1,0:T(1,128)}', space=vmem, size = 0x12000, scoped, tag = 'internal scratch']
  %s0 = inlined_call_operand.vmem [shape: bf16[8,64], index: 0, kind: input, shape index: {}]
  %s1 = inlined_call_operand.vmem [shape: bf16[2,64,128], index: 1, kind: input, shape index: {}]
  %s2 = inlined_call_operand.hbm [shape: bf16[2,64,64], index: 2, kind: input, shape index: {}]
  %s3 = inlined_call_operand.vmem [shape: bf16[2,64,256], index: 3, kind: input, shape index: {}]
  %s4 = inlined_call_operand.vmem [shape: bf16[2,128,64], index: 4, kind: input, shape index: {}]
  %s5 = inlined_call_operand.vmem [shape: bf16[2,1,64], index: 5, kind: input, shape index: {}]
  %s6 = inlined_call_operand.vmem [shape: bf16[2,1,64], index: 6, kind: input, shape index: {}]
  %s7 = inlined_call_operand.vmem [shape: bf16[1,64], index: 7, kind: input, shape index: {}]
  %s8 = inlined_call_operand.vmem [shape: f32[8,16], index: 8, kind: input, shape index: {}]
  %s9 = inlined_call_operand.vmem [shape: f32[8,16], index: 9, kind: input, shape index: {}]
  %s10 = inlined_call_operand.vmem [shape: bf16[64,128], index: 10, kind: input, shape index: {}]
  %s11 = inlined_call_operand.vmem [shape: bf16[1,64], index: 11, kind: input, shape index: {}]
  %s12 = inlined_call_operand.vmem [shape: f32[1,128], index: 12, kind: input, shape index: {}]
  %s13 = inlined_call_operand.vmem [shape: f32[1,8], index: 13, kind: input, shape index: {}]
  %s14 = inlined_call_operand.vmem [shape: bf16[2,8,32], index: 14, kind: output, shape index: {0}]
  %s15 = inlined_call_operand.vmem [shape: bf16[2,8,32], index: 15, kind: output, shape index: {1}]
  %s16 = inlined_call_operand.hbm [shape: bf16[1,64], index: 16, kind: output, shape index: {2}]
  %s17 = inlined_call_operand.hbm [shape: f32[1,128], index: 17, kind: output, shape index: {3}]
  %s18 = inlined_call_operand.vmem [shape: f32[1,8], index: 18, kind: output, shape index: {4}]
  %19 = xla_tuple %s14, %s15, %s16, %s17, %s18
  %s20 = sld [smem:[#allocation0]]
  $region102: #{_forward_device.1} parent=0
    _
  %s22 = ssub.s32 1, %s20
  %s23 = scalar_select 0, %s22, %s20
  $region1: #{_forward_device.1} parent=0
    #allocation2 [shape = 'u8[32768]{0}', space=vmem, size = 0x8000, scoped, tag = 'input window, operand 2, single buffered']
    #allocation3 [shape = 's32[1]{0}', space=sflag, size = 0x4, scoped, tag = 'scoped memory for _forward_device.1']
    #allocation4 [shape = 's32[1]{0}', space=sflag, size = 0x4, scoped, tag = 'scoped memory for _forward_device.1']
    #allocation5 [shape = 'u8[512]{0}', space=vmem, size = 0x400, scoped, tag = 'output window, operand 2, single buffered']
    #allocation6 [shape = 'u8[512]{0}', space=vmem, size = 0x400, scoped, tag = 'output window, operand 3, single buffered']
    #allocation7 [shape = 's32[1]{0}', space=sflag, size = 0x4, scoped, tag = 'scoped memory for _forward_device.1']
    %24 = vsyncpa [#allocation3], 0
    %25 = vsyncpa [#allocation4], 0
    %26 = vsyncpa [#allocation7], 0
    // Predicated region
    $region2: #{_forward_device.1} parent=1 // pred_check
      _
    $region3: #{_forward_device.1} parent=1 // pred_check_branch
      %28 = sbr.rel (0) target = $region5
    $region4: #{_forward_device.1} parent=1 // pred_region
      _
    $region5: #{_forward_device.1} parent=1 // pred_fallthru
      _
    // Predicated region
    $region6: #{_forward_device.1} parent=1 // pred_check
      _
    $region7: #{_forward_device.1} parent=1 // pred_check_branch
      %30 = sbr.rel (0) target = $region9
    $region8: #{_forward_device.1} parent=1 // pred_region
      _
    $region9: #{_forward_device.1} parent=1 // pred_fallthru
      _
    // Predicated region
    $region10: #{_forward_device.1} parent=1 // pred_check
      _
    $region11: #{_forward_device.1} parent=1 // pred_check_branch
      %32 = sbr.rel (0) target = $region13
    $region12: #{_forward_device.1} parent=1 // pred_region
      %s34 = ssub.s32 1024, 1024
      %35 = vsyncadd [#allocation3], %s34
      %s36 = sshll.u32 [#allocation2], 4
      %s37 = int_to_ptr.vmem [resolvable:$true] %s36
      %42 = dma.hbm_to_vmem [thread:$0]  %s2, 1024, %s37, [#allocation3], 64, 64, 4
    $region13: #{_forward_device.1} parent=1 // pred_fallthru
      _
    // Predicated region
    $region14: #{_forward_device.1} parent=1 // pred_check
      _
    $region15: #{_forward_device.1} parent=1 // pred_check_branch
      %44 = sbr.rel (0) target = $region17
    $region16: #{_forward_device.1} parent=1 // pred_region
      _
    $region17: #{_forward_device.1} parent=1 // pred_fallthru
      _
    // Predicated region
    $region18: #{_forward_device.1} parent=1 // pred_check
      _
    $region19: #{_forward_device.1} parent=1 // pred_check_branch
      %46 = sbr.rel (0) target = $region21
    $region20: #{_forward_device.1} parent=1 // pred_region
      _
    $region21: #{_forward_device.1} parent=1 // pred_fallthru
      _
    // Predicated region
    $region22: #{_forward_device.1} parent=1 // pred_check
      _
    $region23: #{_forward_device.1} parent=1 // pred_check_branch
      %48 = sbr.rel (0) target = $region25
    $region24: #{_forward_device.1} parent=1 // pred_region
      _
    $region25: #{_forward_device.1} parent=1 // pred_fallthru
      _
    // Predicated region
    $region26: #{_forward_device.1} parent=1 // pred_check
      _
    $region27: #{_forward_device.1} parent=1 // pred_check_branch
      %50 = sbr.rel (0) target = $region29
    $region28: #{_forward_device.1} parent=1 // pred_region
      _
    $region29: #{_forward_device.1} parent=1 // pred_fallthru
      _
    // Predicated region
    $region30: #{_forward_device.1} parent=1 // pred_check
      _
    $region31: #{_forward_device.1} parent=1 // pred_check_branch
      %52 = sbr.rel (0) target = $region33
    $region32: #{_forward_device.1} parent=1 // pred_region
      _
    $region33: #{_forward_device.1} parent=1 // pred_fallthru
      _
    // Predicated region
    $region34: #{_forward_device.1} parent=1 // pred_check
      _
    $region35: #{_forward_device.1} parent=1 // pred_check_branch
      %54 = sbr.rel (0) target = $region37
    $region36: #{_forward_device.1} parent=1 // pred_region
      _
    $region37: #{_forward_device.1} parent=1 // pred_fallthru
      _
    // Predicated region
    $region38: #{_forward_device.1} parent=1 // pred_check
      _
    $region39: #{_forward_device.1} parent=1 // pred_check_branch
      %56 = sbr.rel (0) target = $region41
    $region40: #{_forward_device.1} parent=1 // pred_region
      _
    $region41: #{_forward_device.1} parent=1 // pred_fallthru
      _
    // Predicated region
    $region42: #{_forward_device.1} parent=1 // pred_check
      _
    $region43: #{_forward_device.1} parent=1 // pred_check_branch
      %58 = sbr.rel (0) target = $region45
    $region44: #{_forward_device.1} parent=1 // pred_region
      _
    $region45: #{_forward_device.1} parent=1 // pred_fallthru
      _
    // Predicated region
    $region46: #{_forward_device.1} parent=1 // pred_check
      _
    $region47: #{_forward_device.1} parent=1 // pred_check_branch
      %60 = sbr.rel (0) target = $region49
    $region48: #{_forward_device.1} parent=1 // pred_region
      _
    $region49: #{_forward_device.1} parent=1 // pred_fallthru
      _
    // Predicated region
    $region50: #{_forward_device.1} parent=1 // pred_check
      _
    $region51: #{_forward_device.1} parent=1 // pred_check_branch
      %62 = sbr.rel (0) target = $region53
    $region52: #{_forward_device.1} parent=1 // pred_region
      _
    $region53: #{_forward_device.1} parent=1 // pred_fallthru
      _
    // Predicated region
    $region54: #{_forward_device.1} parent=1 // pred_check
      _
    $region55: #{_forward_device.1} parent=1 // pred_check_branch
      %64 = sbr.rel (0) target = $region57
    $region56: #{_forward_device.1} parent=1 // pred_region
      _
    $region57: #{_forward_device.1} parent=1 // pred_fallthru
      _
    // Predicated region
    $region58: #{_forward_device.1} parent=1 // pred_check
      _
    $region59: #{_forward_device.1} parent=1 // pred_check_branch
      %66 = sbr.rel (0) target = $region61
    $region60: #{_forward_device.1} parent=1 // pred_region
      %67 = dma.done [#allocation3], 1024
    $region61: #{_forward_device.1} parent=1 // pred_fallthru
      _
    %v69 = vld [vmem:[%s0] sm:$0xf]
    %v70 = vunpack.c.l.bf16 %v69
    %v71 = vld [vmem:[%s8] sm:$0xff]
    %v72 = vld [vmem:[%s9] sm:$0xff]
    %v73 = vlaneseq
    %v74 = vshrl.u32 %v73, 7
    %v75 = vlaneseq
    %v76 = vand.u32 %v75, 127
    %vm77 = vcmp.le.s32.totalorder %v76, %v74
    %v78 = vld [vmem:[%s5] sm:$0x1]
    %v79 = vmul.f32 %v70, %v70
    %vm80 = vcmask 523264
    %v81 = vsel %vm80, %v79, 0.0
    %82 = vadd.xlane.f32.xlu0 %v81
    %v83 = vpop.xlane.xlu0 %82
    %v84 = vrcp.pop 64.0
    %v85 = vmul.f32 %v83, %v84
    %v86 = vadd.f32 %v85, 1e-06
    %v87 = vrsqrt.pop %v86
    %v88 = vmul.f32 %v70, %v87
    %v89 = vunpack.c.l.bf16 %v78
    %v90 = vlaneseq
    %v91 = vshrl.u32 %v90, 7
    %v92 = vsub.s32 0, %v91
    %v93 = vrot.slane %v89, %v92
    %v94 = vmul.f32 %v88, %v93
    %v95 = vpack.c.bf16 %v94, %v94
    %v96 = vld [vmem:[%s1] sm:$0xf]
    %v97 = vld [vmem:[%s1 + $0x4] sm:$0xf]
    %v98 = vld [vmem:[%s1 + $0x8] sm:$0xf]
    %v99 = vld [vmem:[%s1 + $0xc] sm:$0xf]
    %v100 = vld [vmem:[%s1 + $0x10] sm:$0xf]
    %v101 = vld [vmem:[%s1 + $0x14] sm:$0xf]
    %v102 = vld [vmem:[%s1 + $0x18] sm:$0xf]
    %v103 = vld [vmem:[%s1 + $0x1c] sm:$0xf]
    %v112 = vunpack.c.l.b16 %v96
    %v113 = vunpack.c.l.b16 %v97
    %v114 = vunpack.c.l.b16 %v98
    %v115 = vunpack.c.l.b16 %v99
    %v116 = vunpack.c.l.b16 %v100
    %v117 = vunpack.c.l.b16 %v101
    %v118 = vunpack.c.l.b16 %v102
    %v119 = vunpack.c.l.b16 %v103
    %v120 = vpack.c.b16 %v113, %v112
    %v121 = vpack.c.b16 %v115, %v114
    %v122 = vpack.c.b16 %v117, %v116
    %v123 = vpack.c.b16 %v119, %v118
    %v129 = vsel %vm80, %v95, 0
    %131 = vmatprep.subr.bf16.mxu0 0
    %132 = vmatpush1.bf16.msra.mxu0 %v120
    %133 = vmatprep.subr.bf16.mxu0 0
    %134 = vmatpush1.bf16.msra.mxu0 %v121
    %135 = vmatprep.subr.bf16.mxu0 0
    %136 = vmatpush1.bf16.msra.mxu0 %v122
    %137 = vmatprep.subr.bf16.mxu0 0
    %138 = vmatpush1.bf16.msra.mxu0 %v123
    %139 = vmatprep.subr.bf16.mxu0 0
    %140 = vmatpush1.bf16.msra.mxu0 0
    %141 = vmatprep.subr.bf16.mxu0 0
    %142 = vmatpush1.bf16.msra.mxu0 0
    %143 = vmatprep.subr.bf16.mxu0 0
    %144 = vmatpush1.bf16.msra.mxu0 0
    %145 = vmatprep.subr.bf16.mxu0 0
    %146 = vmatpush1.bf16.msra.mxu0 0
    %147 = vmatprep.subr.bf16.mxu0 0
    %148 = vmatpush1.bf16.msra.mxu0 0
    %149 = vmatprep.subr.bf16.mxu0 0
    %150 = vmatpush1.bf16.msra.mxu0 0
    %151 = vmatprep.subr.bf16.mxu0 0
    %152 = vmatpush1.bf16.msra.mxu0 0
    %153 = vmatprep.subr.bf16.mxu0 0
    %154 = vmatpush1.bf16.msra.mxu0 0
    %155 = vmatprep.subr.bf16.mxu0 0
    %156 = vmatpush1.bf16.msra.mxu0 0
    %157 = vmatprep.subr.bf16.mxu0 0
    %158 = vmatpush1.bf16.msra.mxu0 0
    %159 = vmatprep.subr.bf16.mxu0 0
    %160 = vmatpush1.bf16.msra.mxu0 0
    %161 = vmatprep.subr.bf16.mxu0 0
    %162 = vmatpush1.bf16.msra.mxu0 0
    %163 = vmatprep.mubr.bf16.mxu0 0
    %164 = vmatmul.mubr.bf16.gmra.mrb[0].mxu0 %v129
    %v165 = vpop.f32.mrb[0].mxu0
    %v166 = vadd.f32 0.0, %v165
    %v167 = vpop.f32.mrb[0].mxu0
    %v168 = vpop.f32.mrb[0].mxu0
    %v169 = vpop.f32.mrb[0].mxu0
    %170 = vdwg.mxu0
    %v171 = vpack.c.bf16 %v166, %v166
    %v173 = vunpack.c.l.b16 %v171
    %v174 = vpack.c.b16 %v173, %v173
    %175 = vrot.lane.b32.xlu0 %v174, 64
    %v176 = vpop.permute.xlu0 %175
    %vm178 = vcmask 257024
    %179 = vst.msk [vmem:[%s14] sm:$0xf] %vm178, %v176
    %180 = vrot.lane.b32.xlu0 %v174, 32
    %v181 = vpop.permute.xlu0 %180
    %183 = vst.msk [vmem:[%s15] sm:$0xf] %vm178, %v181
    %v184 = vsub.f32 0.0, %v166
    %186 = vrot.lane.b32.xlu0 %v184, 56
    %v187 = vpop.permute.xlu0 %186
    %190 = vrot.lane.b32.xlu0 %v166, 72
    %v191 = vpop.permute.xlu0 %190
    %vm193 = vcmask 64512
    %v194 = vsel %vm193, %v187, %v191
    %196 = vrot.lane.b32.xlu0 %v71, 64
    %v197 = vpop.permute.xlu0 %196
    %v199 = vmul.f32 %v166, %v197
    %v200 = vmul.f32 %v194, %v72
    %202 = vrot.lane.b32.xlu0 %v200, 64
    %v203 = vpop.permute.xlu0 %202
    %v205 = vadd.f32 %v199, %v203
    %v206 = vpack.c.bf16 %v205, %v205
    %207 = vrot.lane.b32.xlu0 %v184, 40
    %v208 = vpop.permute.xlu0 %207
    %210 = vrot.lane.b32.xlu0 %v166, 56
    %v211 = vpop.permute.xlu0 %210
    %v213 = vsel %vm193, %v208, %v211
    %214 = vrot.lane.b32.xlu0 %v71, 80
    %v215 = vpop.permute.xlu0 %214
    %v217 = vmul.f32 %v166, %v215
    %v218 = vmul.f32 %v213, %v72
    %220 = vrot.lane.b32.xlu0 %v218, 80
    %v221 = vpop.permute.xlu0 %220
    %v223 = vadd.f32 %v217, %v221
    %v224 = vpack.c.bf16 %v223, %v223
    %225 = vrot.lane.b32.xlu0 %v184, 120
    %v226 = vpop.permute.xlu0 %225
    %228 = vrot.lane.b32.xlu0 %v166, 8
    %v229 = vpop.permute.xlu0 %228
    %v231 = vsel %vm193, %v226, %v229
    %v232 = vmul.f32 %v166, %v71
    %v233 = vmul.f32 %v231, %v72
    %v234 = vadd.f32 %v232, %v233
    %v235 = vpack.c.bf16 %v234, %v234
    %237 = vrot.lane.b32.xlu0 %v206, 64
    %v238 = vpop.permute.xlu0 %237
    %vm239 = vcmask 130048
    %v241 = vsel %vm239, %v235, 0
    %v244 = vsel %vm239, %v238, 0
    %246 = vmatprep.subr.bf16.mxu0 0
    %247 = vmatpush1.bf16.xpose.msra.mxu0 %v244
    %248 = vmatprep.subr.bf16.mxu0 0
    %249 = vmatpush1.bf16.xpose.msra.mxu0 0
    %250 = vmatprep.subr.bf16.mxu0 0
    %251 = vmatpush1.bf16.xpose.msra.mxu0 0
    %252 = vmatprep.subr.bf16.mxu0 0
    %253 = vmatpush1.bf16.xpose.msra.mxu0 0
    %254 = vmatprep.subr.bf16.mxu0 0
    %255 = vmatpush1.bf16.xpose.msra.mxu0 0
    %256 = vmatprep.subr.bf16.mxu0 0
    %257 = vmatpush1.bf16.xpose.msra.mxu0 0
    %258 = vmatprep.subr.bf16.mxu0 0
    %259 = vmatpush1.bf16.xpose.msra.mxu0 0
    %260 = vmatprep.subr.bf16.mxu0 0
    %261 = vmatpush1.bf16.xpose.msra.mxu0 0
    %262 = vmatprep.subr.bf16.mxu0 0
    %263 = vmatpush1.bf16.xpose.msra.mxu0 0
    %264 = vmatprep.subr.bf16.mxu0 0
    %265 = vmatpush1.bf16.xpose.msra.mxu0 0
    %266 = vmatprep.subr.bf16.mxu0 0
    %267 = vmatpush1.bf16.xpose.msra.mxu0 0
    %268 = vmatprep.subr.bf16.mxu0 0
    %269 = vmatpush1.bf16.xpose.msra.mxu0 0
    %270 = vmatprep.subr.bf16.mxu0 0
    %271 = vmatpush1.bf16.xpose.msra.mxu0 0
    %272 = vmatprep.subr.bf16.mxu0 0
    %273 = vmatpush1.bf16.xpose.msra.mxu0 0
    %274 = vmatprep.subr.bf16.mxu0 0
    %275 = vmatpush1.bf16.xpose.msra.mxu0 0
    %276 = vmatprep.subr.bf16.mxu0 0
    %277 = vmatpush1.bf16.xpose.msra.mxu0 0
    %278 = vmatprep.mubr.bf16.mxu0 0
    %279 = vmatmul.mubr.bf16.gmra.mrb[0].mxu0 %v241
    %v280 = vpop.f32.mrb[0].mxu0
    %v281 = vadd.f32 0.0, %v280
    %v282 = vpop.f32.mrb[0].mxu0
    %v283 = vpop.f32.mrb[0].mxu0
    %v284 = vpop.f32.mrb[0].mxu0
    %285 = vdwg.mxu0
    %v286 = vmul.f32 %v281, 0.25
    %v287 = vsel %vm77, %v286, -inf
    %v288 = vsel %vm193, %v287, -inf
    %289 = vmax.xlane.f32.xlu0 %v288
    %v290 = vpop.xlane.xlu0 %289
    %v291 = vsub.f32 %v287, %v290
    %v292 = vmul.f32 %v291, 1.442695
    %v293 = vpow.pop %v292
    %v294 = vsel %vm193, %v293, 0.0
    %295 = vadd.xlane.f32.xlu0 %v294
    %v296 = vpop.xlane.xlu0 %295
    %v297 = vpack.c.bf16 %v293, %v293
    %298 = vrot.lane.b32.xlu0 %v171, 32
    %v299 = vpop.permute.xlu0 %298
    %v301 = vsel %vm193, %v297, 0
    %vm303 = vcmask 1043456
    %v305 = vsel %vm303, %v299, 0
    %307 = vmatprep.subr.bf16.mxu0 0
    %308 = vmatpush1.bf16.msra.mxu0 %v305
    %309 = vmatprep.subr.bf16.mxu0 0
    %310 = vmatpush1.bf16.msra.mxu0 0
    %311 = vmatprep.subr.bf16.mxu0 0
    %312 = vmatpush1.bf16.msra.mxu0 0
    %313 = vmatprep.subr.bf16.mxu0 0
    %314 = vmatpush1.bf16.msra.mxu0 0
    %315 = vmatprep.subr.bf16.mxu0 0
    %316 = vmatpush1.bf16.msra.mxu0 0
    %317 = vmatprep.subr.bf16.mxu0 0
    %318 = vmatpush1.bf16.msra.mxu0 0
    %319 = vmatprep.subr.bf16.mxu0 0
    %320 = vmatpush1.bf16.msra.mxu0 0
    %321 = vmatprep.subr.bf16.mxu0 0
    %322 = vmatpush1.bf16.msra.mxu0 0
    %323 = vmatprep.subr.bf16.mxu0 0
    %324 = vmatpush1.bf16.msra.mxu0 0
    %325 = vmatprep.subr.bf16.mxu0 0
    %326 = vmatpush1.bf16.msra.mxu0 0
    %327 = vmatprep.subr.bf16.mxu0 0
    %328 = vmatpush1.bf16.msra.mxu0 0
    %329 = vmatprep.subr.bf16.mxu0 0
    %330 = vmatpush1.bf16.msra.mxu0 0
    %331 = vmatprep.subr.bf16.mxu0 0
    %332 = vmatpush1.bf16.msra.mxu0 0
    %333 = vmatprep.subr.bf16.mxu0 0
    %334 = vmatpush1.bf16.msra.mxu0 0
    %335 = vmatprep.subr.bf16.mxu0 0
    %336 = vmatpush1.bf16.msra.mxu0 0
    %337 = vmatprep.subr.bf16.mxu0 0
    %338 = vmatpush1.bf16.msra.mxu0 0
    %339 = vmatprep.mubr.bf16.mxu0 0
    %340 = vmatmul.mubr.bf16.gmra.mrb[0].mxu0 %v301
    %v341 = vpop.f32.mrb[0].mxu0
    %v342 = vadd.f32 0.0, %v341
    %v343 = vpop.f32.mrb[0].mxu0
    %v344 = vpop.f32.mrb[0].mxu0
    %v345 = vpop.f32.mrb[0].mxu0
    %346 = vdwg.mxu0
    %v347 = vrcp.pop %v296
    %v348 = vmul.f32 %v342, %v347
    %349 = vrot.lane.b32.xlu0 %v184, 104
    %v350 = vpop.permute.xlu0 %349
    %352 = vrot.lane.b32.xlu0 %v166, 120
    %v353 = vpop.permute.xlu0 %352
    %v355 = vsel %vm193, %v350, %v353
    %356 = vrot.lane.b32.xlu0 %v71, 16
    %v357 = vpop.permute.xlu0 %356
    %v359 = vmul.f32 %v166, %v357
    %v360 = vmul.f32 %v355, %v72
    %362 = vrot.lane.b32.xlu0 %v360, 16
    %v363 = vpop.permute.xlu0 %362
    %v365 = vadd.f32 %v359, %v363
    %v366 = vpack.c.bf16 %v365, %v365
    %368 = vrot.lane.b32.xlu0 %v366, 112
    %v369 = vpop.permute.xlu0 %368
    %v371 = vsel %vm239, %v369, 0
    %373 = vmatprep.subr.bf16.mxu0 0
    %374 = vmatpush1.bf16.xpose.msra.mxu0 %v244
    %375 = vmatprep.subr.bf16.mxu0 0
    %376 = vmatpush1.bf16.xpose.msra.mxu0 0
    %377 = vmatprep.subr.bf16.mxu0 0
    %378 = vmatpush1.bf16.xpose.msra.mxu0 0
    %379 = vmatprep.subr.bf16.mxu0 0
    %380 = vmatpush1.bf16.xpose.msra.mxu0 0
    %381 = vmatprep.subr.bf16.mxu0 0
    %382 = vmatpush1.bf16.xpose.msra.mxu0 0
    %383 = vmatprep.subr.bf16.mxu0 0
    %384 = vmatpush1.bf16.xpose.msra.mxu0 0
    %385 = vmatprep.subr.bf16.mxu0 0
    %386 = vmatpush1.bf16.xpose.msra.mxu0 0
    %387 = vmatprep.subr.bf16.mxu0 0
    %388 = vmatpush1.bf16.xpose.msra.mxu0 0
    %389 = vmatprep.subr.bf16.mxu0 0
    %390 = vmatpush1.bf16.xpose.msra.mxu0 0
    %391 = vmatprep.subr.bf16.mxu0 0
    %392 = vmatpush1.bf16.xpose.msra.mxu0 0
    %393 = vmatprep.subr.bf16.mxu0 0
    %394 = vmatpush1.bf16.xpose.msra.mxu0 0
    %395 = vmatprep.subr.bf16.mxu0 0
    %396 = vmatpush1.bf16.xpose.msra.mxu0 0
    %397 = vmatprep.subr.bf16.mxu0 0
    %398 = vmatpush1.bf16.xpose.msra.mxu0 0
    %399 = vmatprep.subr.bf16.mxu0 0
    %400 = vmatpush1.bf16.xpose.msra.mxu0 0
    %401 = vmatprep.subr.bf16.mxu0 0
    %402 = vmatpush1.bf16.xpose.msra.mxu0 0
    %403 = vmatprep.subr.bf16.mxu0 0
    %404 = vmatpush1.bf16.xpose.msra.mxu0 0
    %405 = vmatprep.mubr.bf16.mxu0 0
    %406 = vmatmul.mubr.bf16.gmra.mrb[0].mxu0 %v371
    %v407 = vpop.f32.mrb[0].mxu0
    %v408 = vadd.f32 0.0, %v407
    %v409 = vpop.f32.mrb[0].mxu0
    %v410 = vpop.f32.mrb[0].mxu0
    %v411 = vpop.f32.mrb[0].mxu0
    %412 = vdwg.mxu0
    %v413 = vmul.f32 %v408, 0.25
    %v414 = vsel %vm77, %v413, -inf
    %v415 = vsel %vm193, %v414, -inf
    %416 = vmax.xlane.f32.xlu0 %v415
    %v417 = vpop.xlane.xlu0 %416
    %v418 = vsub.f32 %v414, %v417
    %v419 = vmul.f32 %v418, 1.442695
    %v420 = vpow.pop %v419
    %v421 = vsel %vm193, %v420, 0.0
    %422 = vadd.xlane.f32.xlu0 %v421
    %v423 = vpop.xlane.xlu0 %422
    %v424 = vpack.c.bf16 %v420, %v420
    %v426 = vsel %vm193, %v424, 0
    %428 = vmatprep.subr.bf16.mxu0 0
    %429 = vmatpush1.bf16.msra.mxu0 %v305
    %430 = vmatprep.subr.bf16.mxu0 0
    %431 = vmatpush1.bf16.msra.mxu0 0
    %432 = vmatprep.subr.bf16.mxu0 0
    %433 = vmatpush1.bf16.msra.mxu0 0
    %434 = vmatprep.subr.bf16.mxu0 0
    %435 = vmatpush1.bf16.msra.mxu0 0
    %436 = vmatprep.subr.bf16.mxu0 0
    %437 = vmatpush1.bf16.msra.mxu0 0
    %438 = vmatprep.subr.bf16.mxu0 0
    %439 = vmatpush1.bf16.msra.mxu0 0
    %440 = vmatprep.subr.bf16.mxu0 0
    %441 = vmatpush1.bf16.msra.mxu0 0
    %442 = vmatprep.subr.bf16.mxu0 0
    %443 = vmatpush1.bf16.msra.mxu0 0
    %444 = vmatprep.subr.bf16.mxu0 0
    %445 = vmatpush1.bf16.msra.mxu0 0
    %446 = vmatprep.subr.bf16.mxu0 0
    %447 = vmatpush1.bf16.msra.mxu0 0
    %448 = vmatprep.subr.bf16.mxu0 0
    %449 = vmatpush1.bf16.msra.mxu0 0
    %450 = vmatprep.subr.bf16.mxu0 0
    %451 = vmatpush1.bf16.msra.mxu0 0
    %452 = vmatprep.subr.bf16.mxu0 0
    %453 = vmatpush1.bf16.msra.mxu0 0
    %454 = vmatprep.subr.bf16.mxu0 0
    %455 = vmatpush1.bf16.msra.mxu0 0
    %456 = vmatprep.subr.bf16.mxu0 0
    %457 = vmatpush1.bf16.msra.mxu0 0
    %458 = vmatprep.subr.bf16.mxu0 0
    %459 = vmatpush1.bf16.msra.mxu0 0
    %460 = vmatprep.mubr.bf16.mxu0 0
    %461 = vmatmul.mubr.bf16.gmra.mrb[0].mxu0 %v426
    %v462 = vpop.f32.mrb[0].mxu0
    %v463 = vadd.f32 0.0, %v462
    %v464 = vpop.f32.mrb[0].mxu0
    %v465 = vpop.f32.mrb[0].mxu0
    %v466 = vpop.f32.mrb[0].mxu0
    %467 = vdwg.mxu0
    %v468 = vrcp.pop %v423
    %v469 = vmul.f32 %v463, %v468
    %470 = vrot.lane.b32.xlu0 %v184, 88
    %v471 = vpop.permute.xlu0 %470
    %473 = vrot.lane.b32.xlu0 %v166, 104
    %v474 = vpop.permute.xlu0 %473
    %v476 = vsel %vm193, %v471, %v474
    %477 = vrot.lane.b32.xlu0 %v71, 32
    %v478 = vpop.permute.xlu0 %477
    %v480 = vmul.f32 %v166, %v478
    %v481 = vmul.f32 %v476, %v72
    %483 = vrot.lane.b32.xlu0 %v481, 32
    %v484 = vpop.permute.xlu0 %483
    %v486 = vadd.f32 %v480, %v484
    %v487 = vpack.c.bf16 %v486, %v486
    %489 = vrot.lane.b32.xlu0 %v487, 96
    %v490 = vpop.permute.xlu0 %489
    %492 = vrot.lane.b32.xlu0 %v224, 48
    %v493 = vpop.permute.xlu0 %492
    %v495 = vsel %vm239, %v490, 0
    %v498 = vsel %vm239, %v493, 0
    %500 = vmatprep.subr.bf16.mxu0 0
    %501 = vmatpush1.bf16.xpose.msra.mxu0 %v498
    %502 = vmatprep.subr.bf16.mxu0 0
    %503 = vmatpush1.bf16.xpose.msra.mxu0 0
    %504 = vmatprep.subr.bf16.mxu0 0
    %505 = vmatpush1.bf16.xpose.msra.mxu0 0
    %506 = vmatprep.subr.bf16.mxu0 0
    %507 = vmatpush1.bf16.xpose.msra.mxu0 0
    %508 = vmatprep.subr.bf16.mxu0 0
    %509 = vmatpush1.bf16.xpose.msra.mxu0 0
    %510 = vmatprep.subr.bf16.mxu0 0
    %511 = vmatpush1.bf16.xpose.msra.mxu0 0
    %512 = vmatprep.subr.bf16.mxu0 0
    %513 = vmatpush1.bf16.xpose.msra.mxu0 0
    %514 = vmatprep.subr.bf16.mxu0 0
    %515 = vmatpush1.bf16.xpose.msra.mxu0 0
    %516 = vmatprep.subr.bf16.mxu0 0
    %517 = vmatpush1.bf16.xpose.msra.mxu0 0
    %518 = vmatprep.subr.bf16.mxu0 0
    %519 = vmatpush1.bf16.xpose.msra.mxu0 0
    %520 = vmatprep.subr.bf16.mxu0 0
    %521 = vmatpush1.bf16.xpose.msra.mxu0 0
    %522 = vmatprep.subr.bf16.mxu0 0
    %523 = vmatpush1.bf16.xpose.msra.mxu0 0
    %524 = vmatprep.subr.bf16.mxu0 0
    %525 = vmatpush1.bf16.xpose.msra.mxu0 0
    %526 = vmatprep.subr.bf16.mxu0 0
    %527 = vmatpush1.bf16.xpose.msra.mxu0 0
    %528 = vmatprep.subr.bf16.mxu0 0
    %529 = vmatpush1.bf16.xpose.msra.mxu0 0
    %530 = vmatprep.subr.bf16.mxu0 0
    %531 = vmatpush1.bf16.xpose.msra.mxu0 0
    %532 = vmatprep.mubr.bf16.mxu0 0
    %533 = vmatmul.mubr.bf16.gmra.mrb[0].mxu0 %v495
    %v534 = vpop.f32.mrb[0].mxu0
    %v535 = vadd.f32 0.0, %v534
    %v536 = vpop.f32.mrb[0].mxu0
    %v537 = vpop.f32.mrb[0].mxu0
    %v538 = vpop.f32.mrb[0].mxu0
    %539 = vdwg.mxu0
    %v540 = vmul.f32 %v535, 0.25
    %v541 = vsel %vm77, %v540, -inf
    %v542 = vsel %vm193, %v541, -inf
    %543 = vmax.xlane.f32.xlu0 %v542
    %v544 = vpop.xlane.xlu0 %543
    %v545 = vsub.f32 %v541, %v544
    %v546 = vmul.f32 %v545, 1.442695
    %v547 = vpow.pop %v546
    %v548 = vsel %vm193, %v547, 0.0
    %549 = vadd.xlane.f32.xlu0 %v548
    %v550 = vpop.xlane.xlu0 %549
    %v551 = vpack.c.bf16 %v547, %v547
    %552 = vrot.lane.b32.xlu0 %v171, 16
    %v553 = vpop.permute.xlu0 %552
    %v555 = vsel %vm193, %v551, 0
    %v558 = vsel %vm303, %v553, 0
    %560 = vmatprep.subr.bf16.mxu0 0
    %561 = vmatpush1.bf16.msra.mxu0 %v558
    %562 = vmatprep.subr.bf16.mxu0 0
    %563 = vmatpush1.bf16.msra.mxu0 0
    %564 = vmatprep.subr.bf16.mxu0 0
    %565 = vmatpush1.bf16.msra.mxu0 0
    %566 = vmatprep.subr.bf16.mxu0 0
    %567 = vmatpush1.bf16.msra.mxu0 0
    %568 = vmatprep.subr.bf16.mxu0 0
    %569 = vmatpush1.bf16.msra.mxu0 0
    %570 = vmatprep.subr.bf16.mxu0 0
    %571 = vmatpush1.bf16.msra.mxu0 0
    %572 = vmatprep.subr.bf16.mxu0 0
    %573 = vmatpush1.bf16.msra.mxu0 0
    %574 = vmatprep.subr.bf16.mxu0 0
    %575 = vmatpush1.bf16.msra.mxu0 0
    %576 = vmatprep.subr.bf16.mxu0 0
    %577 = vmatpush1.bf16.msra.mxu0 0
    %578 = vmatprep.subr.bf16.mxu0 0
    %579 = vmatpush1.bf16.msra.mxu0 0
    %580 = vmatprep.subr.bf16.mxu0 0
    %581 = vmatpush1.bf16.msra.mxu0 0
    %582 = vmatprep.subr.bf16.mxu0 0
    %583 = vmatpush1.bf16.msra.mxu0 0
    %584 = vmatprep.subr.bf16.mxu0 0
    %585 = vmatpush1.bf16.msra.mxu0 0
    %586 = vmatprep.subr.bf16.mxu0 0
    %587 = vmatpush1.bf16.msra.mxu0 0
    %588 = vmatprep.subr.bf16.mxu0 0
    %589 = vmatpush1.bf16.msra.mxu0 0
    %590 = vmatprep.subr.bf16.mxu0 0
    %591 = vmatpush1.bf16.msra.mxu0 0
    %592 = vmatprep.mubr.bf16.mxu0 0
    %593 = vmatmul.mubr.bf16.gmra.mrb[0].mxu0 %v555
    %v594 = vpop.f32.mrb[0].mxu0
    %v595 = vadd.f32 0.0, %v594
    %v596 = vpop.f32.mrb[0].mxu0
    %v597 = vpop.f32.mrb[0].mxu0
    %v598 = vpop.f32.mrb[0].mxu0
    %599 = vdwg.mxu0
    %v600 = vrcp.pop %v550
    %v601 = vmul.f32 %v595, %v600
    %602 = vrot.lane.b32.xlu0 %v184, 72
    %v603 = vpop.permute.xlu0 %602
    %605 = vrot.lane.b32.xlu0 %v166, 88
    %v606 = vpop.permute.xlu0 %605
    %v608 = vsel %vm193, %v603, %v606
    %609 = vrot.lane.b32.xlu0 %v71, 48
    %v610 = vpop.permute.xlu0 %609
    %v612 = vmul.f32 %v166, %v610
    %v613 = vmul.f32 %v608, %v72
    %615 = vrot.lane.b32.xlu0 %v613, 48
    %v616 = vpop.permute.xlu0 %615
    %v618 = vadd.f32 %v612, %v616
    %v619 = vpack.c.bf16 %v618, %v618
    %621 = vrot.lane.b32.xlu0 %v619, 80
    %v622 = vpop.permute.xlu0 %621
    %v624 = vsel %vm239, %v622, 0
    %626 = vmatprep.subr.bf16.mxu0 0
    %627 = vmatpush1.bf16.xpose.msra.mxu0 %v498
    %628 = vmatprep.subr.bf16.mxu0 0
    %629 = vmatpush1.bf16.xpose.msra.mxu0 0
    %630 = vmatprep.subr.bf16.mxu0 0
    %631 = vmatpush1.bf16.xpose.msra.mxu0 0
    %632 = vmatprep.subr.bf16.mxu0 0
    %633 = vmatpush1.bf16.xpose.msra.mxu0 0
    %634 = vmatprep.subr.bf16.mxu0 0
    %635 = vmatpush1.bf16.xpose.msra.mxu0 0
    %636 = vmatprep.subr.bf16.mxu0 0
    %637 = vmatpush1.bf16.xpose.msra.mxu0 0
    %638 = vmatprep.subr.bf16.mxu0 0
    %639 = vmatpush1.bf16.xpose.msra.mxu0 0
    %640 = vmatprep.subr.bf16.mxu0 0
    %641 = vmatpush1.bf16.xpose.msra.mxu0 0
    %642 = vmatprep.subr.bf16.mxu0 0
    %643 = vmatpush1.bf16.xpose.msra.mxu0 0
    %644 = vmatprep.subr.bf16.mxu0 0
    %645 = vmatpush1.bf16.xpose.msra.mxu0 0
    %646 = vmatprep.subr.bf16.mxu0 0
    %647 = vmatpush1.bf16.xpose.msra.mxu0 0
    %648 = vmatprep.subr.bf16.mxu0 0
    %649 = vmatpush1.bf16.xpose.msra.mxu0 0
    %650 = vmatprep.subr.bf16.mxu0 0
    %651 = vmatpush1.bf16.xpose.msra.mxu0 0
    %652 = vmatprep.subr.bf16.mxu0 0
    %653 = vmatpush1.bf16.xpose.msra.mxu0 0
    %654 = vmatprep.subr.bf16.mxu0 0
    %655 = vmatpush1.bf16.xpose.msra.mxu0 0
    %656 = vmatprep.subr.bf16.mxu0 0
    %657 = vmatpush1.bf16.xpose.msra.mxu0 0
    %658 = vmatprep.mubr.bf16.mxu0 0
    %659 = vmatmul.mubr.bf16.gmra.mrb[0].mxu0 %v624
    %v660 = vpop.f32.mrb[0].mxu0
    %v661 = vadd.f32 0.0, %v660
    %v662 = vpop.f32.mrb[0].mxu0
    %v663 = vpop.f32.mrb[0].mxu0
    %v664 = vpop.f32.mrb[0].mxu0
    %665 = vdwg.mxu0
    %v666 = vmul.f32 %v661, 0.25
    %v667 = vsel %vm77, %v666, -inf
    %v668 = vsel %vm193, %v667, -inf
    %669 = vmax.xlane.f32.xlu0 %v668
    %v670 = vpop.xlane.xlu0 %669
    %v671 = vsub.f32 %v667, %v670
    %v672 = vmul.f32 %v671, 1.442695
    %v673 = vpow.pop %v672
    %v674 = vsel %vm193, %v673, 0.0
    %675 = vadd.xlane.f32.xlu0 %v674
    %v676 = vpop.xlane.xlu0 %675
    %v677 = vpack.c.bf16 %v673, %v673
    %v679 = vsel %vm193, %v677, 0
    %681 = vmatprep.subr.bf16.mxu0 0
    %682 = vmatpush1.bf16.msra.mxu0 %v558
    %683 = vmatprep.subr.bf16.mxu0 0
    %684 = vmatpush1.bf16.msra.mxu0 0
    %685 = vmatprep.subr.bf16.mxu0 0
    %686 = vmatpush1.bf16.msra.mxu0 0
    %687 = vmatprep.subr.bf16.mxu0 0
    %688 = vmatpush1.bf16.msra.mxu0 0
    %689 = vmatprep.subr.bf16.mxu0 0
    %690 = vmatpush1.bf16.msra.mxu0 0
    %691 = vmatprep.subr.bf16.mxu0 0
    %692 = vmatpush1.bf16.msra.mxu0 0
    %693 = vmatprep.subr.bf16.mxu0 0
    %694 = vmatpush1.bf16.msra.mxu0 0
    %695 = vmatprep.subr.bf16.mxu0 0
    %696 = vmatpush1.bf16.msra.mxu0 0
    %697 = vmatprep.subr.bf16.mxu0 0
    %698 = vmatpush1.bf16.msra.mxu0 0
    %699 = vmatprep.subr.bf16.mxu0 0
    %700 = vmatpush1.bf16.msra.mxu0 0
    %701 = vmatprep.subr.bf16.mxu0 0
    %702 = vmatpush1.bf16.msra.mxu0 0
    %703 = vmatprep.subr.bf16.mxu0 0
    %704 = vmatpush1.bf16.msra.mxu0 0
    %705 = vmatprep.subr.bf16.mxu0 0
    %706 = vmatpush1.bf16.msra.mxu0 0
    %707 = vmatprep.subr.bf16.mxu0 0
    %708 = vmatpush1.bf16.msra.mxu0 0
    %709 = vmatprep.subr.bf16.mxu0 0
    %710 = vmatpush1.bf16.msra.mxu0 0
    %711 = vmatprep.subr.bf16.mxu0 0
    %712 = vmatpush1.bf16.msra.mxu0 0
    %713 = vmatprep.mubr.bf16.mxu0 0
    %714 = vmatmul.mubr.bf16.gmra.mrb[0].mxu0 %v679
    %v715 = vpop.f32.mrb[0].mxu0
    %v716 = vadd.f32 0.0, %v715
    %v717 = vpop.f32.mrb[0].mxu0
    %v718 = vpop.f32.mrb[0].mxu0
    %v719 = vpop.f32.mrb[0].mxu0
    %720 = vdwg.mxu0
    %v721 = vrcp.pop %v676
    %v722 = vmul.f32 %v716, %v721
    %724 = vrot.lane.b32.xlu0 %v469, 16
    %v725 = vpop.permute.xlu0 %724
    %728 = vrot.lane.b32.xlu0 %v601, 32
    %v729 = vpop.permute.xlu0 %728
    %732 = vrot.lane.b32.xlu0 %v722, 48
    %v733 = vpop.permute.xlu0 %732
    %v735 = vsel %vm239, %v348, %v725
    %vm736 = vcmask 261120
    %v737 = vsel %vm736, %v735, %v729
    %vm738 = vcmask 392192
    %v739 = vsel %vm738, %v737, %v733
    %v740 = vpack.c.bf16 %v739, %v739
    %v741 = vld [vmem:[#allocation2] sm:$0xf]
    %v742 = vld [vmem:[#allocation2 + $0x4] sm:$0xf]
    %v743 = vld [vmem:[#allocation2 + $0x8] sm:$0xf]
    %v744 = vld [vmem:[#allocation2 + $0xc] sm:$0xf]
    %v745 = vld [vmem:[#allocation2 + $0x10] sm:$0xf]
    %v746 = vld [vmem:[#allocation2 + $0x14] sm:$0xf]
    %v747 = vld [vmem:[#allocation2 + $0x18] sm:$0xf]
    %v748 = vld [vmem:[#allocation2 + $0x1c] sm:$0xf]
    %v757 = vunpack.c.l.b16 %v741
    %v758 = vunpack.c.l.b16 %v742
    %v759 = vunpack.c.l.b16 %v743
    %v760 = vunpack.c.l.b16 %v744
    %v761 = vunpack.c.l.b16 %v745
    %v762 = vunpack.c.l.b16 %v746
    %v763 = vunpack.c.l.b16 %v747
    %v764 = vunpack.c.l.b16 %v748
    %v765 = vpack.c.b16 %v758, %v757
    %v766 = vpack.c.b16 %v760, %v759
    %v767 = vpack.c.b16 %v762, %v761
    %v768 = vpack.c.b16 %v764, %v763
    %v774 = vsel %vm80, %v740, 0
    %776 = vmatprep.subr.bf16.mxu0 0
    %777 = vmatpush1.bf16.msra.mxu0 %v765
    %778 = vmatprep.subr.bf16.mxu0 0
    %779 = vmatpush1.bf16.msra.mxu0 %v766
    %780 = vmatprep.subr.bf16.mxu0 0
    %781 = vmatpush1.bf16.msra.mxu0 %v767
    %782 = vmatprep.subr.bf16.mxu0 0
    %783 = vmatpush1.bf16.msra.mxu0 %v768
    %784 = vmatprep.subr.bf16.mxu0 0
    %785 = vmatpush1.bf16.msra.mxu0 0
    %786 = vmatprep.subr.bf16.mxu0 0
    %787 = vmatpush1.bf16.msra.mxu0 0
    %788 = vmatprep.subr.bf16.mxu0 0
    %789 = vmatpush1.bf16.msra.mxu0 0
    %790 = vmatprep.subr.bf16.mxu0 0
    %791 = vmatpush1.bf16.msra.mxu0 0
    %792 = vmatprep.subr.bf16.mxu0 0
    %793 = vmatpush1.bf16.msra.mxu0 0
    %794 = vmatprep.subr.bf16.mxu0 0
    %795 = vmatpush1.bf16.msra.mxu0 0
    %796 = vmatprep.subr.bf16.mxu0 0
    %797 = vmatpush1.bf16.msra.mxu0 0
    %798 = vmatprep.subr.bf16.mxu0 0
    %799 = vmatpush1.bf16.msra.mxu0 0
    %800 = vmatprep.subr.bf16.mxu0 0
    %801 = vmatpush1.bf16.msra.mxu0 0
    %802 = vmatprep.subr.bf16.mxu0 0
    %803 = vmatpush1.bf16.msra.mxu0 0
    %804 = vmatprep.subr.bf16.mxu0 0
    %805 = vmatpush1.bf16.msra.mxu0 0
    %806 = vmatprep.subr.bf16.mxu0 0
    %807 = vmatpush1.bf16.msra.mxu0 0
    %808 = vmatprep.mubr.bf16.mxu0 0
    %809 = vmatmul.mubr.bf16.gmra.mrb[0].mxu0 %v774
    %v810 = vpop.f32.mrb[0].mxu0
    %v811 = vadd.f32 0.0, %v810
    %v812 = vpop.f32.mrb[0].mxu0
    %v813 = vpop.f32.mrb[0].mxu0
    %v814 = vpop.f32.mrb[0].mxu0
    %815 = vdwg.mxu0
    %v816 = vadd.f32 %v70, %v811
    %v817 = vld [vmem:[%s6] sm:$0x1]
    %v818 = vmul.f32 %v816, %v816
    %v819 = vsel %vm80, %v818, 0.0
    %820 = vadd.xlane.f32.xlu0 %v819
    %v821 = vpop.xlane.xlu0 %820
    %v822 = vmul.f32 %v821, %v84
    %v823 = vadd.f32 %v822, 1e-06
    %v824 = vrsqrt.pop %v823
    %v825 = vmul.f32 %v816, %v824
    %v826 = vunpack.c.l.bf16 %v817
    %v827 = vlaneseq
    %v828 = vshrl.u32 %v827, 7
    %v829 = vsub.s32 0, %v828
    %v830 = vrot.slane %v826, %v829
    %v831 = vmul.f32 %v825, %v830
    %v832 = vpack.c.bf16 %v831, %v831
    %v833 = vld [vmem:[%s3] sm:$0xff]
    %v834 = vld [vmem:[%s3 + $0x8] sm:$0xff]
    %v835 = vld [vmem:[%s3 + $0x10] sm:$0xff]
    %v836 = vld [vmem:[%s3 + $0x18] sm:$0xff]
    %v837 = vld [vmem:[%s3 + $0x20] sm:$0xff]
    %v838 = vld [vmem:[%s3 + $0x28] sm:$0xff]
    %v839 = vld [vmem:[%s3 + $0x30] sm:$0xff]
    %v840 = vld [vmem:[%s3 + $0x38] sm:$0xff]
    %v849 = vunpack.c.l.b16 %v833
    %v850 = vunpack.c.h.b16 %v833
    %v851 = vunpack.c.l.b16 %v834
    %v852 = vunpack.c.h.b16 %v834
    %v853 = vunpack.c.l.b16 %v835
    %v854 = vunpack.c.h.b16 %v835
    %v855 = vunpack.c.l.b16 %v836
    %v856 = vunpack.c.h.b16 %v836
    %v857 = vunpack.c.l.b16 %v837
    %v858 = vunpack.c.h.b16 %v837
    %v859 = vunpack.c.l.b16 %v838
    %v860 = vunpack.c.h.b16 %v838
    %v861 = vunpack.c.l.b16 %v839
    %v862 = vunpack.c.h.b16 %v839
    %v863 = vunpack.c.l.b16 %v840
    %v864 = vunpack.c.h.b16 %v840
    %v865 = vpack.c.b16 %v851, %v849
    %v866 = vpack.c.b16 %v852, %v850
    %v867 = vpack.c.b16 %v855, %v853
    %v868 = vpack.c.b16 %v856, %v854
    %v869 = vpack.c.b16 %v859, %v857
    %v870 = vpack.c.b16 %v860, %v858
    %v871 = vpack.c.b16 %v863, %v861
    %v872 = vpack.c.b16 %v864, %v862
    %v882 = vsel %vm80, %v832, 0
    %884 = vmatprep.subr.bf16.mxu0 %v866
    %885 = vmatpush1.bf16.msra.mxu0 %v865
    %886 = vmatprep.subr.bf16.mxu0 %v868
    %887 = vmatpush1.bf16.msra.mxu0 %v867
    %888 = vmatprep.subr.bf16.mxu0 %v870
    %889 = vmatpush1.bf16.msra.mxu0 %v869
    %890 = vmatprep.subr.bf16.mxu0 %v872
    %891 = vmatpush1.bf16.msra.mxu0 %v871
    %892 = vmatprep.subr.bf16.mxu0 0
    %893 = vmatpush1.bf16.msra.mxu0 0
    %894 = vmatprep.subr.bf16.mxu0 0
    %895 = vmatpush1.bf16.msra.mxu0 0
    %896 = vmatprep.subr.bf16.mxu0 0
    %897 = vmatpush1.bf16.msra.mxu0 0
    %898 = vmatprep.subr.bf16.mxu0 0
    %899 = vmatpush1.bf16.msra.mxu0 0
    %900 = vmatprep.subr.bf16.mxu0 0
    %901 = vmatpush1.bf16.msra.mxu0 0
    %902 = vmatprep.subr.bf16.mxu0 0
    %903 = vmatpush1.bf16.msra.mxu0 0
    %904 = vmatprep.subr.bf16.mxu0 0
    %905 = vmatpush1.bf16.msra.mxu0 0
    %906 = vmatprep.subr.bf16.mxu0 0
    %907 = vmatpush1.bf16.msra.mxu0 0
    %908 = vmatprep.subr.bf16.mxu0 0
    %909 = vmatpush1.bf16.msra.mxu0 0
    %910 = vmatprep.subr.bf16.mxu0 0
    %911 = vmatpush1.bf16.msra.mxu0 0
    %912 = vmatprep.subr.bf16.mxu0 0
    %913 = vmatpush1.bf16.msra.mxu0 0
    %914 = vmatprep.subr.bf16.mxu0 0
    %915 = vmatpush1.bf16.msra.mxu0 0
    %916 = vmatprep.mubr.bf16.mxu0 0
    %917 = vmatmul.mubr.bf16.gmra.mrb[0].mxu0 %v882
    %v918 = vpop.f32.mrb[0].mxu0
    %v919 = vadd.f32 0.0, %v918
    %v920 = vpop.f32.mrb[0].mxu0
    %v921 = vadd.f32 0.0, %v920
    %v922 = vpop.f32.mrb[0].mxu0
    %v923 = vpop.f32.mrb[0].mxu0
    %924 = vdwg.mxu0
    %v925 = vxor.u32 %v919, 2147483648
    %v926 = vmul.f32 %v925, 1.442695
    %v927 = vpow.pop %v926
    %v928 = vadd.f32 %v927, 1.0
    %v929 = vrcp.pop %v928
    %v930 = vmul.f32 1.0, %v929
    %v931 = vmul.f32 %v919, %v930
    %v932 = vmul.f32 %v931, %v921
    %v933 = vpack.c.bf16 %v932, %v932
    %v934 = vld [vmem:[%s4] sm:$0xf]
    %v935 = vld [vmem:[%s4 + $0x4] sm:$0xf]
    %v936 = vld [vmem:[%s4 + $0x8] sm:$0xf]
    %v937 = vld [vmem:[%s4 + $0xc] sm:$0xf]
    %v938 = vld [vmem:[%s4 + $0x10] sm:$0xf]
    %v939 = vld [vmem:[%s4 + $0x14] sm:$0xf]
    %v940 = vld [vmem:[%s4 + $0x18] sm:$0xf]
    %v941 = vld [vmem:[%s4 + $0x1c] sm:$0xf]
    %v942 = vld [vmem:[%s4 + $0x20] sm:$0xf]
    %v943 = vld [vmem:[%s4 + $0x24] sm:$0xf]
    %v944 = vld [vmem:[%s4 + $0x28] sm:$0xf]
    %v945 = vld [vmem:[%s4 + $0x2c] sm:$0xf]
    %v946 = vld [vmem:[%s4 + $0x30] sm:$0xf]
    %v947 = vld [vmem:[%s4 + $0x34] sm:$0xf]
    %v948 = vld [vmem:[%s4 + $0x38] sm:$0xf]
    %v949 = vld [vmem:[%s4 + $0x3c] sm:$0xf]
    %v966 = vunpack.c.l.b16 %v934
    %v967 = vunpack.c.l.b16 %v935
    %v968 = vunpack.c.l.b16 %v936
    %v969 = vunpack.c.l.b16 %v937
    %v970 = vunpack.c.l.b16 %v938
    %v971 = vunpack.c.l.b16 %v939
    %v972 = vunpack.c.l.b16 %v940
    %v973 = vunpack.c.l.b16 %v941
    %v974 = vunpack.c.l.b16 %v942
    %v975 = vunpack.c.l.b16 %v943
    %v976 = vunpack.c.l.b16 %v944
    %v977 = vunpack.c.l.b16 %v945
    %v978 = vunpack.c.l.b16 %v946
    %v979 = vunpack.c.l.b16 %v947
    %v980 = vunpack.c.l.b16 %v948
    %v981 = vunpack.c.l.b16 %v949
    %v982 = vpack.c.b16 %v967, %v966
    %v983 = vpack.c.b16 %v969, %v968
    %v984 = vpack.c.b16 %v971, %v970
    %v985 = vpack.c.b16 %v973, %v972
    %v986 = vpack.c.b16 %v975, %v974
    %v987 = vpack.c.b16 %v977, %v976
    %v988 = vpack.c.b16 %v979, %v978
    %v989 = vpack.c.b16 %v981, %v980
    %998 = vmatprep.subr.bf16.mxu0 0
    %999 = vmatpush1.bf16.msra.mxu0 %v982
    %1000 = vmatprep.subr.bf16.mxu0 0
    %1001 = vmatpush1.bf16.msra.mxu0 %v983
    %1002 = vmatprep.subr.bf16.mxu0 0
    %1003 = vmatpush1.bf16.msra.mxu0 %v984
    %1004 = vmatprep.subr.bf16.mxu0 0
    %1005 = vmatpush1.bf16.msra.mxu0 %v985
    %1006 = vmatprep.subr.bf16.mxu0 0
    %1007 = vmatpush1.bf16.msra.mxu0 %v986
    %1008 = vmatprep.subr.bf16.mxu0 0
    %1009 = vmatpush1.bf16.msra.mxu0 %v987
    %1010 = vmatprep.subr.bf16.mxu0 0
    %1011 = vmatpush1.bf16.msra.mxu0 %v988
    %1012 = vmatprep.subr.bf16.mxu0 0
    %1013 = vmatpush1.bf16.msra.mxu0 %v989
    %1014 = vmatprep.subr.bf16.mxu0 0
    %1015 = vmatpush1.bf16.msra.mxu0 0
    %1016 = vmatprep.subr.bf16.mxu0 0
    %1017 = vmatpush1.bf16.msra.mxu0 0
    %1018 = vmatprep.subr.bf16.mxu0 0
    %1019 = vmatpush1.bf16.msra.mxu0 0
    %1020 = vmatprep.subr.bf16.mxu0 0
    %1021 = vmatpush1.bf16.msra.mxu0 0
    %1022 = vmatprep.subr.bf16.mxu0 0
    %1023 = vmatpush1.bf16.msra.mxu0 0
    %1024 = vmatprep.subr.bf16.mxu0 0
    %1025 = vmatpush1.bf16.msra.mxu0 0
    %1026 = vmatprep.subr.bf16.mxu0 0
    %1027 = vmatpush1.bf16.msra.mxu0 0
    %1028 = vmatprep.subr.bf16.mxu0 0
    %1029 = vmatpush1.bf16.msra.mxu0 0
    %1030 = vmatprep.mubr.bf16.mxu0 0
    %1031 = vmatmul.mubr.bf16.gmra.mrb[0].mxu0 %v933
    %v1032 = vpop.f32.mrb[0].mxu0
    %v1033 = vadd.f32 0.0, %v1032
    %v1034 = vpop.f32.mrb[0].mxu0
    %v1035 = vpop.f32.mrb[0].mxu0
    %v1036 = vpop.f32.mrb[0].mxu0
    %1037 = vdwg.mxu0
    %v1038 = vadd.f32 %v816, %v1033
    %s1039 = scalar_lea.vmem %s5, 1
    %v1040 = vld [vmem:[%s1039] sm:$0x1]
    %v1041 = vmul.f32 %v1038, %v1038
    %v1042 = vsel %vm80, %v1041, 0.0
    %1043 = vadd.xlane.f32.xlu0 %v1042
    %v1044 = vpop.xlane.xlu0 %1043
    %v1045 = vmul.f32 %v1044, %v84
    %v1046 = vadd.f32 %v1045, 1e-06
    %v1047 = vrsqrt.pop %v1046
    %v1048 = vmul.f32 %v1038, %v1047
    %v1049 = vunpack.c.l.bf16 %v1040
    %v1050 = vlaneseq
    %v1051 = vshrl.u32 %v1050, 7
    %v1052 = vsub.s32 0, %v1051
    %v1053 = vrot.slane %v1049, %v1052
    %v1054 = vmul.f32 %v1048, %v1053
    %v1055 = vpack.c.bf16 %v1054, %v1054
    %s1056 = scalar_lea.vmem %s1, 32
    %v1057 = vld [vmem:[%s1056] sm:$0xf]
    %v1058 = vld [vmem:[%s1056 + $0x4] sm:$0xf]
    %v1059 = vld [vmem:[%s1056 + $0x8] sm:$0xf]
    %v1060 = vld [vmem:[%s1056 + $0xc] sm:$0xf]
    %v1061 = vld [vmem:[%s1056 + $0x10] sm:$0xf]
    %v1062 = vld [vmem:[%s1056 + $0x14] sm:$0xf]
    %v1063 = vld [vmem:[%s1056 + $0x18] sm:$0xf]
    %v1064 = vld [vmem:[%s1056 + $0x1c] sm:$0xf]
    %v1073 = vunpack.c.l.b16 %v1057
    %v1074 = vunpack.c.l.b16 %v1058
    %v1075 = vunpack.c.l.b16 %v1059
    %v1076 = vunpack.c.l.b16 %v1060
    %v1077 = vunpack.c.l.b16 %v1061
    %v1078 = vunpack.c.l.b16 %v1062
    %v1079 = vunpack.c.l.b16 %v1063
    %v1080 = vunpack.c.l.b16 %v1064
    %v1081 = vpack.c.b16 %v1074, %v1073
    %v1082 = vpack.c.b16 %v1076, %v1075
    %v1083 = vpack.c.b16 %v1078, %v1077
    %v1084 = vpack.c.b16 %v1080, %v1079
    %v1090 = vsel %vm80, %v1055, 0
    %1092 = vmatprep.subr.bf16.mxu0 0
    %1093 = vmatpush1.bf16.msra.mxu0 %v1081
    %1094 = vmatprep.subr.bf16.mxu0 0
    %1095 = vmatpush1.bf16.msra.mxu0 %v1082
    %1096 = vmatprep.subr.bf16.mxu0 0
    %1097 = vmatpush1.bf16.msra.mxu0 %v1083
    %1098 = vmatprep.subr.bf16.mxu0 0
    %1099 = vmatpush1.bf16.msra.mxu0 %v1084
    %1100 = vmatprep.subr.bf16.mxu0 0
    %1101 = vmatpush1.bf16.msra.mxu0 0
    %1102 = vmatprep.subr.bf16.mxu0 0
    %1103 = vmatpush1.bf16.msra.mxu0 0
    %1104 = vmatprep.subr.bf16.mxu0 0
    %1105 = vmatpush1.bf16.msra.mxu0 0
    %1106 = vmatprep.subr.bf16.mxu0 0
    %1107 = vmatpush1.bf16.msra.mxu0 0
    %1108 = vmatprep.subr.bf16.mxu0 0
    %1109 = vmatpush1.bf16.msra.mxu0 0
    %1110 = vmatprep.subr.bf16.mxu0 0
    %1111 = vmatpush1.bf16.msra.mxu0 0
    %1112 = vmatprep.subr.bf16.mxu0 0
    %1113 = vmatpush1.bf16.msra.mxu0 0
    %1114 = vmatprep.subr.bf16.mxu0 0
    %1115 = vmatpush1.bf16.msra.mxu0 0
    %1116 = vmatprep.subr.bf16.mxu0 0
    %1117 = vmatpush1.bf16.msra.mxu0 0
    %1118 = vmatprep.subr.bf16.mxu0 0
    %1119 = vmatpush1.bf16.msra.mxu0 0
    %1120 = vmatprep.subr.bf16.mxu0 0
    %1121 = vmatpush1.bf16.msra.mxu0 0
    %1122 = vmatprep.subr.bf16.mxu0 0
    %1123 = vmatpush1.bf16.msra.mxu0 0
    %1124 = vmatprep.mubr.bf16.mxu0 0
    %1125 = vmatmul.mubr.bf16.gmra.mrb[0].mxu0 %v1090
    %v1126 = vpop.f32.mrb[0].mxu0
    %v1127 = vadd.f32 0.0, %v1126
    %v1128 = vpop.f32.mrb[0].mxu0
    %v1129 = vpop.f32.mrb[0].mxu0
    %v1130 = vpop.f32.mrb[0].mxu0
    %1131 = vdwg.mxu0
    %v1132 = vpack.c.bf16 %v1127, %v1127
    %v1134 = vunpack.c.l.b16 %v1132
    %v1135 = vpack.c.b16 %v1134, %v1134
    %1136 = vrot.lane.b32.xlu0 %v1135, 64
    %v1137 = vpop.permute.xlu0 %1136
    %s1139 = scalar_lea.vmem %s14, 4
    %1140 = vst.msk [vmem:[%s1139] sm:$0xf] %vm178, %v1137
    %1141 = vrot.lane.b32.xlu0 %v1135, 32
    %v1142 = vpop.permute.xlu0 %1141
    %s1144 = scalar_lea.vmem %s15, 4
    %1145 = vst.msk [vmem:[%s1144] sm:$0xf] %vm178, %v1142
    %v1146 = vsub.f32 0.0, %v1127
    %1148 = vrot.lane.b32.xlu0 %v1146, 56
    %v1149 = vpop.permute.xlu0 %1148
    %1152 = vrot.lane.b32.xlu0 %v1127, 72
    %v1153 = vpop.permute.xlu0 %1152
    %v1155 = vsel %vm193, %v1149, %v1153
    %v1156 = vmul.f32 %v1127, %v197
    %v1157 = vmul.f32 %v1155, %v72
    %1159 = vrot.lane.b32.xlu0 %v1157, 64
    %v1160 = vpop.permute.xlu0 %1159
    %v1162 = vadd.f32 %v1156, %v1160
    %v1163 = vpack.c.bf16 %v1162, %v1162
    %1164 = vrot.lane.b32.xlu0 %v1146, 40
    %v1165 = vpop.permute.xlu0 %1164
    %1167 = vrot.lane.b32.xlu0 %v1127, 56
    %v1168 = vpop.permute.xlu0 %1167
    %v1170 = vsel %vm193, %v1165, %v1168
    %v1171 = vmul.f32 %v1127, %v215
    %v1172 = vmul.f32 %v1170, %v72
    %1174 = vrot.lane.b32.xlu0 %v1172, 80
    %v1175 = vpop.permute.xlu0 %1174
    %v1177 = vadd.f32 %v1171, %v1175
    %v1178 = vpack.c.bf16 %v1177, %v1177
    %1179 = vrot.lane.b32.xlu0 %v1146, 120
    %v1180 = vpop.permute.xlu0 %1179
    %1182 = vrot.lane.b32.xlu0 %v1127, 8
    %v1183 = vpop.permute.xlu0 %1182
    %v1185 = vsel %vm193, %v1180, %v1183
    %v1186 = vmul.f32 %v1127, %v71
    %v1187 = vmul.f32 %v1185, %v72
    %v1188 = vadd.f32 %v1186, %v1187
    %v1189 = vpack.c.bf16 %v1188, %v1188
    %1191 = vrot.lane.b32.xlu0 %v1163, 64
    %v1192 = vpop.permute.xlu0 %1191
    %v1194 = vsel %vm239, %v1189, 0
    %v1197 = vsel %vm239, %v1192, 0
    %1199 = vmatprep.subr.bf16.mxu0 0
    %1200 = vmatpush1.bf16.xpose.msra.mxu0 %v1197
    %1201 = vmatprep.subr.bf16.mxu0 0
    %1202 = vmatpush1.bf16.xpose.msra.mxu0 0
    %1203 = vmatprep.subr.bf16.mxu0 0
    %1204 = vmatpush1.bf16.xpose.msra.mxu0 0
    %1205 = vmatprep.subr.bf16.mxu0 0
    %1206 = vmatpush1.bf16.xpose.msra.mxu0 0
    %1207 = vmatprep.subr.bf16.mxu0 0
    %1208 = vmatpush1.bf16.xpose.msra.mxu0 0
    %1209 = vmatprep.subr.bf16.mxu0 0
    %1210 = vmatpush1.bf16.xpose.msra.mxu0 0
    %1211 = vmatprep.subr.bf16.mxu0 0
    %1212 = vmatpush1.bf16.xpose.msra.mxu0 0
    %1213 = vmatprep.subr.bf16.mxu0 0
    %1214 = vmatpush1.bf16.xpose.msra.mxu0 0
    %1215 = vmatprep.subr.bf16.mxu0 0
    %1216 = vmatpush1.bf16.xpose.msra.mxu0 0
    %1217 = vmatprep.subr.bf16.mxu0 0
    %1218 = vmatpush1.bf16.xpose.msra.mxu0 0
    %1219 = vmatprep.subr.bf16.mxu0 0
    %1220 = vmatpush1.bf16.xpose.msra.mxu0 0
    %1221 = vmatprep.subr.bf16.mxu0 0
    %1222 = vmatpush1.bf16.xpose.msra.mxu0 0
    %1223 = vmatprep.subr.bf16.mxu0 0
    %1224 = vmatpush1.bf16.xpose.msra.mxu0 0
    %1225 = vmatprep.subr.bf16.mxu0 0
    %1226 = vmatpush1.bf16.xpose.msra.mxu0 0
    %1227 = vmatprep.subr.bf16.mxu0 0
    %1228 = vmatpush1.bf16.xpose.msra.mxu0 0
    %1229 = vmatprep.subr.bf16.mxu0 0
    %1230 = vmatpush1.bf16.xpose.msra.mxu0 0
    %1231 = vmatprep.mubr.bf16.mxu0 0
    %1232 = vmatmul.mubr.bf16.gmra.mrb[0].mxu0 %v1194
    %v1233 = vpop.f32.mrb[0].mxu0
    %v1234 = vadd.f32 0.0, %v1233
    %v1235 = vpop.f32.mrb[0].mxu0
    %v1236 = vpop.f32.mrb[0].mxu0
    %v1237 = vpop.f32.mrb[0].mxu0
    %1238 = vdwg.mxu0
    %v1239 = vmul.f32 %v1234, 0.25
    %v1240 = vsel %vm77, %v1239, -inf
    %v1241 = vsel %vm193, %v1240, -inf
    %1242 = vmax.xlane.f32.xlu0 %v1241
    %v1243 = vpop.xlane.xlu0 %1242
    %v1244 = vsub.f32 %v1240, %v1243
    %v1245 = vmul.f32 %v1244, 1.442695
    %v1246 = vpow.pop %v1245
    %v1247 = vsel %vm193, %v1246, 0.0
    %1248 = vadd.xlane.f32.xlu0 %v1247
    %v1249 = vpop.xlane.xlu0 %1248
    %v1250 = vpack.c.bf16 %v1246, %v1246
    %1251 = vrot.lane.b32.xlu0 %v1132, 32
    %v1252 = vpop.permute.xlu0 %1251
    %v1254 = vsel %vm193, %v1250, 0
    %v1257 = vsel %vm303, %v1252, 0
    %1259 = vmatprep.subr.bf16.mxu0 0
    %1260 = vmatpush1.bf16.msra.mxu0 %v1257
    %1261 = vmatprep.subr.bf16.mxu0 0
    %1262 = vmatpush1.bf16.msra.mxu0 0
    %1263 = vmatprep.subr.bf16.mxu0 0
    %1264 = vmatpush1.bf16.msra.mxu0 0
    %1265 = vmatprep.subr.bf16.mxu0 0
    %1266 = vmatpush1.bf16.msra.mxu0 0
    %1267 = vmatprep.subr.bf16.mxu0 0
    %1268 = vmatpush1.bf16.msra.mxu0 0
    %1269 = vmatprep.subr.bf16.mxu0 0
    %1270 = vmatpush1.bf16.msra.mxu0 0
    %1271 = vmatprep.subr.bf16.mxu0 0
    %1272 = vmatpush1.bf16.msra.mxu0 0
    %1273 = vmatprep.subr.bf16.mxu0 0
    %1274 = vmatpush1.bf16.msra.mxu0 0
    %1275 = vmatprep.subr.bf16.mxu0 0
    %1276 = vmatpush1.bf16.msra.mxu0 0
    %1277 = vmatprep.subr.bf16.mxu0 0
    %1278 = vmatpush1.bf16.msra.mxu0 0
    %1279 = vmatprep.subr.bf16.mxu0 0
    %1280 = vmatpush1.bf16.msra.mxu0 0
    %1281 = vmatprep.subr.bf16.mxu0 0
    %1282 = vmatpush1.bf16.msra.mxu0 0
    %1283 = vmatprep.subr.bf16.mxu0 0
    %1284 = vmatpush1.bf16.msra.mxu0 0
    %1285 = vmatprep.subr.bf16.mxu0 0
    %1286 = vmatpush1.bf16.msra.mxu0 0
    %1287 = vmatprep.subr.bf16.mxu0 0
    %1288 = vmatpush1.bf16.msra.mxu0 0
    %1289 = vmatprep.subr.bf16.mxu0 0
    %1290 = vmatpush1.bf16.msra.mxu0 0
    %1291 = vmatprep.mubr.bf16.mxu0 0
    %1292 = vmatmul.mubr.bf16.gmra.mrb[0].mxu0 %v1254
    %v1293 = vpop.f32.mrb[0].mxu0
    %v1294 = vadd.f32 0.0, %v1293
    %v1295 = vpop.f32.mrb[0].mxu0
    %v1296 = vpop.f32.mrb[0].mxu0
    %v1297 = vpop.f32.mrb[0].mxu0
    %1298 = vdwg.mxu0
    %v1299 = vrcp.pop %v1249
    %v1300 = vmul.f32 %v1294, %v1299
    %1301 = vrot.lane.b32.xlu0 %v1146, 104
    %v1302 = vpop.permute.xlu0 %1301
    %1304 = vrot.lane.b32.xlu0 %v1127, 120
    %v1305 = vpop.permute.xlu0 %1304
    %v1307 = vsel %vm193, %v1302, %v1305
    %v1308 = vmul.f32 %v1127, %v357
    %v1309 = vmul.f32 %v1307, %v72
    %1311 = vrot.lane.b32.xlu0 %v1309, 16
    %v1312 = vpop.permute.xlu0 %1311
    %v1314 = vadd.f32 %v1308, %v1312
    %v1315 = vpack.c.bf16 %v1314, %v1314
    %1317 = vrot.lane.b32.xlu0 %v1315, 112
    %v1318 = vpop.permute.xlu0 %1317
    %v1320 = vsel %vm239, %v1318, 0
    %1322 = vmatprep.subr.bf16.mxu0 0
    %1323 = vmatpush1.bf16.xpose.msra.mxu0 %v1197
    %1324 = vmatprep.subr.bf16.mxu0 0
    %1325 = vmatpush1.bf16.xpose.msra.mxu0 0
    %1326 = vmatprep.subr.bf16.mxu0 0
    %1327 = vmatpush1.bf16.xpose.msra.mxu0 0
    %1328 = vmatprep.subr.bf16.mxu0 0
    %1329 = vmatpush1.bf16.xpose.msra.mxu0 0
    %1330 = vmatprep.subr.bf16.mxu0 0
    %1331 = vmatpush1.bf16.xpose.msra.mxu0 0
    %1332 = vmatprep.subr.bf16.mxu0 0
    %1333 = vmatpush1.bf16.xpose.msra.mxu0 0
    %1334 = vmatprep.subr.bf16.mxu0 0
    %1335 = vmatpush1.bf16.xpose.msra.mxu0 0
    %1336 = vmatprep.subr.bf16.mxu0 0
    %1337 = vmatpush1.bf16.xpose.msra.mxu0 0
    %1338 = vmatprep.subr.bf16.mxu0 0
    %1339 = vmatpush1.bf16.xpose.msra.mxu0 0
    %1340 = vmatprep.subr.bf16.mxu0 0
    %1341 = vmatpush1.bf16.xpose.msra.mxu0 0
    %1342 = vmatprep.subr.bf16.mxu0 0
    %1343 = vmatpush1.bf16.xpose.msra.mxu0 0
    %1344 = vmatprep.subr.bf16.mxu0 0
    %1345 = vmatpush1.bf16.xpose.msra.mxu0 0
    %1346 = vmatprep.subr.bf16.mxu0 0
    %1347 = vmatpush1.bf16.xpose.msra.mxu0 0
    %1348 = vmatprep.subr.bf16.mxu0 0
    %1349 = vmatpush1.bf16.xpose.msra.mxu0 0
    %1350 = vmatprep.subr.bf16.mxu0 0
    %1351 = vmatpush1.bf16.xpose.msra.mxu0 0
    %1352 = vmatprep.subr.bf16.mxu0 0
    %1353 = vmatpush1.bf16.xpose.msra.mxu0 0
    %1354 = vmatprep.mubr.bf16.mxu0 0
    %1355 = vmatmul.mubr.bf16.gmra.mrb[0].mxu0 %v1320
    %v1356 = vpop.f32.mrb[0].mxu0
    %v1357 = vadd.f32 0.0, %v1356
    %v1358 = vpop.f32.mrb[0].mxu0
    %v1359 = vpop.f32.mrb[0].mxu0
    %v1360 = vpop.f32.mrb[0].mxu0
    %1361 = vdwg.mxu0
    %v1362 = vmul.f32 %v1357, 0.25
    %v1363 = vsel %vm77, %v1362, -inf
    %v1364 = vsel %vm193, %v1363, -inf
    %1365 = vmax.xlane.f32.xlu0 %v1364
    %v1366 = vpop.xlane.xlu0 %1365
    %v1367 = vsub.f32 %v1363, %v1366
    %v1368 = vmul.f32 %v1367, 1.442695
    %v1369 = vpow.pop %v1368
    %v1370 = vsel %vm193, %v1369, 0.0
    %1371 = vadd.xlane.f32.xlu0 %v1370
    %v1372 = vpop.xlane.xlu0 %1371
    %v1373 = vpack.c.bf16 %v1369, %v1369
    %v1375 = vsel %vm193, %v1373, 0
    %1377 = vmatprep.subr.bf16.mxu0 0
    %1378 = vmatpush1.bf16.msra.mxu0 %v1257
    %1379 = vmatprep.subr.bf16.mxu0 0
    %1380 = vmatpush1.bf16.msra.mxu0 0
    %1381 = vmatprep.subr.bf16.mxu0 0
    %1382 = vmatpush1.bf16.msra.mxu0 0
    %1383 = vmatprep.subr.bf16.mxu0 0
    %1384 = vmatpush1.bf16.msra.mxu0 0
    %1385 = vmatprep.subr.bf16.mxu0 0
    %1386 = vmatpush1.bf16.msra.mxu0 0
    %1387 = vmatprep.subr.bf16.mxu0 0
    %1388 = vmatpush1.bf16.msra.mxu0 0
    %1389 = vmatprep.subr.bf16.mxu0 0
    %1390 = vmatpush1.bf16.msra.mxu0 0
    %1391 = vmatprep.subr.bf16.mxu0 0
    %1392 = vmatpush1.bf16.msra.mxu0 0
    %1393 = vmatprep.subr.bf16.mxu0 0
    %1394 = vmatpush1.bf16.msra.mxu0 0
    %1395 = vmatprep.subr.bf16.mxu0 0
    %1396 = vmatpush1.bf16.msra.mxu0 0
    %1397 = vmatprep.subr.bf16.mxu0 0
    %1398 = vmatpush1.bf16.msra.mxu0 0
    %1399 = vmatprep.subr.bf16.mxu0 0
    %1400 = vmatpush1.bf16.msra.mxu0 0
    %1401 = vmatprep.subr.bf16.mxu0 0
    %1402 = vmatpush1.bf16.msra.mxu0 0
    %1403 = vmatprep.subr.bf16.mxu0 0
    %1404 = vmatpush1.bf16.msra.mxu0 0
    %1405 = vmatprep.subr.bf16.mxu0 0
    %1406 = vmatpush1.bf16.msra.mxu0 0
    %1407 = vmatprep.subr.bf16.mxu0 0
    %1408 = vmatpush1.bf16.msra.mxu0 0
    %1409 = vmatprep.mubr.bf16.mxu0 0
    %1410 = vmatmul.mubr.bf16.gmra.mrb[0].mxu0 %v1375
    %v1411 = vpop.f32.mrb[0].mxu0
    %v1412 = vadd.f32 0.0, %v1411
    %v1413 = vpop.f32.mrb[0].mxu0
    %v1414 = vpop.f32.mrb[0].mxu0
    %v1415 = vpop.f32.mrb[0].mxu0
    %1416 = vdwg.mxu0
    %v1417 = vrcp.pop %v1372
    %v1418 = vmul.f32 %v1412, %v1417
    %1419 = vrot.lane.b32.xlu0 %v1146, 88
    %v1420 = vpop.permute.xlu0 %1419
    %1422 = vrot.lane.b32.xlu0 %v1127, 104
    %v1423 = vpop.permute.xlu0 %1422
    %v1425 = vsel %vm193, %v1420, %v1423
    %v1426 = vmul.f32 %v1127, %v478
    %v1427 = vmul.f32 %v1425, %v72
    %1429 = vrot.lane.b32.xlu0 %v1427, 32
    %v1430 = vpop.permute.xlu0 %1429
    %v1432 = vadd.f32 %v1426, %v1430
    %v1433 = vpack.c.bf16 %v1432, %v1432
    %1435 = vrot.lane.b32.xlu0 %v1433, 96
    %v1436 = vpop.permute.xlu0 %1435
    %1438 = vrot.lane.b32.xlu0 %v1178, 48
    %v1439 = vpop.permute.xlu0 %1438
    %v1441 = vsel %vm239, %v1436, 0
    %v1444 = vsel %vm239, %v1439, 0
    %1446 = vmatprep.subr.bf16.mxu0 0
    %1447 = vmatpush1.bf16.xpose.msra.mxu0 %v1444
    %1448 = vmatprep.subr.bf16.mxu0 0
    %1449 = vmatpush1.bf16.xpose.msra.mxu0 0
    %1450 = vmatprep.subr.bf16.mxu0 0
    %1451 = vmatpush1.bf16.xpose.msra.mxu0 0
    %1452 = vmatprep.subr.bf16.mxu0 0
    %1453 = vmatpush1.bf16.xpose.msra.mxu0 0
    %1454 = vmatprep.subr.bf16.mxu0 0
    %1455 = vmatpush1.bf16.xpose.msra.mxu0 0
    %1456 = vmatprep.subr.bf16.mxu0 0
    %1457 = vmatpush1.bf16.xpose.msra.mxu0 0
    %1458 = vmatprep.subr.bf16.mxu0 0
    %1459 = vmatpush1.bf16.xpose.msra.mxu0 0
    %1460 = vmatprep.subr.bf16.mxu0 0
    %1461 = vmatpush1.bf16.xpose.msra.mxu0 0
    %1462 = vmatprep.subr.bf16.mxu0 0
    %1463 = vmatpush1.bf16.xpose.msra.mxu0 0
    %1464 = vmatprep.subr.bf16.mxu0 0
    %1465 = vmatpush1.bf16.xpose.msra.mxu0 0
    %1466 = vmatprep.subr.bf16.mxu0 0
    %1467 = vmatpush1.bf16.xpose.msra.mxu0 0
    %1468 = vmatprep.subr.bf16.mxu0 0
    %1469 = vmatpush1.bf16.xpose.msra.mxu0 0
    %1470 = vmatprep.subr.bf16.mxu0 0
    %1471 = vmatpush1.bf16.xpose.msra.mxu0 0
    %1472 = vmatprep.subr.bf16.mxu0 0
    %1473 = vmatpush1.bf16.xpose.msra.mxu0 0
    %1474 = vmatprep.subr.bf16.mxu0 0
    %1475 = vmatpush1.bf16.xpose.msra.mxu0 0
    %1476 = vmatprep.subr.bf16.mxu0 0
    %1477 = vmatpush1.bf16.xpose.msra.mxu0 0
    %1478 = vmatprep.mubr.bf16.mxu0 0
    %1479 = vmatmul.mubr.bf16.gmra.mrb[0].mxu0 %v1441
    %v1480 = vpop.f32.mrb[0].mxu0
    %v1481 = vadd.f32 0.0, %v1480
    %v1482 = vpop.f32.mrb[0].mxu0
    %v1483 = vpop.f32.mrb[0].mxu0
    %v1484 = vpop.f32.mrb[0].mxu0
    %1485 = vdwg.mxu0
    %v1486 = vmul.f32 %v1481, 0.25
    %v1487 = vsel %vm77, %v1486, -inf
    %v1488 = vsel %vm193, %v1487, -inf
    %1489 = vmax.xlane.f32.xlu0 %v1488
    %v1490 = vpop.xlane.xlu0 %1489
    %v1491 = vsub.f32 %v1487, %v1490
    %v1492 = vmul.f32 %v1491, 1.442695
    %v1493 = vpow.pop %v1492
    %v1494 = vsel %vm193, %v1493, 0.0
    %1495 = vadd.xlane.f32.xlu0 %v1494
    %v1496 = vpop.xlane.xlu0 %1495
    %v1497 = vpack.c.bf16 %v1493, %v1493
    %1498 = vrot.lane.b32.xlu0 %v1132, 16
    %v1499 = vpop.permute.xlu0 %1498
    %v1501 = vsel %vm193, %v1497, 0
    %v1504 = vsel %vm303, %v1499, 0
    %1506 = vmatprep.subr.bf16.mxu0 0
    %1507 = vmatpush1.bf16.msra.mxu0 %v1504
    %1508 = vmatprep.subr.bf16.mxu0 0
    %1509 = vmatpush1.bf16.msra.mxu0 0
    %1510 = vmatprep.subr.bf16.mxu0 0
    %1511 = vmatpush1.bf16.msra.mxu0 0
    %1512 = vmatprep.subr.bf16.mxu0 0
    %1513 = vmatpush1.bf16.msra.mxu0 0
    %1514 = vmatprep.subr.bf16.mxu0 0
    %1515 = vmatpush1.bf16.msra.mxu0 0
    %1516 = vmatprep.subr.bf16.mxu0 0
    %1517 = vmatpush1.bf16.msra.mxu0 0
    %1518 = vmatprep.subr.bf16.mxu0 0
    %1519 = vmatpush1.bf16.msra.mxu0 0
    %1520 = vmatprep.subr.bf16.mxu0 0
    %1521 = vmatpush1.bf16.msra.mxu0 0
    %1522 = vmatprep.subr.bf16.mxu0 0
    %1523 = vmatpush1.bf16.msra.mxu0 0
    %1524 = vmatprep.subr.bf16.mxu0 0
    %1525 = vmatpush1.bf16.msra.mxu0 0
    %1526 = vmatprep.subr.bf16.mxu0 0
    %1527 = vmatpush1.bf16.msra.mxu0 0
    %1528 = vmatprep.subr.bf16.mxu0 0
    %1529 = vmatpush1.bf16.msra.mxu0 0
    %1530 = vmatprep.subr.bf16.mxu0 0
    %1531 = vmatpush1.bf16.msra.mxu0 0
    %1532 = vmatprep.subr.bf16.mxu0 0
    %1533 = vmatpush1.bf16.msra.mxu0 0
    %1534 = vmatprep.subr.bf16.mxu0 0
    %1535 = vmatpush1.bf16.msra.mxu0 0
    %1536 = vmatprep.subr.bf16.mxu0 0
    %1537 = vmatpush1.bf16.msra.mxu0 0
    %1538 = vmatprep.mubr.bf16.mxu0 0
    %1539 = vmatmul.mubr.bf16.gmra.mrb[0].mxu0 %v1501
    %v1540 = vpop.f32.mrb[0].mxu0
    %v1541 = vadd.f32 0.0, %v1540
    %v1542 = vpop.f32.mrb[0].mxu0
    %v1543 = vpop.f32.mrb[0].mxu0
    %v1544 = vpop.f32.mrb[0].mxu0
    %1545 = vdwg.mxu0
    %v1546 = vrcp.pop %v1496
    %v1547 = vmul.f32 %v1541, %v1546
    %1548 = vrot.lane.b32.xlu0 %v1146, 72
    %v1549 = vpop.permute.xlu0 %1548
    %1551 = vrot.lane.b32.xlu0 %v1127, 88
    %v1552 = vpop.permute.xlu0 %1551
    %v1554 = vsel %vm193, %v1549, %v1552
    %v1555 = vmul.f32 %v1127, %v610
    %v1556 = vmul.f32 %v1554, %v72
    %1558 = vrot.lane.b32.xlu0 %v1556, 48
    %v1559 = vpop.permute.xlu0 %1558
    %v1561 = vadd.f32 %v1555, %v1559
    %v1562 = vpack.c.bf16 %v1561, %v1561
    %1564 = vrot.lane.b32.xlu0 %v1562, 80
    %v1565 = vpop.permute.xlu0 %1564
    %v1567 = vsel %vm239, %v1565, 0
    %1569 = vmatprep.subr.bf16.mxu0 0
    %1570 = vmatpush1.bf16.xpose.msra.mxu0 %v1444
    %1571 = vmatprep.subr.bf16.mxu0 0
    %1572 = vmatpush1.bf16.xpose.msra.mxu0 0
    %1573 = vmatprep.subr.bf16.mxu0 0
    %1574 = vmatpush1.bf16.xpose.msra.mxu0 0
    %1575 = vmatprep.subr.bf16.mxu0 0
    %1576 = vmatpush1.bf16.xpose.msra.mxu0 0
    %1577 = vmatprep.subr.bf16.mxu0 0
    %1578 = vmatpush1.bf16.xpose.msra.mxu0 0
    %1579 = vmatprep.subr.bf16.mxu0 0
    %1580 = vmatpush1.bf16.xpose.msra.mxu0 0
    %1581 = vmatprep.subr.bf16.mxu0 0
    %1582 = vmatpush1.bf16.xpose.msra.mxu0 0
    %1583 = vmatprep.subr.bf16.mxu0 0
    %1584 = vmatpush1.bf16.xpose.msra.mxu0 0
    %1585 = vmatprep.subr.bf16.mxu0 0
    %1586 = vmatpush1.bf16.xpose.msra.mxu0 0
    %1587 = vmatprep.subr.bf16.mxu0 0
    %1588 = vmatpush1.bf16.xpose.msra.mxu0 0
    %1589 = vmatprep.subr.bf16.mxu0 0
    %1590 = vmatpush1.bf16.xpose.msra.mxu0 0
    %1591 = vmatprep.subr.bf16.mxu0 0
    %1592 = vmatpush1.bf16.xpose.msra.mxu0 0
    %1593 = vmatprep.subr.bf16.mxu0 0
    %1594 = vmatpush1.bf16.xpose.msra.mxu0 0
    %1595 = vmatprep.subr.bf16.mxu0 0
    %1596 = vmatpush1.bf16.xpose.msra.mxu0 0
    %1597 = vmatprep.subr.bf16.mxu0 0
    %1598 = vmatpush1.bf16.xpose.msra.mxu0 0
    %1599 = vmatprep.subr.bf16.mxu0 0
    %1600 = vmatpush1.bf16.xpose.msra.mxu0 0
    %1601 = vmatprep.mubr.bf16.mxu0 0
    %1602 = vmatmul.mubr.bf16.gmra.mrb[0].mxu0 %v1567
    %v1603 = vpop.f32.mrb[0].mxu0
    %v1604 = vadd.f32 0.0, %v1603
    %v1605 = vpop.f32.mrb[0].mxu0
    %v1606 = vpop.f32.mrb[0].mxu0
    %v1607 = vpop.f32.mrb[0].mxu0
    %1608 = vdwg.mxu0
    %v1609 = vmul.f32 %v1604, 0.25
    %v1610 = vsel %vm77, %v1609, -inf
    %v1611 = vsel %vm193, %v1610, -inf
    %1612 = vmax.xlane.f32.xlu0 %v1611
    %v1613 = vpop.xlane.xlu0 %1612
    %v1614 = vsub.f32 %v1610, %v1613
    %v1615 = vmul.f32 %v1614, 1.442695
    %v1616 = vpow.pop %v1615
    %v1617 = vsel %vm193, %v1616, 0.0
    %1618 = vadd.xlane.f32.xlu0 %v1617
    %v1619 = vpop.xlane.xlu0 %1618
    %v1620 = vpack.c.bf16 %v1616, %v1616
    %v1622 = vsel %vm193, %v1620, 0
    %1624 = vmatprep.subr.bf16.mxu0 0
    %1625 = vmatpush1.bf16.msra.mxu0 %v1504
    %1626 = vmatprep.subr.bf16.mxu0 0
    %1627 = vmatpush1.bf16.msra.mxu0 0
    %1628 = vmatprep.subr.bf16.mxu0 0
    %1629 = vmatpush1.bf16.msra.mxu0 0
    %1630 = vmatprep.subr.bf16.mxu0 0
    %1631 = vmatpush1.bf16.msra.mxu0 0
    %1632 = vmatprep.subr.bf16.mxu0 0
    %1633 = vmatpush1.bf16.msra.mxu0 0
    %1634 = vmatprep.subr.bf16.mxu0 0
    %1635 = vmatpush1.bf16.msra.mxu0 0
    %1636 = vmatprep.subr.bf16.mxu0 0
    %1637 = vmatpush1.bf16.msra.mxu0 0
    %1638 = vmatprep.subr.bf16.mxu0 0
    %1639 = vmatpush1.bf16.msra.mxu0 0
    %1640 = vmatprep.subr.bf16.mxu0 0
    %1641 = vmatpush1.bf16.msra.mxu0 0
    %1642 = vmatprep.subr.bf16.mxu0 0
    %1643 = vmatpush1.bf16.msra.mxu0 0
    %1644 = vmatprep.subr.bf16.mxu0 0
    %1645 = vmatpush1.bf16.msra.mxu0 0
    %1646 = vmatprep.subr.bf16.mxu0 0
    %1647 = vmatpush1.bf16.msra.mxu0 0
    %1648 = vmatprep.subr.bf16.mxu0 0
    %1649 = vmatpush1.bf16.msra.mxu0 0
    %1650 = vmatprep.subr.bf16.mxu0 0
    %1651 = vmatpush1.bf16.msra.mxu0 0
    %1652 = vmatprep.subr.bf16.mxu0 0
    %1653 = vmatpush1.bf16.msra.mxu0 0
    %1654 = vmatprep.subr.bf16.mxu0 0
    %1655 = vmatpush1.bf16.msra.mxu0 0
    %1656 = vmatprep.mubr.bf16.mxu0 0
    %1657 = vmatmul.mubr.bf16.gmra.mrb[0].mxu0 %v1622
    %v1658 = vpop.f32.mrb[0].mxu0
    %v1659 = vadd.f32 0.0, %v1658
    %v1660 = vpop.f32.mrb[0].mxu0
    %v1661 = vpop.f32.mrb[0].mxu0
    %v1662 = vpop.f32.mrb[0].mxu0
    %1663 = vdwg.mxu0
    %v1664 = vrcp.pop %v1619
    %v1665 = vmul.f32 %v1659, %v1664
    %1667 = vrot.lane.b32.xlu0 %v1418, 16
    %v1668 = vpop.permute.xlu0 %1667
    %1671 = vrot.lane.b32.xlu0 %v1547, 32
    %v1672 = vpop.permute.xlu0 %1671
    %1675 = vrot.lane.b32.xlu0 %v1665, 48
    %v1676 = vpop.permute.xlu0 %1675
    %v1678 = vsel %vm239, %v1300, %v1668
    %v1679 = vsel %vm736, %v1678, %v1672
    %v1680 = vsel %vm738, %v1679, %v1676
    %v1681 = vpack.c.bf16 %v1680, %v1680
    %s1682 = scalar_lea.vmem [#allocation2], 32
    %v1683 = vld [vmem:[%s1682] sm:$0xf]
    %v1684 = vld [vmem:[%s1682 + $0x4] sm:$0xf]
    %v1685 = vld [vmem:[%s1682 + $0x8] sm:$0xf]
    %v1686 = vld [vmem:[%s1682 + $0xc] sm:$0xf]
    %v1687 = vld [vmem:[%s1682 + $0x10] sm:$0xf]
    %v1688 = vld [vmem:[%s1682 + $0x14] sm:$0xf]
    %v1689 = vld [vmem:[%s1682 + $0x18] sm:$0xf]
    %v1690 = vld [vmem:[%s1682 + $0x1c] sm:$0xf]
    %v1699 = vunpack.c.l.b16 %v1683
    %v1700 = vunpack.c.l.b16 %v1684
    %v1701 = vunpack.c.l.b16 %v1685
    %v1702 = vunpack.c.l.b16 %v1686
    %v1703 = vunpack.c.l.b16 %v1687
    %v1704 = vunpack.c.l.b16 %v1688
    %v1705 = vunpack.c.l.b16 %v1689
    %v1706 = vunpack.c.l.b16 %v1690
    %v1707 = vpack.c.b16 %v1700, %v1699
    %v1708 = vpack.c.b16 %v1702, %v1701
    %v1709 = vpack.c.b16 %v1704, %v1703
    %v1710 = vpack.c.b16 %v1706, %v1705
    %v1716 = vsel %vm80, %v1681, 0
    %1718 = vmatprep.subr.bf16.mxu0 0
    %1719 = vmatpush1.bf16.msra.mxu0 %v1707
    %1720 = vmatprep.subr.bf16.mxu0 0
    %1721 = vmatpush1.bf16.msra.mxu0 %v1708
    %1722 = vmatprep.subr.bf16.mxu0 0
    %1723 = vmatpush1.bf16.msra.mxu0 %v1709
    %1724 = vmatprep.subr.bf16.mxu0 0
    %1725 = vmatpush1.bf16.msra.mxu0 %v1710
    %1726 = vmatprep.subr.bf16.mxu0 0
    %1727 = vmatpush1.bf16.msra.mxu0 0
    %1728 = vmatprep.subr.bf16.mxu0 0
    %1729 = vmatpush1.bf16.msra.mxu0 0
    %1730 = vmatprep.subr.bf16.mxu0 0
    %1731 = vmatpush1.bf16.msra.mxu0 0
    %1732 = vmatprep.subr.bf16.mxu0 0
    %1733 = vmatpush1.bf16.msra.mxu0 0
    %1734 = vmatprep.subr.bf16.mxu0 0
    %1735 = vmatpush1.bf16.msra.mxu0 0
    %1736 = vmatprep.subr.bf16.mxu0 0
    %1737 = vmatpush1.bf16.msra.mxu0 0
    %1738 = vmatprep.subr.bf16.mxu0 0
    %1739 = vmatpush1.bf16.msra.mxu0 0
    %1740 = vmatprep.subr.bf16.mxu0 0
    %1741 = vmatpush1.bf16.msra.mxu0 0
    %1742 = vmatprep.subr.bf16.mxu0 0
    %1743 = vmatpush1.bf16.msra.mxu0 0
    %1744 = vmatprep.subr.bf16.mxu0 0
    %1745 = vmatpush1.bf16.msra.mxu0 0
    %1746 = vmatprep.subr.bf16.mxu0 0
    %1747 = vmatpush1.bf16.msra.mxu0 0
    %1748 = vmatprep.subr.bf16.mxu0 0
    %1749 = vmatpush1.bf16.msra.mxu0 0
    %1750 = vmatprep.mubr.bf16.mxu0 0
    %1751 = vmatmul.mubr.bf16.gmra.mrb[0].mxu0 %v1716
    %v1752 = vpop.f32.mrb[0].mxu0
    %v1753 = vadd.f32 0.0, %v1752
    %v1754 = vpop.f32.mrb[0].mxu0
    %v1755 = vpop.f32.mrb[0].mxu0
    %v1756 = vpop.f32.mrb[0].mxu0
    %1757 = vdwg.mxu0
    %v1758 = vadd.f32 %v1038, %v1753
    %s1759 = scalar_lea.vmem %s6, 1
    %v1760 = vld [vmem:[%s1759] sm:$0x1]
    %v1761 = vmul.f32 %v1758, %v1758
    %v1762 = vsel %vm80, %v1761, 0.0
    %1763 = vadd.xlane.f32.xlu0 %v1762
    %v1764 = vpop.xlane.xlu0 %1763
    %v1765 = vmul.f32 %v1764, %v84
    %v1766 = vadd.f32 %v1765, 1e-06
    %v1767 = vrsqrt.pop %v1766
    %v1768 = vmul.f32 %v1758, %v1767
    %v1769 = vunpack.c.l.bf16 %v1760
    %v1770 = vlaneseq
    %v1771 = vshrl.u32 %v1770, 7
    %v1772 = vsub.s32 0, %v1771
    %v1773 = vrot.slane %v1769, %v1772
    %v1774 = vmul.f32 %v1768, %v1773
    %v1775 = vpack.c.bf16 %v1774, %v1774
    %s1776 = scalar_lea.vmem %s3, 64
    %v1777 = vld [vmem:[%s1776] sm:$0xff]
    %v1778 = vld [vmem:[%s1776 + $0x8] sm:$0xff]
    %v1779 = vld [vmem:[%s1776 + $0x10] sm:$0xff]
    %v1780 = vld [vmem:[%s1776 + $0x18] sm:$0xff]
    %v1781 = vld [vmem:[%s1776 + $0x20] sm:$0xff]
    %v1782 = vld [vmem:[%s1776 + $0x28] sm:$0xff]
    %v1783 = vld [vmem:[%s1776 + $0x30] sm:$0xff]
    %v1784 = vld [vmem:[%s1776 + $0x38] sm:$0xff]
    %v1793 = vunpack.c.l.b16 %v1777
    %v1794 = vunpack.c.h.b16 %v1777
    %v1795 = vunpack.c.l.b16 %v1778
    %v1796 = vunpack.c.h.b16 %v1778
    %v1797 = vunpack.c.l.b16 %v1779
    %v1798 = vunpack.c.h.b16 %v1779
    %v1799 = vunpack.c.l.b16 %v1780
    %v1800 = vunpack.c.h.b16 %v1780
    %v1801 = vunpack.c.l.b16 %v1781
    %v1802 = vunpack.c.h.b16 %v1781
    %v1803 = vunpack.c.l.b16 %v1782
    %v1804 = vunpack.c.h.b16 %v1782
    %v1805 = vunpack.c.l.b16 %v1783
    %v1806 = vunpack.c.h.b16 %v1783
    %v1807 = vunpack.c.l.b16 %v1784
    %v1808 = vunpack.c.h.b16 %v1784
    %v1809 = vpack.c.b16 %v1795, %v1793
    %v1810 = vpack.c.b16 %v1796, %v1794
    %v1811 = vpack.c.b16 %v1799, %v1797
    %v1812 = vpack.c.b16 %v1800, %v1798
    %v1813 = vpack.c.b16 %v1803, %v1801
    %v1814 = vpack.c.b16 %v1804, %v1802
    %v1815 = vpack.c.b16 %v1807, %v1805
    %v1816 = vpack.c.b16 %v1808, %v1806
    %v1826 = vsel %vm80, %v1775, 0
    %1828 = vmatprep.subr.bf16.mxu0 %v1810
    %1829 = vmatpush1.bf16.msra.mxu0 %v1809
    %1830 = vmatprep.subr.bf16.mxu0 %v1812
    %1831 = vmatpush1.bf16.msra.mxu0 %v1811
    %1832 = vmatprep.subr.bf16.mxu0 %v1814
    %1833 = vmatpush1.bf16.msra.mxu0 %v1813
    %1834 = vmatprep.subr.bf16.mxu0 %v1816
    %1835 = vmatpush1.bf16.msra.mxu0 %v1815
    %1836 = vmatprep.subr.bf16.mxu0 0
    %1837 = vmatpush1.bf16.msra.mxu0 0
    %1838 = vmatprep.subr.bf16.mxu0 0
    %1839 = vmatpush1.bf16.msra.mxu0 0
    %1840 = vmatprep.subr.bf16.mxu0 0
    %1841 = vmatpush1.bf16.msra.mxu0 0
    %1842 = vmatprep.subr.bf16.mxu0 0
    %1843 = vmatpush1.bf16.msra.mxu0 0
    %1844 = vmatprep.subr.bf16.mxu0 0
    %1845 = vmatpush1.bf16.msra.mxu0 0
    %1846 = vmatprep.subr.bf16.mxu0 0
    %1847 = vmatpush1.bf16.msra.mxu0 0
    %1848 = vmatprep.subr.bf16.mxu0 0
    %1849 = vmatpush1.bf16.msra.mxu0 0
    %1850 = vmatprep.subr.bf16.mxu0 0
    %1851 = vmatpush1.bf16.msra.mxu0 0
    %1852 = vmatprep.subr.bf16.mxu0 0
    %1853 = vmatpush1.bf16.msra.mxu0 0
    %1854 = vmatprep.subr.bf16.mxu0 0
    %1855 = vmatpush1.bf16.msra.mxu0 0
    %1856 = vmatprep.subr.bf16.mxu0 0
    %1857 = vmatpush1.bf16.msra.mxu0 0
    %1858 = vmatprep.subr.bf16.mxu0 0
    %1859 = vmatpush1.bf16.msra.mxu0 0
    %1860 = vmatprep.mubr.bf16.mxu0 0
    %1861 = vmatmul.mubr.bf16.gmra.mrb[0].mxu0 %v1826
    %v1862 = vpop.f32.mrb[0].mxu0
    %v1863 = vadd.f32 0.0, %v1862
    %v1864 = vpop.f32.mrb[0].mxu0
    %v1865 = vadd.f32 0.0, %v1864
    %v1866 = vpop.f32.mrb[0].mxu0
    %v1867 = vpop.f32.mrb[0].mxu0
    %1868 = vdwg.mxu0
    %v1869 = vxor.u32 %v1863, 2147483648
    %v1870 = vmul.f32 %v1869, 1.442695
    %v1871 = vpow.pop %v1870
    %v1872 = vadd.f32 %v1871, 1.0
    %v1873 = vrcp.pop %v1872
    %v1874 = vmul.f32 1.0, %v1873
    %v1875 = vmul.f32 %v1863, %v1874
    %v1876 = vmul.f32 %v1875, %v1865
    %v1877 = vpack.c.bf16 %v1876, %v1876
    %s1878 = scalar_lea.vmem %s4, 64
    %v1879 = vld [vmem:[%s1878] sm:$0xf]
    %v1880 = vld [vmem:[%s1878 + $0x4] sm:$0xf]
    %v1881 = vld [vmem:[%s1878 + $0x8] sm:$0xf]
    %v1882 = vld [vmem:[%s1878 + $0xc] sm:$0xf]
    %v1883 = vld [vmem:[%s1878 + $0x10] sm:$0xf]
    %v1884 = vld [vmem:[%s1878 + $0x14] sm:$0xf]
    %v1885 = vld [vmem:[%s1878 + $0x18] sm:$0xf]
    %v1886 = vld [vmem:[%s1878 + $0x1c] sm:$0xf]
    %v1887 = vld [vmem:[%s1878 + $0x20] sm:$0xf]
    %v1888 = vld [vmem:[%s1878 + $0x24] sm:$0xf]
    %v1889 = vld [vmem:[%s1878 + $0x28] sm:$0xf]
    %v1890 = vld [vmem:[%s1878 + $0x2c] sm:$0xf]
    %v1891 = vld [vmem:[%s1878 + $0x30] sm:$0xf]
    %v1892 = vld [vmem:[%s1878 + $0x34] sm:$0xf]
    %v1893 = vld [vmem:[%s1878 + $0x38] sm:$0xf]
    %v1894 = vld [vmem:[%s1878 + $0x3c] sm:$0xf]
    %v1911 = vunpack.c.l.b16 %v1879
    %v1912 = vunpack.c.l.b16 %v1880
    %v1913 = vunpack.c.l.b16 %v1881
    %v1914 = vunpack.c.l.b16 %v1882
    %v1915 = vunpack.c.l.b16 %v1883
    %v1916 = vunpack.c.l.b16 %v1884
    %v1917 = vunpack.c.l.b16 %v1885
    %v1918 = vunpack.c.l.b16 %v1886
    %v1919 = vunpack.c.l.b16 %v1887
    %v1920 = vunpack.c.l.b16 %v1888
    %v1921 = vunpack.c.l.b16 %v1889
    %v1922 = vunpack.c.l.b16 %v1890
    %v1923 = vunpack.c.l.b16 %v1891
    %v1924 = vunpack.c.l.b16 %v1892
    %v1925 = vunpack.c.l.b16 %v1893
    %v1926 = vunpack.c.l.b16 %v1894
    %v1927 = vpack.c.b16 %v1912, %v1911
    %v1928 = vpack.c.b16 %v1914, %v1913
    %v1929 = vpack.c.b16 %v1916, %v1915
    %v1930 = vpack.c.b16 %v1918, %v1917
    %v1931 = vpack.c.b16 %v1920, %v1919
    %v1932 = vpack.c.b16 %v1922, %v1921
    %v1933 = vpack.c.b16 %v1924, %v1923
    %v1934 = vpack.c.b16 %v1926, %v1925
    %1943 = vmatprep.subr.bf16.mxu0 0
    %1944 = vmatpush1.bf16.msra.mxu0 %v1927
    %1945 = vmatprep.subr.bf16.mxu0 0
    %1946 = vmatpush1.bf16.msra.mxu0 %v1928
    %1947 = vmatprep.subr.bf16.mxu0 0
    %1948 = vmatpush1.bf16.msra.mxu0 %v1929
    %1949 = vmatprep.subr.bf16.mxu0 0
    %1950 = vmatpush1.bf16.msra.mxu0 %v1930
    %1951 = vmatprep.subr.bf16.mxu0 0
    %1952 = vmatpush1.bf16.msra.mxu0 %v1931
    %1953 = vmatprep.subr.bf16.mxu0 0
    %1954 = vmatpush1.bf16.msra.mxu0 %v1932
    %1955 = vmatprep.subr.bf16.mxu0 0
    %1956 = vmatpush1.bf16.msra.mxu0 %v1933
    %1957 = vmatprep.subr.bf16.mxu0 0
    %1958 = vmatpush1.bf16.msra.mxu0 %v1934
    %1959 = vmatprep.subr.bf16.mxu0 0
    %1960 = vmatpush1.bf16.msra.mxu0 0
    %1961 = vmatprep.subr.bf16.mxu0 0
    %1962 = vmatpush1.bf16.msra.mxu0 0
    %1963 = vmatprep.subr.bf16.mxu0 0
    %1964 = vmatpush1.bf16.msra.mxu0 0
    %1965 = vmatprep.subr.bf16.mxu0 0
    %1966 = vmatpush1.bf16.msra.mxu0 0
    %1967 = vmatprep.subr.bf16.mxu0 0
    %1968 = vmatpush1.bf16.msra.mxu0 0
    %1969 = vmatprep.subr.bf16.mxu0 0
    %1970 = vmatpush1.bf16.msra.mxu0 0
    %1971 = vmatprep.subr.bf16.mxu0 0
    %1972 = vmatpush1.bf16.msra.mxu0 0
    %1973 = vmatprep.subr.bf16.mxu0 0
    %1974 = vmatpush1.bf16.msra.mxu0 0
    %1975 = vmatprep.mubr.bf16.mxu0 0
    %1976 = vmatmul.mubr.bf16.gmra.mrb[0].mxu0 %v1877
    %v1977 = vpop.f32.mrb[0].mxu0
    %v1978 = vadd.f32 0.0, %v1977
    %v1979 = vpop.f32.mrb[0].mxu0
    %v1980 = vpop.f32.mrb[0].mxu0
    %v1981 = vpop.f32.mrb[0].mxu0
    %1982 = vdwg.mxu0
    %v1983 = vadd.f32 %v1758, %v1978
    %v1984 = vld [vmem:[%s7] sm:$0x1]
    %v1985 = vmul.f32 %v1983, %v1983
    %v1986 = vsel %vm80, %v1985, 0.0
    %1987 = vadd.xlane.f32.xlu0 %v1986
    %v1988 = vpop.xlane.xlu0 %1987
    %v1989 = vmul.f32 %v1988, %v84
    %v1990 = vadd.f32 %v1989, 1e-06
    %v1991 = vrsqrt.pop %v1990
    %v1992 = vmul.f32 %v1983, %v1991
    %v1993 = vunpack.c.l.bf16 %v1984
    %v1994 = vlaneseq
    %v1995 = vshrl.u32 %v1994, 7
    %v1996 = vsub.s32 0, %v1995
    %v1997 = vrot.slane %v1993, %v1996
    %v1998 = vmul.f32 %v1992, %v1997
    %v1999 = vpack.c.bf16 %v1998, %v1998
    %v2002 = vunpack.c.l.s4 1966171168
    %v2003 = vunpack.c.0.s8 %v2002
    %v2004 = vlaneseq
    %v2005 = vshrl.u32 %v2004, 7
    %v2006 = vsub.s32 %v2003, %v2005
    %v2007 = vrot.slane %v1999, %v2006
    %v2008 = vcombine.high %v2007, %v2007
    %v2010 = vunpack.c.l.s4 1966171168
    %v2011 = vunpack.c.0.s8 %v2010
    %v2012 = vlaneseq
    %v2013 = vshrl.u32 %v2012, 7
    %v2014 = vsub.s32 %v2011, %v2013
    %v2015 = vrot.slane %v2008, %v2014
    %v2016 = vcombine.high %v2015, %v2015
    %v2018 = vshrl.u32 %v2016, 16
    %v2020 = vrot.slane %v2018, 7
    %v2021 = vrot.slane %v2020, 1
    %vm2023 = vcmask 516096
    %vm2024 = vsmask.f32 256
    %vm2025 = vmand %vm2023, %vm2024
    %v2026 = vld [vmem:[#allocation5] sm:$0x1]
    %v2027 = vsel %vm2025, %v2021, %v2026
    %2028 = vst [vmem:[#allocation5] sm:$0x1] %v2027
    %v2029 = vld [vmem:[%s10] sm:$0xf]
    %v2030 = vld [vmem:[%s10 + $0x4] sm:$0xf]
    %v2031 = vld [vmem:[%s10 + $0x8] sm:$0xf]
    %v2032 = vld [vmem:[%s10 + $0xc] sm:$0xf]
    %v2033 = vld [vmem:[%s10 + $0x10] sm:$0xf]
    %v2034 = vld [vmem:[%s10 + $0x14] sm:$0xf]
    %v2035 = vld [vmem:[%s10 + $0x18] sm:$0xf]
    %v2036 = vld [vmem:[%s10 + $0x1c] sm:$0xf]
    %v2038 = vshrl.u32 %v1999, 16
    %v2040 = vrot.slane %v2038, 3
    %v2049 = vunpack.c.l.b16 %v2029
    %v2050 = vunpack.c.l.b16 %v2030
    %v2051 = vunpack.c.l.b16 %v2031
    %v2052 = vunpack.c.l.b16 %v2032
    %v2053 = vunpack.c.l.b16 %v2033
    %v2054 = vunpack.c.l.b16 %v2034
    %v2055 = vunpack.c.l.b16 %v2035
    %v2056 = vunpack.c.l.b16 %v2036
    %v2057 = vpack.c.b16 %v2050, %v2049
    %v2058 = vpack.c.b16 %v2052, %v2051
    %v2059 = vpack.c.b16 %v2054, %v2053
    %v2060 = vpack.c.b16 %v2056, %v2055
    %v2066 = vsel %vm80, %v2040, 0
    %2068 = vmatprep.subr.bf16.mxu0 0
    %2069 = vmatpush1.bf16.msra.mxu0 %v2057
    %2070 = vmatprep.subr.bf16.mxu0 0
    %2071 = vmatpush1.bf16.msra.mxu0 %v2058
    %2072 = vmatprep.subr.bf16.mxu0 0
    %2073 = vmatpush1.bf16.msra.mxu0 %v2059
    %2074 = vmatprep.subr.bf16.mxu0 0
    %2075 = vmatpush1.bf16.msra.mxu0 %v2060
    %2076 = vmatprep.subr.bf16.mxu0 0
    %2077 = vmatpush1.bf16.msra.mxu0 0
    %2078 = vmatprep.subr.bf16.mxu0 0
    %2079 = vmatpush1.bf16.msra.mxu0 0
    %2080 = vmatprep.subr.bf16.mxu0 0
    %2081 = vmatpush1.bf16.msra.mxu0 0
    %2082 = vmatprep.subr.bf16.mxu0 0
    %2083 = vmatpush1.bf16.msra.mxu0 0
    %2084 = vmatprep.subr.bf16.mxu0 0
    %2085 = vmatpush1.bf16.msra.mxu0 0
    %2086 = vmatprep.subr.bf16.mxu0 0
    %2087 = vmatpush1.bf16.msra.mxu0 0
    %2088 = vmatprep.subr.bf16.mxu0 0
    %2089 = vmatpush1.bf16.msra.mxu0 0
    %2090 = vmatprep.subr.bf16.mxu0 0
    %2091 = vmatpush1.bf16.msra.mxu0 0
    %2092 = vmatprep.subr.bf16.mxu0 0
    %2093 = vmatpush1.bf16.msra.mxu0 0
    %2094 = vmatprep.subr.bf16.mxu0 0
    %2095 = vmatpush1.bf16.msra.mxu0 0
    %2096 = vmatprep.subr.bf16.mxu0 0
    %2097 = vmatpush1.bf16.msra.mxu0 0
    %2098 = vmatprep.subr.bf16.mxu0 0
    %2099 = vmatpush1.bf16.msra.mxu0 0
    %2100 = vmatprep.mubr.bf16.mxu0 0
    %2101 = vmatmul.mubr.bf16.gmra.mrb[0].mxu0 %v2066
    %v2102 = vpop.f32.mrb[0].mxu0
    %v2103 = vadd.f32 0.0, %v2102
    %v2104 = vpop.f32.mrb[0].mxu0
    %v2105 = vpop.f32.mrb[0].mxu0
    %v2106 = vpop.f32.mrb[0].mxu0
    %2107 = vdwg.mxu0
    %2108 = vst [vmem:[#allocation6] sm:$0x1] %v2103
    %v2109 = vld [vmem:[%s13] sm:$0x1]
    %v2110 = vunpack.c.l.bf16 %v1999
    %v2111 = vld [vmem:[%s11] sm:$0x1]
    %v2112 = vunpack.c.l.bf16 %v2111
    %v2114 = vlaneseq
    %v2115 = vshrl.u32 %v2114, 7
    %v2116 = vsub.s32 0, %v2115
    %v2117 = vrot.slane %v2112, %v2116
    %v2119 = vmul.f32 %v2110, %v2117
    %vm2120 = vcmask 523271
    %v2121 = vsel %vm2120, %v2119, 0.0
    %2122 = vadd.xlane.f32.xlu0 %v2121
    %v2123 = vpop.xlane.xlu0 %2122
    %v2125 = vlaneseq
    %v2126 = vshrl.u32 %v2125, 7
    %v2127 = vsub.s32 0, %v2126
    %v2128 = vrot.slane %v2109, %v2127
    %2129 = vrot.lane.b32.xlu0 %v2128, 127
    %v2130 = vpop.permute.xlu0 %2129
    %v2132 = vadd.f32 %v2123, %v2130
    %v2133 = vsub.f32 0.0, %v2132
    %v2134 = vmax.f32 %v2133, 0.0
    %v2135 = vand.u32 2147483647, %v2132
    %v2136 = vsub.f32 0.0, %v2135
    %v2137 = vmul.f32 %v2136, 1.442695
    %v2138 = vpow.pop %v2137
    %v2139 = vadd.f32 %v2138, 1.0
    %v2140 = vlog2.pop %v2139
    %v2141 = vmul.f32 %v2140, 0.6931472
    %v2142 = vadd.f32 %v2134, %v2141
    %v2143 = vxor.u32 %v2132, 2147483648
    %v2144 = vmul.f32 %v2143, 1.442695
    %v2145 = vpow.pop %v2144
    %v2146 = vadd.f32 %v2145, 1.0
    %v2147 = vrcp.pop %v2146
    %v2148 = vmul.f32 1.0, %v2147
    %vm2150 = vcmp.gt.f32.partialorder %v2148, %v2128
    %v2151 = vadd.f32 %v2132, %v2142
    %v2152 = vsel %vm2150, %v2142, %v2151
    %vm2153 = vcmask 1040384
    %v2154 = vsel %vm2153, %v2103, -inf
    %2155 = vmax.xlane.f32.xlu0 %v2154
    %v2156 = vpop.xlane.xlu0 %2155
    %v2157 = vsub.f32 %v2103, %v2156
    %v2158 = vmul.f32 %v2157, 1.442695
    %v2159 = vpow.pop %v2158
    %v2160 = vsel %vm2153, %v2159, 0.0
    %2161 = vadd.xlane.f32.xlu0 %v2160
    %v2162 = vpop.xlane.xlu0 %2161
    %v2163 = vlog2.pop %v2162
    %v2164 = vmul.f32 %v2163, 0.6931472
    %v2165 = vadd.f32 %v2156, %v2164
    %v2166 = vsub.f32 %v2165, %v2103
    %v2167 = vld [vmem:[%s12] sm:$0x1]
    %v2168 = vmul.f32 %v2166, %v2167
    %v2169 = vsel %vm2153, %v2168, 0.0
    %2170 = vadd.xlane.f32.xlu0 %v2169
    %v2171 = vpop.xlane.xlu0 %2170
    %v2172 = vsel %vm2150, 1, 0
    %v2173 = vcvt.s32.f32 %v2172
    %2175 = vrot.lane.b32.xlu0 %v2173, 1
    %v2176 = vpop.permute.xlu0 %2175
    %v2179 = vrot.slane %v2171, 1
    %2182 = vrot.lane.b32.xlu0 %v2132, 3
    %v2183 = vpop.permute.xlu0 %2182
    %2186 = vrot.lane.b32.xlu0 %v2148, 4
    %v2187 = vpop.permute.xlu0 %2186
    %2190 = vrot.lane.b32.xlu0 %v2142, 5
    %v2191 = vpop.permute.xlu0 %2190
    %vm2193 = vcmask 7168
    %v2194 = vsel %vm2193, %v2152, %v2176
    %vm2195 = vcmask 15360
    %v2196 = vsel %vm2195, %v2194, %v2179
    %vm2197 = vcmask 23552
    %v2198 = vsel %vm2197, %v2196, %v2183
    %vm2199 = vcmask 31744
    %v2200 = vsel %vm2199, %v2198, %v2187
    %vm2201 = vcmask 39936
    %v2202 = vsel %vm2201, %v2200, %v2191
    %vm2203 = vcmask 48128
    %v2204 = vsel %vm2203, %v2202, 0.0
    %vm2205 = vcmask 64519
    %2206 = vst.msk [vmem:[%s18 - $0x7] sm:$0x80] %vm2205, %v2204
    // Predicated region
    $region62: #{_forward_device.1} parent=1 // pred_check
      _
    $region63: #{_forward_device.1} parent=1 // pred_check_branch
      %2208 = sbr.rel (0) target = $region65
    $region64: #{_forward_device.1} parent=1 // pred_region
      _
    $region65: #{_forward_device.1} parent=1 // pred_fallthru
      _
    // Predicated region
    $region66: #{_forward_device.1} parent=1 // pred_check
      _
    $region67: #{_forward_device.1} parent=1 // pred_check_branch
      %2210 = sbr.rel (0) target = $region69
    $region68: #{_forward_device.1} parent=1 // pred_region
      _
    $region69: #{_forward_device.1} parent=1 // pred_fallthru
      _
    // Predicated region
    $region70: #{_forward_device.1} parent=1 // pred_check
      _
    $region71: #{_forward_device.1} parent=1 // pred_check_branch
      %2212 = sbr.rel (0) target = $region73
    $region72: #{_forward_device.1} parent=1 // pred_region
      %s2214 = ssub.s32 16, 16
      %2215 = vsyncadd [#allocation4], %s2214
      %s2217 = sshll.u32 [#allocation5], 4
      %s2218 = int_to_ptr.vmem [resolvable:$true] %s2217
      %2220 = dma.vmem_to_hbm [thread:$0]  %s2218, 16, %s16, [#allocation4]
    $region73: #{_forward_device.1} parent=1 // pred_fallthru
      _
    // Predicated region
    $region74: #{_forward_device.1} parent=1 // pred_check
      _
    $region75: #{_forward_device.1} parent=1 // pred_check_branch
      %2222 = sbr.rel (0) target = $region77
    $region76: #{_forward_device.1} parent=1 // pred_region
      %s2224 = ssub.s32 16, 16
      %2225 = vsyncadd [#allocation7], %s2224
      %s2227 = sshll.u32 [#allocation6], 4
      %s2228 = int_to_ptr.vmem [resolvable:$true] %s2227
      %2230 = dma.vmem_to_hbm [thread:$0]  %s2228, 16, %s17, [#allocation7]
    $region77: #{_forward_device.1} parent=1 // pred_fallthru
      _
    // Predicated region
    $region78: #{_forward_device.1} parent=1 // pred_check
      _
    $region79: #{_forward_device.1} parent=1 // pred_check_branch
      %2232 = sbr.rel (0) target = $region81
    $region80: #{_forward_device.1} parent=1 // pred_region
      _
    $region81: #{_forward_device.1} parent=1 // pred_fallthru
      _
    // Predicated region
    $region82: #{_forward_device.1} parent=1 // pred_check
      _
    $region83: #{_forward_device.1} parent=1 // pred_check_branch
      %2234 = sbr.rel (0) target = $region85
    $region84: #{_forward_device.1} parent=1 // pred_region
      _
    $region85: #{_forward_device.1} parent=1 // pred_fallthru
      _
    // Predicated region
    $region86: #{_forward_device.1} parent=1 // pred_check
      _
    $region87: #{_forward_device.1} parent=1 // pred_check_branch
      %2236 = sbr.rel (0) target = $region89
    $region88: #{_forward_device.1} parent=1 // pred_region
      _
    $region89: #{_forward_device.1} parent=1 // pred_fallthru
      _
    // Predicated region
    $region90: #{_forward_device.1} parent=1 // pred_check
      _
    $region91: #{_forward_device.1} parent=1 // pred_check_branch
      %2238 = sbr.rel (0) target = $region93
    $region92: #{_forward_device.1} parent=1 // pred_region
      %2239 = dma.done [#allocation4], 16
    $region93: #{_forward_device.1} parent=1 // pred_fallthru
      _
    // Predicated region
    $region94: #{_forward_device.1} parent=1 // pred_check
      _
    $region95: #{_forward_device.1} parent=1 // pred_check_branch
      %2241 = sbr.rel (0) target = $region97
    $region96: #{_forward_device.1} parent=1 // pred_region
      %2242 = dma.done [#allocation7], 16
    $region97: #{_forward_device.1} parent=1 // pred_fallthru
      _
    // Predicated region
    $region98: #{_forward_device.1} parent=1 // pred_check
      _
    $region99: #{_forward_device.1} parent=1 // pred_check_branch
      %2244 = sbr.rel (0) target = $region101
    $region100: #{_forward_device.1} parent=1 // pred_region
      _
    $region101: #{_forward_device.1} parent=1 // pred_fallthru
      _
    %2245 = vsyncpa [#allocation3], 1
    %2246 = vsyncpa [#allocation4], 1
    %2247 = vsyncpa [#allocation7], 1

</llo_original>
